<compile_context>
chip_gen: v6e
topology: v6e:2x2x1
jax: 0.10.0
libtpu: 0.0.40
codegen_flags: <defaults>
</compile_context>

<pallas_src>
import functools
import math

import jax
import jax.numpy as jnp
from jax import lax
from jax.experimental import pallas as pl
from jax.experimental.pallas import tpu as pltpu

LN_EPS = 1e-8   # matches torch.nn.LayerNorm(..., eps=1e-08) in the module


def _layer_norm(x, gamma, beta):
    mu = jnp.mean(x, axis=-1, keepdims=True)
    var = jnp.mean((x - mu) ** 2, axis=-1, keepdims=True)
    return (x - mu) * lax.rsqrt(var + LN_EPS) * gamma + beta


# --------------------------- fused encoder kernel ---------------------------

def _encoder_kernel(x_ref, keep_ref, lnfg_ref, lnfb_ref,
                    ln1g_ref, ln1b_ref, wq_ref, bq_ref, wkv_ref, bkv_ref,
                    wo_ref, bo_ref, ln2g_ref, ln2b_ref,
                    w1_ref, b1_ref, w2_ref, b2_ref,
                    o_ref, x_sc, attn_sc,
                    *, batch, seq_len, head_num):
    blk = pl.program_id(0)

    # Load input activations once; afterwards the running `seqs` lives in VMEM
    # scratch across grid steps (one grid step == one transformer block).
    @pl.when(blk == 0)
    def _():
        x_sc[...] = x_ref[...]

    x = x_sc[...]                                   # (N, H) raw seqs
    hidden = x.shape[-1]
    dh = hidden // head_num
    scale = 1.0 / math.sqrt(dh)

    # ---- attention LayerNorm: Q = LN(seqs); K,V use the raw seqs ----
    q_in = _layer_norm(x, ln1g_ref[0], ln1b_ref[0])            # (N, H)

    # ---- in-projections (K and V fused into one matmul) ----
    q = jnp.dot(q_in, wq_ref[0], preferred_element_type=jnp.float32) + bq_ref[0]
    kv = jnp.dot(x, wkv_ref[0], preferred_element_type=jnp.float32) + bkv_ref[0]
    k = kv[:, :hidden]
    v = kv[:, hidden:]

    # ---- scaled-dot-product attention per (batch, head), fully in VMEM ----
    for b in range(batch):
        r0 = b * seq_len
        qb = q[r0:r0 + seq_len, :]
        kb = k[r0:r0 + seq_len, :]
        vb = v[r0:r0 + seq_len, :]
        for h in range(head_num):
            c0 = h * dh
            qh = qb[:, c0:c0 + dh]
            kh = kb[:, c0:c0 + dh]
            vh = vb[:, c0:c0 + dh]
            # q @ k^T without materializing a transpose
            s = lax.dot_general(qh, kh, (((1,), (1,)), ((), ())),
                                preferred_element_type=jnp.float32) * scale
            m = jnp.max(s, axis=-1, keepdims=True)
            p = jnp.exp(s - m)
            # EUP reciprocal instead of a VPU divide
            p = p * pl.reciprocal(jnp.sum(p, axis=-1, keepdims=True), approx=True)
            attn_sc[r0:r0 + seq_len, c0:c0 + dh] = jnp.dot(
                p, vh, preferred_element_type=jnp.float32)

    # ---- out-projection + residual (seqs = Q + mha_outputs) ----
    mha = jnp.dot(attn_sc[...], wo_ref[0],
                  preferred_element_type=jnp.float32) + bo_ref[0]
    h1 = q_in + mha

    # ---- forward LayerNorm ----
    h2 = _layer_norm(h1, ln2g_ref[0], ln2b_ref[0])

    # ---- PointWiseFeedForward (Linear path): ff2(relu(ff1(h2))) + h2 ----
    f = jnp.dot(h2, w1_ref[0], preferred_element_type=jnp.float32) + b1_ref[0]
    f = jnp.maximum(f, 0.0)
    f = jnp.dot(f, w2_ref[0], preferred_element_type=jnp.float32) + b2_ref[0] + h2

    # ---- zero out padded positions ----
    y = f * keep_ref[...]
    x_sc[...] = y

    # ---- final LayerNorm after the last block ----
    @pl.when(blk == pl.num_programs(0) - 1)
    def _():
        o_ref[...] = _layer_norm(y, lnfg_ref[...], lnfb_ref[...])


# ------------------------------- wrapper -----------------------------------

def encoder_forward(params, seqs, key_padding_mask, head_num):
    """Encoder_layer.forward (eval mode, attn_mask=None). seqs: (B, L, H)."""
    B, L, H = seqs.shape
    N = B * L
    BN = params["wq"].shape[0]
    x = seqs.reshape(N, H)
    keep = jnp.logical_not(key_padding_mask).astype(jnp.float32).reshape(N, 1)

    def shared(shape):
        nd = len(shape)
        return pl.BlockSpec(shape, lambda i, _nd=nd: (0,) * _nd)

    def per_block(shape):
        return pl.BlockSpec((1,) + tuple(shape[1:]), lambda i: (i, 0, 0))

    kernel = functools.partial(_encoder_kernel, batch=B, seq_len=L,
                               head_num=head_num)

    out = pl.pallas_call(
        kernel,
        out_shape=jax.ShapeDtypeStruct((N, H), jnp.float32),
        grid=(BN,),
        in_specs=[
            shared((N, H)),               # x (read at block 0 only)
            shared((N, 1)),               # keep (pad mask)
            shared((1, H)), shared((1, H)),        # final LN gamma/beta
            per_block(params["ln1_g"].shape), per_block(params["ln1_b"].shape),
            per_block(params["wq"].shape),    per_block(params["bq"].shape),
            per_block(params["wkv"].shape),   per_block(params["bkv"].shape),
            per_block(params["wo"].shape),    per_block(params["bo"].shape),
            per_block(params["ln2_g"].shape), per_block(params["ln2_b"].shape),
            per_block(params["w1"].shape),    per_block(params["b1"].shape),
            per_block(params["w2"].shape),    per_block(params["b2"].shape),
        ],
        out_specs=shared((N, H)),
        scratch_shapes=[pltpu.VMEM((N, H), jnp.float32),   # running seqs
                        pltpu.VMEM((N, H), jnp.float32)],  # attention output
        compiler_params=pltpu.CompilerParams(
            dimension_semantics=("arbitrary",),   # sequential over blocks
            vmem_limit_bytes=32 * 1024 * 1024),
    )(x, keep, params["lnf_g"], params["lnf_b"],
      params["ln1_g"], params["ln1_b"], params["wq"], params["bq"],
      params["wkv"], params["bkv"], params["wo"], params["bo"],
      params["ln2_g"], params["ln2_b"], params["w1"], params["b1"],
      params["w2"], params["b2"])
    return out.reshape(B, L, H)


# --------------------------- pure-JAX reference -----------------------------

def reference_forward(params, seqs, key_padding_mask, head_num):
    B, L, H = seqs.shape
    dh = H // head_num
    keep = jnp.logical_not(key_padding_mask)[..., None].astype(jnp.float32)
    BN = params["wq"].shape[0]

    def ln(v, g, b):
        mu = v.mean(-1, keepdims=True)
        var = ((v - mu) ** 2).mean(-1, keepdims=True)
        return (v - mu) / jnp.sqrt(var + LN_EPS) * g + b

    x = seqs
    for i in range(BN):
        q_in = ln(x, params["ln1_g"][i, 0], params["ln1_b"][i, 0])
        q = q_in @ params["wq"][i] + params["bq"][i, 0]
        kv = x @ params["wkv"][i] + params["bkv"][i, 0]
        k, v = kv[..., :H], kv[..., H:]

        def split(t):
            return t.reshape(B, L, head_num, dh).transpose(0, 2, 1, 3)

        s = jnp.einsum("bhqd,bhkd->bhqk", split(q), split(k)) / math.sqrt(dh)
        p = jax.nn.softmax(s, axis=-1)
        o = jnp.einsum("bhqk,bhkd->bhqd", p, split(v))
        o = o.transpose(0, 2, 1, 3).reshape(B, L, H)
        mha = o @ params["wo"][i] + params["bo"][i, 0]
        h1 = q_in + mha
        h2 = ln(h1, params["ln2_g"][i, 0], params["ln2_b"][i, 0])
        f = jnp.maximum(h2 @ params["w1"][i] + params["b1"][i, 0], 0.0)
        f = f @ params["w2"][i] + params["b2"][i, 0] + h2
        x = f * keep
    return ln(x, params["lnf_g"][0], params["lnf_b"][0])


# ------------------------------ parameters ----------------------------------

def init_params(key, hidden, block_num, scale=0.05):
    H, BN = hidden, block_num
    ks = jax.random.split(key, 14)

    def rnd(k, shape, s=scale):
        return jax.random.normal(k, shape, jnp.float32) * s

    return dict(
        wq=rnd(ks[0], (BN, H, H)),       bq=rnd(ks[1], (BN, 1, H)),
        wkv=rnd(ks[2], (BN, H, 2 * H)),  bkv=rnd(ks[3], (BN, 1, 2 * H)),
        wo=rnd(ks[4], (BN, H, H)),       bo=rnd(ks[5], (BN, 1, H)),
        w1=rnd(ks[6], (BN, H, H)),       b1=rnd(ks[7], (BN, 1, H)),
        w2=rnd(ks[8], (BN, H, H)),       b2=rnd(ks[9], (BN, 1, H)),
        ln1_g=1.0 + rnd(ks[10], (BN, 1, H), 0.02),
        ln1_b=rnd(ks[11], (BN, 1, H), 0.02),
        ln2_g=1.0 + rnd(ks[12], (BN, 1, H), 0.02),
        ln2_b=rnd(ks[13], (BN, 1, H), 0.02),
        lnf_g=jnp.ones((1, H), jnp.float32),
        lnf_b=jnp.zeros((1, H), jnp.float32),
    )


if __name__ == "__main__":
    B, L, H, HEADS, BLOCKS = 2, 8, 32, 4, 2
    key = jax.random.PRNGKey(0)
    k_x, k_p = jax.random.split(key)
    seqs = jax.random.normal(k_x, (B, L, H), jnp.float32)       # (batch, seq, hidden)
    # key_padding_mask: True marks padded positions (zeroed out, as in the module)
    key_padding_mask = jnp.zeros((B, L), jnp.bool_).at[:, -1].set(True)

    params = init_params(k_p, H, BLOCKS)
    out = encoder_forward(params, seqs, key_padding_mask, HEADS)
    jax.block_until_ready(out)
    assert out.shape == (B, L, H) and out.dtype == jnp.float32

    ref = reference_forward(params, seqs, key_padding_mask, HEADS)
    max_err = float(jnp.max(jnp.abs(out - ref)))
    assert max_err < 2e-2, f"mismatch vs reference, max abs err = {max_err}"
    print("KERNEL_OK")
</pallas_src>

<mosaic_0001>
module attributes {stable_mosaic.version = 11 : i64} {
  func.func @_encoder_kernel(%arg0: i32, %arg1: memref<16x32xf32, #tpu.memory_space<vmem>>, %arg2: memref<16x1xf32, #tpu.memory_space<vmem>>, %arg3: memref<1x32xf32, #tpu.memory_space<vmem>>, %arg4: memref<1x32xf32, #tpu.memory_space<vmem>>, %arg5: memref<1x1x32xf32, #tpu.memory_space<vmem>>, %arg6: memref<1x1x32xf32, #tpu.memory_space<vmem>>, %arg7: memref<1x32x32xf32, #tpu.memory_space<vmem>>, %arg8: memref<1x1x32xf32, #tpu.memory_space<vmem>>, %arg9: memref<1x32x64xf32, #tpu.memory_space<vmem>>, %arg10: memref<1x1x64xf32, #tpu.memory_space<vmem>>, %arg11: memref<1x32x32xf32, #tpu.memory_space<vmem>>, %arg12: memref<1x1x32xf32, #tpu.memory_space<vmem>>, %arg13: memref<1x1x32xf32, #tpu.memory_space<vmem>>, %arg14: memref<1x1x32xf32, #tpu.memory_space<vmem>>, %arg15: memref<1x32x32xf32, #tpu.memory_space<vmem>>, %arg16: memref<1x1x32xf32, #tpu.memory_space<vmem>>, %arg17: memref<1x32x32xf32, #tpu.memory_space<vmem>>, %arg18: memref<1x1x32xf32, #tpu.memory_space<vmem>>, %arg19: memref<16x32xf32, #tpu.memory_space<vmem>>, %arg20: memref<16x32xf32, #tpu.memory_space<vmem>>, %arg21: memref<16x32xf32, #tpu.memory_space<vmem>>) attributes {dimension_semantics = [#tpu.dimension_semantics<arbitrary>], iteration_bounds = array<i64: 2>, scalar_prefetch = 0 : i64, scratch_operands = 2 : i64, tpu.core_type = #tpu.core_type<tc>, window_params = [{pipeline_mode = #tpu.pipeline_mode<synchronous>, transform_indices = @transform_0, window_bounds = array<i64: 16, 32>}, {pipeline_mode = #tpu.pipeline_mode<synchronous>, transform_indices = @transform_1, window_bounds = array<i64: 16, 1>}, {pipeline_mode = #tpu.pipeline_mode<synchronous>, transform_indices = @transform_2, window_bounds = array<i64: 1, 32>}, {pipeline_mode = #tpu.pipeline_mode<synchronous>, transform_indices = @transform_3, window_bounds = array<i64: 1, 32>}, {transform_indices = @transform_4, window_bounds = array<i64: 1, 1, 32>}, {transform_indices = @transform_5, window_bounds = array<i64: 1, 1, 32>}, {transform_indices = @transform_6, window_bounds = array<i64: 1, 32, 32>}, {transform_indices = @transform_7, window_bounds = array<i64: 1, 1, 32>}, {transform_indices = @transform_8, window_bounds = array<i64: 1, 32, 64>}, {transform_indices = @transform_9, window_bounds = array<i64: 1, 1, 64>}, {transform_indices = @transform_10, window_bounds = array<i64: 1, 32, 32>}, {transform_indices = @transform_11, window_bounds = array<i64: 1, 1, 32>}, {transform_indices = @transform_12, window_bounds = array<i64: 1, 1, 32>}, {transform_indices = @transform_13, window_bounds = array<i64: 1, 1, 32>}, {transform_indices = @transform_14, window_bounds = array<i64: 1, 32, 32>}, {transform_indices = @transform_15, window_bounds = array<i64: 1, 1, 32>}, {transform_indices = @transform_16, window_bounds = array<i64: 1, 32, 32>}, {transform_indices = @transform_17, window_bounds = array<i64: 1, 1, 32>}, {pipeline_mode = #tpu.pipeline_mode<synchronous>, transform_indices = @transform_18, window_bounds = array<i64: 16, 32>}]} {
    %c0_i32 = arith.constant 0 : i32
    %0 = arith.cmpi eq, %arg0, %c0_i32 : i32
    %1 = arith.extui %0 : i1 to i32
    %c0_i32_0 = arith.constant 0 : i32
    %2 = arith.cmpi ne, %1, %c0_i32_0 : i32
    scf.if %2 {
      %c0_119 = arith.constant 0 : index
      %c0_120 = arith.constant 0 : index
      %255 = vector.load %arg1[%c0_119, %c0_120] : memref<16x32xf32, #tpu.memory_space<vmem>>, vector<16x32xf32>
      %c0_121 = arith.constant 0 : index
      %c0_122 = arith.constant 0 : index
      %256 = vector.load %arg20[%c0_121, %c0_122] : memref<16x32xf32, #tpu.memory_space<vmem>>, vector<16x32xf32>
      tpu.vector_store %arg20[%c0_121, %c0_122], %255 {strides = array<i32>} : memref<16x32xf32, #tpu.memory_space<vmem>>, vector<16x32xf32>,
    } else {
    }
    %c0 = arith.constant 0 : index
    %c0_1 = arith.constant 0 : index
    %3 = vector.load %arg20[%c0, %c0_1] : memref<16x32xf32, #tpu.memory_space<vmem>>, vector<16x32xf32>
    %c0_2 = arith.constant 0 : index
    %c0_3 = arith.constant 0 : index
    %c0_4 = arith.constant 0 : index
    %4 = vector.load %arg5[%c0_2, %c0_3, %c0_4] : memref<1x1x32xf32, #tpu.memory_space<vmem>>, vector<1x1x32xf32>
    %5 = vector.shape_cast %4 : vector<1x1x32xf32> to vector<1x32xf32>
    %c0_5 = arith.constant 0 : index
    %c0_6 = arith.constant 0 : index
    %c0_7 = arith.constant 0 : index
    %6 = vector.load %arg6[%c0_5, %c0_6, %c0_7] : memref<1x1x32xf32, #tpu.memory_space<vmem>>, vector<1x1x32xf32>
    %7 = vector.shape_cast %6 : vector<1x1x32xf32> to vector<1x32xf32>
    %cst = arith.constant dense<0.000000e+00> : vector<16xf32>
    %8 = vector.multi_reduction <add>, %3, %cst [1] : vector<16x32xf32> to vector<16xf32>
    %9 = vector.shape_cast %8 : vector<16xf32> to vector<16x1xf32>
    %cst_8 = arith.constant 3.200000e+01 : f32
    %10 = vector.broadcast %cst_8 : f32 to vector<16x1xf32>
    %11 = arith.divf %9, %10 : vector<16x1xf32>
    %12 = vector.broadcast %11 : vector<16x1xf32> to vector<16x32xf32>
    %13 = arith.subf %3, %12 : vector<16x32xf32>
    %14 = arith.mulf %13, %13 : vector<16x32xf32>
    %cst_9 = arith.constant dense<0.000000e+00> : vector<16xf32>
    %15 = vector.multi_reduction <add>, %14, %cst_9 [1] : vector<16x32xf32> to vector<16xf32>
    %16 = vector.shape_cast %15 : vector<16xf32> to vector<16x1xf32>
    %cst_10 = arith.constant 3.200000e+01 : f32
    %17 = vector.broadcast %cst_10 : f32 to vector<16x1xf32>
    %18 = arith.divf %16, %17 : vector<16x1xf32>
    %19 = vector.broadcast %11 : vector<16x1xf32> to vector<16x32xf32>
    %20 = arith.subf %3, %19 : vector<16x32xf32>
    %cst_11 = arith.constant 9.99999993E-9 : f32
    %21 = vector.broadcast %cst_11 : f32 to vector<16x1xf32>
    %22 = arith.addf %18, %21 : vector<16x1xf32>
    %23 = math.rsqrt %22 : vector<16x1xf32>
    %24 = vector.broadcast %23 : vector<16x1xf32> to vector<16x32xf32>
    %25 = arith.mulf %20, %24 : vector<16x32xf32>
    %26 = vector.broadcast %5 : vector<1x32xf32> to vector<16x32xf32>
    %27 = arith.mulf %25, %26 : vector<16x32xf32>
    %28 = vector.broadcast %7 : vector<1x32xf32> to vector<16x32xf32>
    %29 = arith.addf %27, %28 : vector<16x32xf32>
    %c0_12 = arith.constant 0 : index
    %c0_13 = arith.constant 0 : index
    %c0_14 = arith.constant 0 : index
    %30 = vector.load %arg7[%c0_12, %c0_13, %c0_14] : memref<1x32x32xf32, #tpu.memory_space<vmem>>, vector<1x32x32xf32>
    %31 = vector.shape_cast %30 : vector<1x32x32xf32> to vector<32x32xf32>
    %cst_15 = arith.constant dense<0.000000e+00> : vector<16x32xf32>
    %32 = tpu.matmul %29, %31, %cst_15 {dimension_numbers = #tpu.dot_dimension_numbers<[1], [0], [0], [1], [0, 0, 1, 1], [], []>} : vector<16x32xf32>, vector<32x32xf32>, vector<16x32xf32> -> vector<16x32xf32>
    %c0_16 = arith.constant 0 : index
    %c0_17 = arith.constant 0 : index
    %c0_18 = arith.constant 0 : index
    %33 = vector.load %arg8[%c0_16, %c0_17, %c0_18] : memref<1x1x32xf32, #tpu.memory_space<vmem>>, vector<1x1x32xf32>
    %34 = vector.shape_cast %33 : vector<1x1x32xf32> to vector<1x32xf32>
    %35 = vector.broadcast %34 : vector<1x32xf32> to vector<16x32xf32>
    %36 = arith.addf %32, %35 : vector<16x32xf32>
    %c0_19 = arith.constant 0 : index
    %c0_20 = arith.constant 0 : index
    %c0_21 = arith.constant 0 : index
    %37 = vector.load %arg9[%c0_19, %c0_20, %c0_21] : memref<1x32x64xf32, #tpu.memory_space<vmem>>, vector<1x32x64xf32>
    %38 = vector.shape_cast %37 : vector<1x32x64xf32> to vector<32x64xf32>
    %cst_22 = arith.constant dense<0.000000e+00> : vector<16x64xf32>
    %39 = tpu.matmul %3, %38, %cst_22 {dimension_numbers = #tpu.dot_dimension_numbers<[1], [0], [0], [1], [0, 0, 1, 1], [], []>} : vector<16x32xf32>, vector<32x64xf32>, vector<16x64xf32> -> vector<16x64xf32>
    %c0_23 = arith.constant 0 : index
    %c0_24 = arith.constant 0 : index
    %c0_25 = arith.constant 0 : index
    %40 = vector.load %arg10[%c0_23, %c0_24, %c0_25] : memref<1x1x64xf32, #tpu.memory_space<vmem>>, vector<1x1x64xf32>
    %41 = vector.shape_cast %40 : vector<1x1x64xf32> to vector<1x64xf32>
    %42 = vector.broadcast %41 : vector<1x64xf32> to vector<16x64xf32>
    %43 = arith.addf %39, %42 : vector<16x64xf32>
    %44 = vector.extract_strided_slice %43 {offsets = [0, 0], sizes = [16, 32], strides = [1, 1]} : vector<16x64xf32> to vector<16x32xf32>
    %45 = vector.extract_strided_slice %43 {offsets = [0, 32], sizes = [16, 32], strides = [1, 1]} : vector<16x64xf32> to vector<16x32xf32>
    %46 = vector.extract_strided_slice %36 {offsets = [0, 0], sizes = [8, 32], strides = [1, 1]} : vector<16x32xf32> to vector<8x32xf32>
    %47 = vector.extract_strided_slice %44 {offsets = [0, 0], sizes = [8, 32], strides = [1, 1]} : vector<16x32xf32> to vector<8x32xf32>
    %48 = vector.extract_strided_slice %45 {offsets = [0, 0], sizes = [8, 32], strides = [1, 1]} : vector<16x32xf32> to vector<8x32xf32>
    %49 = vector.extract_strided_slice %46 {offsets = [0, 0], sizes = [8, 8], strides = [1, 1]} : vector<8x32xf32> to vector<8x8xf32>
    %50 = vector.extract_strided_slice %47 {offsets = [0, 0], sizes = [8, 8], strides = [1, 1]} : vector<8x32xf32> to vector<8x8xf32>
    %51 = vector.extract_strided_slice %48 {offsets = [0, 0], sizes = [8, 8], strides = [1, 1]} : vector<8x32xf32> to vector<8x8xf32>
    %cst_26 = arith.constant dense<0.000000e+00> : vector<8x8xf32>
    %52 = tpu.matmul %49, %50, %cst_26 {dimension_numbers = #tpu.dot_dimension_numbers<[1], [1], [0], [0], [0, 0, 1, 0], [], []>} : vector<8x8xf32>, vector<8x8xf32>, vector<8x8xf32> -> vector<8x8xf32>
    %cst_27 = arith.constant 0.353553385 : f32
    %53 = vector.broadcast %cst_27 : f32 to vector<8x8xf32>
    %54 = arith.mulf %52, %53 : vector<8x8xf32>
    %cst_28 = arith.constant dense<0xFF800000> : vector<8xf32>
    %55 = vector.multi_reduction <maximumf>, %54, %cst_28 [1] : vector<8x8xf32> to vector<8xf32>
    %56 = vector.shape_cast %55 : vector<8xf32> to vector<8x1xf32>
    %57 = vector.broadcast %56 : vector<8x1xf32> to vector<8x8xf32>
    %58 = arith.subf %54, %57 : vector<8x8xf32>
    %59 = math.exp %58 : vector<8x8xf32>
    %cst_29 = arith.constant dense<0.000000e+00> : vector<8xf32>
    %60 = vector.multi_reduction <add>, %59, %cst_29 [1] : vector<8x8xf32> to vector<8xf32>
    %61 = vector.shape_cast %60 : vector<8xf32> to vector<8x1xf32>
    %62 = tpu.reciprocal %61 {approx = true} : vector<8x1xf32> -> vector<8x1xf32>
    %63 = vector.broadcast %62 : vector<8x1xf32> to vector<8x8xf32>
    %64 = arith.mulf %59, %63 : vector<8x8xf32>
    %cst_30 = arith.constant dense<0.000000e+00> : vector<8x8xf32>
    %65 = tpu.matmul %64, %51, %cst_30 {dimension_numbers = #tpu.dot_dimension_numbers<[1], [0], [0], [1], [0, 0, 1, 1], [], []>} : vector<8x8xf32>, vector<8x8xf32>, vector<8x8xf32> -> vector<8x8xf32>
    %c0_31 = arith.constant 0 : index
    %c0_32 = arith.constant 0 : index
    %66 = vector.load %arg21[%c0_31, %c0_32] : memref<16x32xf32, #tpu.memory_space<vmem>>, vector<8x8xf32>
    tpu.vector_store %arg21[%c0_31, %c0_32], %65 {strides = array<i32>} : memref<16x32xf32, #tpu.memory_space<vmem>>, vector<8x8xf32>,
    %67 = vector.extract_strided_slice %46 {offsets = [0, 8], sizes = [8, 8], strides = [1, 1]} : vector<8x32xf32> to vector<8x8xf32>
    %68 = vector.extract_strided_slice %47 {offsets = [0, 8], sizes = [8, 8], strides = [1, 1]} : vector<8x32xf32> to vector<8x8xf32>
    %69 = vector.extract_strided_slice %48 {offsets = [0, 8], sizes = [8, 8], strides = [1, 1]} : vector<8x32xf32> to vector<8x8xf32>
    %cst_33 = arith.constant dense<0.000000e+00> : vector<8x8xf32>
    %70 = tpu.matmul %67, %68, %cst_33 {dimension_numbers = #tpu.dot_dimension_numbers<[1], [1], [0], [0], [0, 0, 1, 0], [], []>} : vector<8x8xf32>, vector<8x8xf32>, vector<8x8xf32> -> vector<8x8xf32>
    %cst_34 = arith.constant 0.353553385 : f32
    %71 = vector.broadcast %cst_34 : f32 to vector<8x8xf32>
    %72 = arith.mulf %70, %71 : vector<8x8xf32>
    %cst_35 = arith.constant dense<0xFF800000> : vector<8xf32>
    %73 = vector.multi_reduction <maximumf>, %72, %cst_35 [1] : vector<8x8xf32> to vector<8xf32>
    %74 = vector.shape_cast %73 : vector<8xf32> to vector<8x1xf32>
    %75 = vector.broadcast %74 : vector<8x1xf32> to vector<8x8xf32>
    %76 = arith.subf %72, %75 : vector<8x8xf32>
    %77 = math.exp %76 : vector<8x8xf32>
    %cst_36 = arith.constant dense<0.000000e+00> : vector<8xf32>
    %78 = vector.multi_reduction <add>, %77, %cst_36 [1] : vector<8x8xf32> to vector<8xf32>
    %79 = vector.shape_cast %78 : vector<8xf32> to vector<8x1xf32>
    %80 = tpu.reciprocal %79 {approx = true} : vector<8x1xf32> -> vector<8x1xf32>
    %81 = vector.broadcast %80 : vector<8x1xf32> to vector<8x8xf32>
    %82 = arith.mulf %77, %81 : vector<8x8xf32>
    %cst_37 = arith.constant dense<0.000000e+00> : vector<8x8xf32>
    %83 = tpu.matmul %82, %69, %cst_37 {dimension_numbers = #tpu.dot_dimension_numbers<[1], [0], [0], [1], [0, 0, 1, 1], [], []>} : vector<8x8xf32>, vector<8x8xf32>, vector<8x8xf32> -> vector<8x8xf32>
    %c0_38 = arith.constant 0 : index
    %c8 = arith.constant 8 : index
    %84 = vector.load %arg21[%c0_38, %c8] : memref<16x32xf32, #tpu.memory_space<vmem>>, vector<8x8xf32>
    tpu.vector_store %arg21[%c0_38, %c8], %83 {strides = array<i32>} : memref<16x32xf32, #tpu.memory_space<vmem>>, vector<8x8xf32>,
    %85 = vector.extract_strided_slice %46 {offsets = [0, 16], sizes = [8, 8], strides = [1, 1]} : vector<8x32xf32> to vector<8x8xf32>
    %86 = vector.extract_strided_slice %47 {offsets = [0, 16], sizes = [8, 8], strides = [1, 1]} : vector<8x32xf32> to vector<8x8xf32>
    %87 = vector.extract_strided_slice %48 {offsets = [0, 16], sizes = [8, 8], strides = [1, 1]} : vector<8x32xf32> to vector<8x8xf32>
    %cst_39 = arith.constant dense<0.000000e+00> : vector<8x8xf32>
    %88 = tpu.matmul %85, %86, %cst_39 {dimension_numbers = #tpu.dot_dimension_numbers<[1], [1], [0], [0], [0, 0, 1, 0], [], []>} : vector<8x8xf32>, vector<8x8xf32>, vector<8x8xf32> -> vector<8x8xf32>
    %cst_40 = arith.constant 0.353553385 : f32
    %89 = vector.broadcast %cst_40 : f32 to vector<8x8xf32>
    %90 = arith.mulf %88, %89 : vector<8x8xf32>
    %cst_41 = arith.constant dense<0xFF800000> : vector<8xf32>
    %91 = vector.multi_reduction <maximumf>, %90, %cst_41 [1] : vector<8x8xf32> to vector<8xf32>
    %92 = vector.shape_cast %91 : vector<8xf32> to vector<8x1xf32>
    %93 = vector.broadcast %92 : vector<8x1xf32> to vector<8x8xf32>
    %94 = arith.subf %90, %93 : vector<8x8xf32>
    %95 = math.exp %94 : vector<8x8xf32>
    %cst_42 = arith.constant dense<0.000000e+00> : vector<8xf32>
    %96 = vector.multi_reduction <add>, %95, %cst_42 [1] : vector<8x8xf32> to vector<8xf32>
    %97 = vector.shape_cast %96 : vector<8xf32> to vector<8x1xf32>
    %98 = tpu.reciprocal %97 {approx = true} : vector<8x1xf32> -> vector<8x1xf32>
    %99 = vector.broadcast %98 : vector<8x1xf32> to vector<8x8xf32>
    %100 = arith.mulf %95, %99 : vector<8x8xf32>
    %cst_43 = arith.constant dense<0.000000e+00> : vector<8x8xf32>
    %101 = tpu.matmul %100, %87, %cst_43 {dimension_numbers = #tpu.dot_dimension_numbers<[1], [0], [0], [1], [0, 0, 1, 1], [], []>} : vector<8x8xf32>, vector<8x8xf32>, vector<8x8xf32> -> vector<8x8xf32>
    %c0_44 = arith.constant 0 : index
    %c16 = arith.constant 16 : index
    %102 = vector.load %arg21[%c0_44, %c16] : memref<16x32xf32, #tpu.memory_space<vmem>>, vector<8x8xf32>
    tpu.vector_store %arg21[%c0_44, %c16], %101 {strides = array<i32>} : memref<16x32xf32, #tpu.memory_space<vmem>>, vector<8x8xf32>,
    %103 = vector.extract_strided_slice %46 {offsets = [0, 24], sizes = [8, 8], strides = [1, 1]} : vector<8x32xf32> to vector<8x8xf32>
    %104 = vector.extract_strided_slice %47 {offsets = [0, 24], sizes = [8, 8], strides = [1, 1]} : vector<8x32xf32> to vector<8x8xf32>
    %105 = vector.extract_strided_slice %48 {offsets = [0, 24], sizes = [8, 8], strides = [1, 1]} : vector<8x32xf32> to vector<8x8xf32>
    %cst_45 = arith.constant dense<0.000000e+00> : vector<8x8xf32>
    %106 = tpu.matmul %103, %104, %cst_45 {dimension_numbers = #tpu.dot_dimension_numbers<[1], [1], [0], [0], [0, 0, 1, 0], [], []>} : vector<8x8xf32>, vector<8x8xf32>, vector<8x8xf32> -> vector<8x8xf32>
    %cst_46 = arith.constant 0.353553385 : f32
    %107 = vector.broadcast %cst_46 : f32 to vector<8x8xf32>
    %108 = arith.mulf %106, %107 : vector<8x8xf32>
    %cst_47 = arith.constant dense<0xFF800000> : vector<8xf32>
    %109 = vector.multi_reduction <maximumf>, %108, %cst_47 [1] : vector<8x8xf32> to vector<8xf32>
    %110 = vector.shape_cast %109 : vector<8xf32> to vector<8x1xf32>
    %111 = vector.broadcast %110 : vector<8x1xf32> to vector<8x8xf32>
    %112 = arith.subf %108, %111 : vector<8x8xf32>
    %113 = math.exp %112 : vector<8x8xf32>
    %cst_48 = arith.constant dense<0.000000e+00> : vector<8xf32>
    %114 = vector.multi_reduction <add>, %113, %cst_48 [1] : vector<8x8xf32> to vector<8xf32>
    %115 = vector.shape_cast %114 : vector<8xf32> to vector<8x1xf32>
    %116 = tpu.reciprocal %115 {approx = true} : vector<8x1xf32> -> vector<8x1xf32>
    %117 = vector.broadcast %116 : vector<8x1xf32> to vector<8x8xf32>
    %118 = arith.mulf %113, %117 : vector<8x8xf32>
    %cst_49 = arith.constant dense<0.000000e+00> : vector<8x8xf32>
    %119 = tpu.matmul %118, %105, %cst_49 {dimension_numbers = #tpu.dot_dimension_numbers<[1], [0], [0], [1], [0, 0, 1, 1], [], []>} : vector<8x8xf32>, vector<8x8xf32>, vector<8x8xf32> -> vector<8x8xf32>
    %c0_50 = arith.constant 0 : index
    %c24 = arith.constant 24 : index
    %120 = vector.load %arg21[%c0_50, %c24] : memref<16x32xf32, #tpu.memory_space<vmem>>, vector<8x8xf32>
    tpu.vector_store %arg21[%c0_50, %c24], %119 {strides = array<i32>} : memref<16x32xf32, #tpu.memory_space<vmem>>, vector<8x8xf32>,
    %121 = vector.extract_strided_slice %36 {offsets = [8, 0], sizes = [8, 32], strides = [1, 1]} : vector<16x32xf32> to vector<8x32xf32>
    %122 = vector.extract_strided_slice %44 {offsets = [8, 0], sizes = [8, 32], strides = [1, 1]} : vector<16x32xf32> to vector<8x32xf32>
    %123 = vector.extract_strided_slice %45 {offsets = [8, 0], sizes = [8, 32], strides = [1, 1]} : vector<16x32xf32> to vector<8x32xf32>
    %124 = vector.extract_strided_slice %121 {offsets = [0, 0], sizes = [8, 8], strides = [1, 1]} : vector<8x32xf32> to vector<8x8xf32>
    %125 = vector.extract_strided_slice %122 {offsets = [0, 0], sizes = [8, 8], strides = [1, 1]} : vector<8x32xf32> to vector<8x8xf32>
    %126 = vector.extract_strided_slice %123 {offsets = [0, 0], sizes = [8, 8], strides = [1, 1]} : vector<8x32xf32> to vector<8x8xf32>
    %cst_51 = arith.constant dense<0.000000e+00> : vector<8x8xf32>
    %127 = tpu.matmul %124, %125, %cst_51 {dimension_numbers = #tpu.dot_dimension_numbers<[1], [1], [0], [0], [0, 0, 1, 0], [], []>} : vector<8x8xf32>, vector<8x8xf32>, vector<8x8xf32> -> vector<8x8xf32>
    %cst_52 = arith.constant 0.353553385 : f32
    %128 = vector.broadcast %cst_52 : f32 to vector<8x8xf32>
    %129 = arith.mulf %127, %128 : vector<8x8xf32>
    %cst_53 = arith.constant dense<0xFF800000> : vector<8xf32>
    %130 = vector.multi_reduction <maximumf>, %129, %cst_53 [1] : vector<8x8xf32> to vector<8xf32>
    %131 = vector.shape_cast %130 : vector<8xf32> to vector<8x1xf32>
    %132 = vector.broadcast %131 : vector<8x1xf32> to vector<8x8xf32>
    %133 = arith.subf %129, %132 : vector<8x8xf32>
    %134 = math.exp %133 : vector<8x8xf32>
    %cst_54 = arith.constant dense<0.000000e+00> : vector<8xf32>
    %135 = vector.multi_reduction <add>, %134, %cst_54 [1] : vector<8x8xf32> to vector<8xf32>
    %136 = vector.shape_cast %135 : vector<8xf32> to vector<8x1xf32>
    %137 = tpu.reciprocal %136 {approx = true} : vector<8x1xf32> -> vector<8x1xf32>
    %138 = vector.broadcast %137 : vector<8x1xf32> to vector<8x8xf32>
    %139 = arith.mulf %134, %138 : vector<8x8xf32>
    %cst_55 = arith.constant dense<0.000000e+00> : vector<8x8xf32>
    %140 = tpu.matmul %139, %126, %cst_55 {dimension_numbers = #tpu.dot_dimension_numbers<[1], [0], [0], [1], [0, 0, 1, 1], [], []>} : vector<8x8xf32>, vector<8x8xf32>, vector<8x8xf32> -> vector<8x8xf32>
    %c8_56 = arith.constant 8 : index
    %c0_57 = arith.constant 0 : index
    %141 = vector.load %arg21[%c8_56, %c0_57] : memref<16x32xf32, #tpu.memory_space<vmem>>, vector<8x8xf32>
    tpu.vector_store %arg21[%c8_56, %c0_57], %140 {strides = array<i32>} : memref<16x32xf32, #tpu.memory_space<vmem>>, vector<8x8xf32>,
    %142 = vector.extract_strided_slice %121 {offsets = [0, 8], sizes = [8, 8], strides = [1, 1]} : vector<8x32xf32> to vector<8x8xf32>
    %143 = vector.extract_strided_slice %122 {offsets = [0, 8], sizes = [8, 8], strides = [1, 1]} : vector<8x32xf32> to vector<8x8xf32>
    %144 = vector.extract_strided_slice %123 {offsets = [0, 8], sizes = [8, 8], strides = [1, 1]} : vector<8x32xf32> to vector<8x8xf32>
    %cst_58 = arith.constant dense<0.000000e+00> : vector<8x8xf32>
    %145 = tpu.matmul %142, %143, %cst_58 {dimension_numbers = #tpu.dot_dimension_numbers<[1], [1], [0], [0], [0, 0, 1, 0], [], []>} : vector<8x8xf32>, vector<8x8xf32>, vector<8x8xf32> -> vector<8x8xf32>
    %cst_59 = arith.constant 0.353553385 : f32
    %146 = vector.broadcast %cst_59 : f32 to vector<8x8xf32>
    %147 = arith.mulf %145, %146 : vector<8x8xf32>
    %cst_60 = arith.constant dense<0xFF800000> : vector<8xf32>
    %148 = vector.multi_reduction <maximumf>, %147, %cst_60 [1] : vector<8x8xf32> to vector<8xf32>
    %149 = vector.shape_cast %148 : vector<8xf32> to vector<8x1xf32>
    %150 = vector.broadcast %149 : vector<8x1xf32> to vector<8x8xf32>
    %151 = arith.subf %147, %150 : vector<8x8xf32>
    %152 = math.exp %151 : vector<8x8xf32>
    %cst_61 = arith.constant dense<0.000000e+00> : vector<8xf32>
    %153 = vector.multi_reduction <add>, %152, %cst_61 [1] : vector<8x8xf32> to vector<8xf32>
    %154 = vector.shape_cast %153 : vector<8xf32> to vector<8x1xf32>
    %155 = tpu.reciprocal %154 {approx = true} : vector<8x1xf32> -> vector<8x1xf32>
    %156 = vector.broadcast %155 : vector<8x1xf32> to vector<8x8xf32>
    %157 = arith.mulf %152, %156 : vector<8x8xf32>
    %cst_62 = arith.constant dense<0.000000e+00> : vector<8x8xf32>
    %158 = tpu.matmul %157, %144, %cst_62 {dimension_numbers = #tpu.dot_dimension_numbers<[1], [0], [0], [1], [0, 0, 1, 1], [], []>} : vector<8x8xf32>, vector<8x8xf32>, vector<8x8xf32> -> vector<8x8xf32>
    %c8_63 = arith.constant 8 : index
    %c8_64 = arith.constant 8 : index
    %159 = vector.load %arg21[%c8_63, %c8_64] : memref<16x32xf32, #tpu.memory_space<vmem>>, vector<8x8xf32>
    tpu.vector_store %arg21[%c8_63, %c8_64], %158 {strides = array<i32>} : memref<16x32xf32, #tpu.memory_space<vmem>>, vector<8x8xf32>,
    %160 = vector.extract_strided_slice %121 {offsets = [0, 16], sizes = [8, 8], strides = [1, 1]} : vector<8x32xf32> to vector<8x8xf32>
    %161 = vector.extract_strided_slice %122 {offsets = [0, 16], sizes = [8, 8], strides = [1, 1]} : vector<8x32xf32> to vector<8x8xf32>
    %162 = vector.extract_strided_slice %123 {offsets = [0, 16], sizes = [8, 8], strides = [1, 1]} : vector<8x32xf32> to vector<8x8xf32>
    %cst_65 = arith.constant dense<0.000000e+00> : vector<8x8xf32>
    %163 = tpu.matmul %160, %161, %cst_65 {dimension_numbers = #tpu.dot_dimension_numbers<[1], [1], [0], [0], [0, 0, 1, 0], [], []>} : vector<8x8xf32>, vector<8x8xf32>, vector<8x8xf32> -> vector<8x8xf32>
    %cst_66 = arith.constant 0.353553385 : f32
    %164 = vector.broadcast %cst_66 : f32 to vector<8x8xf32>
    %165 = arith.mulf %163, %164 : vector<8x8xf32>
    %cst_67 = arith.constant dense<0xFF800000> : vector<8xf32>
    %166 = vector.multi_reduction <maximumf>, %165, %cst_67 [1] : vector<8x8xf32> to vector<8xf32>
    %167 = vector.shape_cast %166 : vector<8xf32> to vector<8x1xf32>
    %168 = vector.broadcast %167 : vector<8x1xf32> to vector<8x8xf32>
    %169 = arith.subf %165, %168 : vector<8x8xf32>
    %170 = math.exp %169 : vector<8x8xf32>
    %cst_68 = arith.constant dense<0.000000e+00> : vector<8xf32>
    %171 = vector.multi_reduction <add>, %170, %cst_68 [1] : vector<8x8xf32> to vector<8xf32>
    %172 = vector.shape_cast %171 : vector<8xf32> to vector<8x1xf32>
    %173 = tpu.reciprocal %172 {approx = true} : vector<8x1xf32> -> vector<8x1xf32>
    %174 = vector.broadcast %173 : vector<8x1xf32> to vector<8x8xf32>
    %175 = arith.mulf %170, %174 : vector<8x8xf32>
    %cst_69 = arith.constant dense<0.000000e+00> : vector<8x8xf32>
    %176 = tpu.matmul %175, %162, %cst_69 {dimension_numbers = #tpu.dot_dimension_numbers<[1], [0], [0], [1], [0, 0, 1, 1], [], []>} : vector<8x8xf32>, vector<8x8xf32>, vector<8x8xf32> -> vector<8x8xf32>
    %c8_70 = arith.constant 8 : index
    %c16_71 = arith.constant 16 : index
    %177 = vector.load %arg21[%c8_70, %c16_71] : memref<16x32xf32, #tpu.memory_space<vmem>>, vector<8x8xf32>
    tpu.vector_store %arg21[%c8_70, %c16_71], %176 {strides = array<i32>} : memref<16x32xf32, #tpu.memory_space<vmem>>, vector<8x8xf32>,
    %178 = vector.extract_strided_slice %121 {offsets = [0, 24], sizes = [8, 8], strides = [1, 1]} : vector<8x32xf32> to vector<8x8xf32>
    %179 = vector.extract_strided_slice %122 {offsets = [0, 24], sizes = [8, 8], strides = [1, 1]} : vector<8x32xf32> to vector<8x8xf32>
    %180 = vector.extract_strided_slice %123 {offsets = [0, 24], sizes = [8, 8], strides = [1, 1]} : vector<8x32xf32> to vector<8x8xf32>
    %cst_72 = arith.constant dense<0.000000e+00> : vector<8x8xf32>
    %181 = tpu.matmul %178, %179, %cst_72 {dimension_numbers = #tpu.dot_dimension_numbers<[1], [1], [0], [0], [0, 0, 1, 0], [], []>} : vector<8x8xf32>, vector<8x8xf32>, vector<8x8xf32> -> vector<8x8xf32>
    %cst_73 = arith.constant 0.353553385 : f32
    %182 = vector.broadcast %cst_73 : f32 to vector<8x8xf32>
    %183 = arith.mulf %181, %182 : vector<8x8xf32>
    %cst_74 = arith.constant dense<0xFF800000> : vector<8xf32>
    %184 = vector.multi_reduction <maximumf>, %183, %cst_74 [1] : vector<8x8xf32> to vector<8xf32>
    %185 = vector.shape_cast %184 : vector<8xf32> to vector<8x1xf32>
    %186 = vector.broadcast %185 : vector<8x1xf32> to vector<8x8xf32>
    %187 = arith.subf %183, %186 : vector<8x8xf32>
    %188 = math.exp %187 : vector<8x8xf32>
    %cst_75 = arith.constant dense<0.000000e+00> : vector<8xf32>
    %189 = vector.multi_reduction <add>, %188, %cst_75 [1] : vector<8x8xf32> to vector<8xf32>
    %190 = vector.shape_cast %189 : vector<8xf32> to vector<8x1xf32>
    %191 = tpu.reciprocal %190 {approx = true} : vector<8x1xf32> -> vector<8x1xf32>
    %192 = vector.broadcast %191 : vector<8x1xf32> to vector<8x8xf32>
    %193 = arith.mulf %188, %192 : vector<8x8xf32>
    %cst_76 = arith.constant dense<0.000000e+00> : vector<8x8xf32>
    %194 = tpu.matmul %193, %180, %cst_76 {dimension_numbers = #tpu.dot_dimension_numbers<[1], [0], [0], [1], [0, 0, 1, 1], [], []>} : vector<8x8xf32>, vector<8x8xf32>, vector<8x8xf32> -> vector<8x8xf32>
    %c8_77 = arith.constant 8 : index
    %c24_78 = arith.constant 24 : index
    %195 = vector.load %arg21[%c8_77, %c24_78] : memref<16x32xf32, #tpu.memory_space<vmem>>, vector<8x8xf32>
    tpu.vector_store %arg21[%c8_77, %c24_78], %194 {strides = array<i32>} : memref<16x32xf32, #tpu.memory_space<vmem>>, vector<8x8xf32>,
    %c0_79 = arith.constant 0 : index
    %c0_80 = arith.constant 0 : index
    %196 = vector.load %arg21[%c0_79, %c0_80] : memref<16x32xf32, #tpu.memory_space<vmem>>, vector<16x32xf32>
    %c0_81 = arith.constant 0 : index
    %c0_82 = arith.constant 0 : index
    %c0_83 = arith.constant 0 : index
    %197 = vector.load %arg11[%c0_81, %c0_82, %c0_83] : memref<1x32x32xf32, #tpu.memory_space<vmem>>, vector<1x32x32xf32>
    %198 = vector.shape_cast %197 : vector<1x32x32xf32> to vector<32x32xf32>
    %cst_84 = arith.constant dense<0.000000e+00> : vector<16x32xf32>
    %199 = tpu.matmul %196, %198, %cst_84 {dimension_numbers = #tpu.dot_dimension_numbers<[1], [0], [0], [1], [0, 0, 1, 1], [], []>} : vector<16x32xf32>, vector<32x32xf32>, vector<16x32xf32> -> vector<16x32xf32>
    %c0_85 = arith.constant 0 : index
    %c0_86 = arith.constant 0 : index
    %c0_87 = arith.constant 0 : index
    %200 = vector.load %arg12[%c0_85, %c0_86, %c0_87] : memref<1x1x32xf32, #tpu.memory_space<vmem>>, vector<1x1x32xf32>
    %201 = vector.shape_cast %200 : vector<1x1x32xf32> to vector<1x32xf32>
    %202 = vector.broadcast %201 : vector<1x32xf32> to vector<16x32xf32>
    %203 = arith.addf %199, %202 : vector<16x32xf32>
    %204 = arith.addf %29, %203 : vector<16x32xf32>
    %c0_88 = arith.constant 0 : index
    %c0_89 = arith.constant 0 : index
    %c0_90 = arith.constant 0 : index
    %205 = vector.load %arg13[%c0_88, %c0_89, %c0_90] : memref<1x1x32xf32, #tpu.memory_space<vmem>>, vector<1x1x32xf32>
    %206 = vector.shape_cast %205 : vector<1x1x32xf32> to vector<1x32xf32>
    %c0_91 = arith.constant 0 : index
    %c0_92 = arith.constant 0 : index
    %c0_93 = arith.constant 0 : index
    %207 = vector.load %arg14[%c0_91, %c0_92, %c0_93] : memref<1x1x32xf32, #tpu.memory_space<vmem>>, vector<1x1x32xf32>
    %208 = vector.shape_cast %207 : vector<1x1x32xf32> to vector<1x32xf32>
    %cst_94 = arith.constant dense<0.000000e+00> : vector<16xf32>
    %209 = vector.multi_reduction <add>, %204, %cst_94 [1] : vector<16x32xf32> to vector<16xf32>
    %210 = vector.shape_cast %209 : vector<16xf32> to vector<16x1xf32>
    %cst_95 = arith.constant 3.200000e+01 : f32
    %211 = vector.broadcast %cst_95 : f32 to vector<16x1xf32>
    %212 = arith.divf %210, %211 : vector<16x1xf32>
    %213 = vector.broadcast %212 : vector<16x1xf32> to vector<16x32xf32>
    %214 = arith.subf %204, %213 : vector<16x32xf32>
    %215 = arith.mulf %214, %214 : vector<16x32xf32>
    %cst_96 = arith.constant dense<0.000000e+00> : vector<16xf32>
    %216 = vector.multi_reduction <add>, %215, %cst_96 [1] : vector<16x32xf32> to vector<16xf32>
    %217 = vector.shape_cast %216 : vector<16xf32> to vector<16x1xf32>
    %cst_97 = arith.constant 3.200000e+01 : f32
    %218 = vector.broadcast %cst_97 : f32 to vector<16x1xf32>
    %219 = arith.divf %217, %218 : vector<16x1xf32>
    %220 = vector.broadcast %212 : vector<16x1xf32> to vector<16x32xf32>
    %221 = arith.subf %204, %220 : vector<16x32xf32>
    %cst_98 = arith.constant 9.99999993E-9 : f32
    %222 = vector.broadcast %cst_98 : f32 to vector<16x1xf32>
    %223 = arith.addf %219, %222 : vector<16x1xf32>
    %224 = math.rsqrt %223 : vector<16x1xf32>
    %225 = vector.broadcast %224 : vector<16x1xf32> to vector<16x32xf32>
    %226 = arith.mulf %221, %225 : vector<16x32xf32>
    %227 = vector.broadcast %206 : vector<1x32xf32> to vector<16x32xf32>
    %228 = arith.mulf %226, %227 : vector<16x32xf32>
    %229 = vector.broadcast %208 : vector<1x32xf32> to vector<16x32xf32>
    %230 = arith.addf %228, %229 : vector<16x32xf32>
    %c0_99 = arith.constant 0 : index
    %c0_100 = arith.constant 0 : index
    %c0_101 = arith.constant 0 : index
    %231 = vector.load %arg15[%c0_99, %c0_100, %c0_101] : memref<1x32x32xf32, #tpu.memory_space<vmem>>, vector<1x32x32xf32>
    %232 = vector.shape_cast %231 : vector<1x32x32xf32> to vector<32x32xf32>
    %cst_102 = arith.constant dense<0.000000e+00> : vector<16x32xf32>
    %233 = tpu.matmul %230, %232, %cst_102 {dimension_numbers = #tpu.dot_dimension_numbers<[1], [0], [0], [1], [0, 0, 1, 1], [], []>} : vector<16x32xf32>, vector<32x32xf32>, vector<16x32xf32> -> vector<16x32xf32>
    %c0_103 = arith.constant 0 : index
    %c0_104 = arith.constant 0 : index
    %c0_105 = arith.constant 0 : index
    %234 = vector.load %arg16[%c0_103, %c0_104, %c0_105] : memref<1x1x32xf32, #tpu.memory_space<vmem>>, vector<1x1x32xf32>
    %235 = vector.shape_cast %234 : vector<1x1x32xf32> to vector<1x32xf32>
    %236 = vector.broadcast %235 : vector<1x32xf32> to vector<16x32xf32>
    %237 = arith.addf %233, %236 : vector<16x32xf32>
    %cst_106 = arith.constant 0.000000e+00 : f32
    %238 = vector.broadcast %cst_106 : f32 to vector<16x32xf32>
    %239 = arith.maximumf %237, %238 : vector<16x32xf32>
    %c0_107 = arith.constant 0 : index
    %c0_108 = arith.constant 0 : index
    %c0_109 = arith.constant 0 : index
    %240 = vector.load %arg17[%c0_107, %c0_108, %c0_109] : memref<1x32x32xf32, #tpu.memory_space<vmem>>, vector<1x32x32xf32>
    %241 = vector.shape_cast %240 : vector<1x32x32xf32> to vector<32x32xf32>
    %cst_110 = arith.constant dense<0.000000e+00> : vector<16x32xf32>
    %242 = tpu.matmul %239, %241, %cst_110 {dimension_numbers = #tpu.dot_dimension_numbers<[1], [0], [0], [1], [0, 0, 1, 1], [], []>} : vector<16x32xf32>, vector<32x32xf32>, vector<16x32xf32> -> vector<16x32xf32>
    %c0_111 = arith.constant 0 : index
    %c0_112 = arith.constant 0 : index
    %c0_113 = arith.constant 0 : index
    %243 = vector.load %arg18[%c0_111, %c0_112, %c0_113] : memref<1x1x32xf32, #tpu.memory_space<vmem>>, vector<1x1x32xf32>
    %244 = vector.shape_cast %243 : vector<1x1x32xf32> to vector<1x32xf32>
    %245 = vector.broadcast %244 : vector<1x32xf32> to vector<16x32xf32>
    %246 = arith.addf %242, %245 : vector<16x32xf32>
    %247 = arith.addf %246, %230 : vector<16x32xf32>
    %c0_114 = arith.constant 0 : index
    %c0_115 = arith.constant 0 : index
    %248 = vector.load %arg2[%c0_114, %c0_115] : memref<16x1xf32, #tpu.memory_space<vmem>>, vector<16x1xf32>
    %249 = vector.broadcast %248 : vector<16x1xf32> to vector<16x32xf32>
    %250 = arith.mulf %247, %249 : vector<16x32xf32>
    %c0_116 = arith.constant 0 : index
    %c0_117 = arith.constant 0 : index
    %251 = vector.load %arg20[%c0_116, %c0_117] : memref<16x32xf32, #tpu.memory_space<vmem>>, vector<16x32xf32>
    tpu.vector_store %arg20[%c0_116, %c0_117], %250 {strides = array<i32>} : memref<16x32xf32, #tpu.memory_space<vmem>>, vector<16x32xf32>,
    %c1_i32 = arith.constant 1 : i32
    %252 = arith.cmpi eq, %arg0, %c1_i32 : i32
    %253 = arith.extui %252 : i1 to i32
    %c0_i32_118 = arith.constant 0 : i32
    %254 = arith.cmpi ne, %253, %c0_i32_118 : i32
    scf.if %254 {
      %c0_119 = arith.constant 0 : index
      %c0_120 = arith.constant 0 : index
      %255 = vector.load %arg3[%c0_119, %c0_120] : memref<1x32xf32, #tpu.memory_space<vmem>>, vector<1x32xf32>
      %c0_121 = arith.constant 0 : index
      %c0_122 = arith.constant 0 : index
      %256 = vector.load %arg4[%c0_121, %c0_122] : memref<1x32xf32, #tpu.memory_space<vmem>>, vector<1x32xf32>
      %cst_123 = arith.constant dense<0.000000e+00> : vector<16xf32>
      %257 = vector.multi_reduction <add>, %250, %cst_123 [1] : vector<16x32xf32> to vector<16xf32>
      %258 = vector.shape_cast %257 : vector<16xf32> to vector<16x1xf32>
      %cst_124 = arith.constant 3.200000e+01 : f32
      %259 = vector.broadcast %cst_124 : f32 to vector<16x1xf32>
      %260 = arith.divf %258, %259 : vector<16x1xf32>
      %261 = vector.broadcast %260 : vector<16x1xf32> to vector<16x32xf32>
      %262 = arith.subf %250, %261 : vector<16x32xf32>
      %263 = arith.mulf %262, %262 : vector<16x32xf32>
      %cst_125 = arith.constant dense<0.000000e+00> : vector<16xf32>
      %264 = vector.multi_reduction <add>, %263, %cst_125 [1] : vector<16x32xf32> to vector<16xf32>
      %265 = vector.shape_cast %264 : vector<16xf32> to vector<16x1xf32>
      %cst_126 = arith.constant 3.200000e+01 : f32
      %266 = vector.broadcast %cst_126 : f32 to vector<16x1xf32>
      %267 = arith.divf %265, %266 : vector<16x1xf32>
      %268 = vector.broadcast %260 : vector<16x1xf32> to vector<16x32xf32>
      %269 = arith.subf %250, %268 : vector<16x32xf32>
      %cst_127 = arith.constant 9.99999993E-9 : f32
      %270 = vector.broadcast %cst_127 : f32 to vector<16x1xf32>
      %271 = arith.addf %267, %270 : vector<16x1xf32>
      %272 = math.rsqrt %271 : vector<16x1xf32>
      %273 = vector.broadcast %272 : vector<16x1xf32> to vector<16x32xf32>
      %274 = arith.mulf %269, %273 : vector<16x32xf32>
      %275 = vector.broadcast %255 : vector<1x32xf32> to vector<16x32xf32>
      %276 = arith.mulf %274, %275 : vector<16x32xf32>
      %277 = vector.broadcast %256 : vector<1x32xf32> to vector<16x32xf32>
      %278 = arith.addf %276, %277 : vector<16x32xf32>
      %c0_128 = arith.constant 0 : index
      %c0_129 = arith.constant 0 : index
      %279 = vector.load %arg19[%c0_128, %c0_129] : memref<16x32xf32, #tpu.memory_space<vmem>>, vector<16x32xf32>
      tpu.vector_store %arg19[%c0_128, %c0_129], %278 {strides = array<i32>} : memref<16x32xf32, #tpu.memory_space<vmem>>, vector<16x32xf32>,
    } else {
    }
    return
  }
  func.func @transform_0(%arg0: i32) -> (i32, i32) {
    %c0_i32 = arith.constant 0 : i32
    %c0_i32_0 = arith.constant 0 : i32
    %c0_i32_1 = arith.constant 0 : i32
    return %c0_i32, %c0_i32_0 : i32, i32
  }
  func.func @transform_1(%arg0: i32) -> (i32, i32) {
    %c0_i32 = arith.constant 0 : i32
    %c0_i32_0 = arith.constant 0 : i32
    %c0_i32_1 = arith.constant 0 : i32
    return %c0_i32, %c0_i32_0 : i32, i32
  }
  func.func @transform_2(%arg0: i32) -> (i32, i32) {
    %c0_i32 = arith.constant 0 : i32
    %c0_i32_0 = arith.constant 0 : i32
    %c0_i32_1 = arith.constant 0 : i32
    return %c0_i32, %c0_i32_0 : i32, i32
  }
  func.func @transform_3(%arg0: i32) -> (i32, i32) {
    %c0_i32 = arith.constant 0 : i32
    %c0_i32_0 = arith.constant 0 : i32
    %c0_i32_1 = arith.constant 0 : i32
    return %c0_i32, %c0_i32_0 : i32, i32
  }
  func.func @transform_4(%arg0: i32) -> (i32, i32, i32) {
    %c0_i32 = arith.constant 0 : i32
    %c0_i32_0 = arith.constant 0 : i32
    %c0_i32_1 = arith.constant 0 : i32
    return %arg0, %c0_i32, %c0_i32_0 : i32, i32, i32
  }
  func.func @transform_5(%arg0: i32) -> (i32, i32, i32) {
    %c0_i32 = arith.constant 0 : i32
    %c0_i32_0 = arith.constant 0 : i32
    %c0_i32_1 = arith.constant 0 : i32
    return %arg0, %c0_i32, %c0_i32_0 : i32, i32, i32
  }
  func.func @transform_6(%arg0: i32) -> (i32, i32, i32) {
    %c0_i32 = arith.constant 0 : i32
    %c0_i32_0 = arith.constant 0 : i32
    %c0_i32_1 = arith.constant 0 : i32
    return %arg0, %c0_i32, %c0_i32_0 : i32, i32, i32
  }
  func.func @transform_7(%arg0: i32) -> (i32, i32, i32) {
    %c0_i32 = arith.constant 0 : i32
    %c0_i32_0 = arith.constant 0 : i32
    %c0_i32_1 = arith.constant 0 : i32
    return %arg0, %c0_i32, %c0_i32_0 : i32, i32, i32
  }
  func.func @transform_8(%arg0: i32) -> (i32, i32, i32) {
    %c0_i32 = arith.constant 0 : i32
    %c0_i32_0 = arith.constant 0 : i32
    %c0_i32_1 = arith.constant 0 : i32
    return %arg0, %c0_i32, %c0_i32_0 : i32, i32, i32
  }
  func.func @transform_9(%arg0: i32) -> (i32, i32, i32) {
    %c0_i32 = arith.constant 0 : i32
    %c0_i32_0 = arith.constant 0 : i32
    %c0_i32_1 = arith.constant 0 : i32
    return %arg0, %c0_i32, %c0_i32_0 : i32, i32, i32
  }
  func.func @transform_10(%arg0: i32) -> (i32, i32, i32) {
    %c0_i32 = arith.constant 0 : i32
    %c0_i32_0 = arith.constant 0 : i32
    %c0_i32_1 = arith.constant 0 : i32
    return %arg0, %c0_i32, %c0_i32_0 : i32, i32, i32
  }
  func.func @transform_11(%arg0: i32) -> (i32, i32, i32) {
    %c0_i32 = arith.constant 0 : i32
    %c0_i32_0 = arith.constant 0 : i32
    %c0_i32_1 = arith.constant 0 : i32
    return %arg0, %c0_i32, %c0_i32_0 : i32, i32, i32
  }
  func.func @transform_12(%arg0: i32) -> (i32, i32, i32) {
    %c0_i32 = arith.constant 0 : i32
    %c0_i32_0 = arith.constant 0 : i32
    %c0_i32_1 = arith.constant 0 : i32
    return %arg0, %c0_i32, %c0_i32_0 : i32, i32, i32
  }
  func.func @transform_13(%arg0: i32) -> (i32, i32, i32) {
    %c0_i32 = arith.constant 0 : i32
    %c0_i32_0 = arith.constant 0 : i32
    %c0_i32_1 = arith.constant 0 : i32
    return %arg0, %c0_i32, %c0_i32_0 : i32, i32, i32
  }
  func.func @transform_14(%arg0: i32) -> (i32, i32, i32) {
    %c0_i32 = arith.constant 0 : i32
    %c0_i32_0 = arith.constant 0 : i32
    %c0_i32_1 = arith.constant 0 : i32
    return %arg0, %c0_i32, %c0_i32_0 : i32, i32, i32
  }
  func.func @transform_15(%arg0: i32) -> (i32, i32, i32) {
    %c0_i32 = arith.constant 0 : i32
    %c0_i32_0 = arith.constant 0 : i32
    %c0_i32_1 = arith.constant 0 : i32
    return %arg0, %c0_i32, %c0_i32_0 : i32, i32, i32
  }
  func.func @transform_16(%arg0: i32) -> (i32, i32, i32) {
    %c0_i32 = arith.constant 0 : i32
    %c0_i32_0 = arith.constant 0 : i32
    %c0_i32_1 = arith.constant 0 : i32
    return %arg0, %c0_i32, %c0_i32_0 : i32, i32, i32
  }
  func.func @transform_17(%arg0: i32) -> (i32, i32, i32) {
    %c0_i32 = arith.constant 0 : i32
    %c0_i32_0 = arith.constant 0 : i32
    %c0_i32_1 = arith.constant 0 : i32
    return %arg0, %c0_i32, %c0_i32_0 : i32, i32, i32
  }
  func.func @transform_18(%arg0: i32) -> (i32, i32) {
    %c0_i32 = arith.constant 0 : i32
    %c0_i32_0 = arith.constant 0 : i32
    %c0_i32_1 = arith.constant 0 : i32
    return %c0_i32, %c0_i32_0 : i32, i32
  }
}

</mosaic_0001>

<llo_original>
// kernel: tpu_custom_call.1
$region0: #{tpu_custom_call.1}
  #allocation0 [shape = 'u32[]', space=smem, size = 0x4, offset = 0x4, fixed_abs, tag = 'smem constant byte address 0x4 - core index']
  #allocation1 [shape = 'u32[144,128]{1,0:T(1,128)}', space=vmem, size = 0x12000, scoped, tag = 'internal scratch']
  #allocation2 [shape = 'f32[16,32]{1,0:T(8,128)}', space=vmem, size = 0x2000, scoped, tag = 'scratch operand']
  #allocation3 [shape = 'f32[16,32]{1,0:T(8,128)}', space=vmem, size = 0x2000, scoped, tag = 'scratch operand']
  %s0 = inlined_call_operand.vmem [shape: f32[16,32], index: 0, kind: input, shape index: {}]
  %s1 = inlined_call_operand.vmem [shape: f32[16,1], index: 1, kind: input, shape index: {}]
  %s2 = inlined_call_operand.hbm [shape: f32[1,32], index: 2, kind: input, shape index: {}]
  %s3 = inlined_call_operand.hbm [shape: f32[1,32], index: 3, kind: input, shape index: {}]
  %s4 = inlined_call_operand.vmem [shape: f32[2,1,32], index: 4, kind: input, shape index: {}]
  %s5 = inlined_call_operand.vmem [shape: f32[2,1,32], index: 5, kind: input, shape index: {}]
  %s6 = inlined_call_operand.hbm [shape: f32[2,32,32], index: 6, kind: input, shape index: {}]
  %s7 = inlined_call_operand.vmem [shape: f32[2,1,32], index: 7, kind: input, shape index: {}]
  %s8 = inlined_call_operand.hbm [shape: f32[2,32,64], index: 8, kind: input, shape index: {}]
  %s9 = inlined_call_operand.vmem [shape: f32[2,1,64], index: 9, kind: input, shape index: {}]
  %s10 = inlined_call_operand.hbm [shape: f32[2,32,32], index: 10, kind: input, shape index: {}]
  %s11 = inlined_call_operand.vmem [shape: f32[2,1,32], index: 11, kind: input, shape index: {}]
  %s12 = inlined_call_operand.vmem [shape: f32[2,1,32], index: 12, kind: input, shape index: {}]
  %s13 = inlined_call_operand.vmem [shape: f32[2,1,32], index: 13, kind: input, shape index: {}]
  %s14 = inlined_call_operand.hbm [shape: f32[2,32,32], index: 14, kind: input, shape index: {}]
  %s15 = inlined_call_operand.vmem [shape: f32[2,1,32], index: 15, kind: input, shape index: {}]
  %s16 = inlined_call_operand.hbm [shape: f32[2,32,32], index: 16, kind: input, shape index: {}]
  %s17 = inlined_call_operand.vmem [shape: f32[2,1,32], index: 17, kind: input, shape index: {}]
  %s18 = inlined_call_operand.hbm [shape: f32[16,32], index: 18, kind: output, shape index: {}]
  %s19 = sld [smem:[#allocation0]]
  $region141: #{tpu_custom_call.1} parent=0
    _
  %s21 = ssub.s32 1, %s19
  %s22 = scalar_select 0, %s21, %s19
  $region1: #{tpu_custom_call.1} parent=0
    #allocation4 [shape = 'u8[512]{0}', space=vmem, size = 0x400, scoped, tag = 'input window, operand 2, single buffered']
    #allocation5 [shape = 's32[2]{0}', space=sflag, size = 0x8, scoped, tag = 'scoped memory for tpu_custom_call.1']
    #allocation6 [shape = 's32[2]{0}', space=sflag, size = 0x8, scoped, tag = 'scoped memory for tpu_custom_call.1']
    #allocation7 [shape = 'u8[512]{0}', space=vmem, size = 0x400, scoped, tag = 'input window, operand 3, single buffered']
    #allocation8 [shape = 's32[1]{0}', space=sflag, size = 0x4, scoped, tag = 'scoped memory for tpu_custom_call.1']
    #allocation9 [shape = 'u8[32768]{0}', space=vmem, size = 0x8000, scoped, tag = 'input window, operand 6']
    #allocation10 [shape = 'u8[32768]{0}', space=vmem, size = 0x8000, scoped, tag = 'input window, operand 8']
    #allocation11 [shape = 'u8[32768]{0}', space=vmem, size = 0x8000, scoped, tag = 'input window, operand 10']
    #allocation12 [shape = 'u8[32768]{0}', space=vmem, size = 0x8000, scoped, tag = 'input window, operand 14']
    #allocation13 [shape = 'u8[32768]{0}', space=vmem, size = 0x8000, scoped, tag = 'input window, operand 16']
    #allocation14 [shape = 'u8[8192]{0}', space=vmem, size = 0x2000, scoped, tag = 'output window, operand 0, single buffered']
    %23 = vsyncpa [#allocation5], 0
    %24 = vsyncpa [#allocation8], 0
    %25 = vsyncpa [#allocation6], 0
    loop: start=0, step=1, limit=4
    $region2: #{tpu_custom_call.1} parent=1 // loop_pre_header
      _
    $region3: #{tpu_custom_call.1} parent=1 // loop_header
      %s27 = sphi 0, %s31
      %p28 = scmp.ge.s32.totalorder %s27, 4
      %s35 = sphi 0, %s35
      %s37 = sphi 0, %s35
      %s38 = sphi 0, %s37
      %s52 = sphi 0, %s38
      %s56 = sphi 0, %s56
      %s58 = sphi 0, %s56
      %s59 = sphi 0, %s58
      %s73 = sphi 0, %s59
      %s77 = sphi 0, %s77
      %s79 = sphi 0, %s77
      %s80 = sphi 0, %s79
      %s94 = sphi 0, %s80
      %s98 = sphi 0, %s98
      %s100 = sphi 0, %s98
      %s101 = sphi 0, %s100
      %s115 = sphi 0, %s101
      %s121 = sphi 0, %s123
      %s124 = sphi 0, %s121
      %s125 = sphi 0, %s124
      %s141 = sphi 0, %s125
      %s147 = sphi 0, %s149
      %s150 = sphi 0, %s147
      %s151 = sphi 0, %s150
      %s167 = sphi 0, %s151
      %s173 = sphi 0, %s175
      %s176 = sphi 0, %s173
      %s177 = sphi 0, %s176
      %s193 = sphi 0, %s177
      %s199 = sphi 0, %s201
      %s202 = sphi 0, %s199
      %s203 = sphi 0, %s202
      %s219 = sphi 0, %s203
      %s225 = sphi 0, %s227
      %s228 = sphi 0, %s225
      %s229 = sphi 0, %s228
      %s245 = sphi 0, %s229
      %s251 = sphi 0, %s253
      %s254 = sphi 0, %s251
      %s255 = sphi 0, %s254
      %s271 = sphi 0, %s255
      %s277 = sphi 0, %s279
      %s280 = sphi 0, %s277
      %s281 = sphi 0, %s280
      %s297 = sphi 0, %s281
      %s303 = sphi 0, %s305
      %s306 = sphi 0, %s303
      %s307 = sphi 0, %s306
      %s323 = sphi 0, %s307
      %s329 = sphi 0, %s331
      %s332 = sphi 0, %s329
      %s333 = sphi 0, %s332
      %s349 = sphi 0, %s333
      %s355 = sphi 0, %s357
      %s358 = sphi 0, %s355
      %s359 = sphi 0, %s358
      %s375 = sphi 0, %s359
      %s381 = sphi 0, %s383
      %s384 = sphi 0, %s381
      %s385 = sphi 0, %s384
      %s401 = sphi 0, %s385
      %s407 = sphi 0, %s409
      %s410 = sphi 0, %s407
      %s411 = sphi 0, %s410
      %s427 = sphi 0, %s411
      %s433 = sphi 0, %s435
      %s436 = sphi 0, %s433
      %s437 = sphi 0, %s436
      %s453 = sphi 0, %s437
      %s459 = sphi 0, %s461
      %s462 = sphi 0, %s459
      %s463 = sphi 0, %s462
      %s479 = sphi 0, %s463
      %s483 = sphi 0, %s483
      %s485 = sphi 0, %s483
      %s486 = sphi 0, %s485
      %s500 = sphi 0, %s486
    $region4: #{tpu_custom_call.1} parent=1 // loop_header_branch
      %30 = sbr.rel (%p28) target = $region8
    $region5: #{tpu_custom_call.1} parent=1 // loop_body
      %s32 = ssub.s32 %s27, 1
      %s33 = ssub.s32 %s27, 2
      %s34 = sadd.s32 %s27, 1
      %s36 = sadd.s32 %s35, 1
      %p39 = scmp.eq.s32.totalorder %s27, 1
      %p40 = scmp.ne.s32.totalorder %s35, %s37
      %p41 = scmp.eq.s32.totalorder %s27, 0
      %p42 = por %p40, %p41
      %p43 = scmp.ne.s32.totalorder %s35, %s37
      %p44 = scmp.eq.s32.totalorder %s32, 1
      %p45 = por %p43, %p44
      %p46 = scmp.ne.s32.totalorder %s37, %s38
      %p47 = scmp.eq.s32.totalorder %s32, 0
      %p48 = por %p46, %p47
      %p49 = scmp.ne.s32.totalorder %s37, %s38
      %p50 = scmp.eq.s32.totalorder %s33, 1
      %p51 = por %p49, %p50
      %p53 = scmp.ne.s32.totalorder %s38, %s52
      %p54 = scmp.eq.s32.totalorder %s33, 0
      %p55 = por %p53, %p54
      %s57 = sadd.s32 %s56, 1
      %p60 = scmp.eq.s32.totalorder %s27, 1
      %p61 = scmp.ne.s32.totalorder %s56, %s58
      %p62 = scmp.eq.s32.totalorder %s27, 0
      %p63 = por %p61, %p62
      %p64 = scmp.ne.s32.totalorder %s56, %s58
      %p65 = scmp.eq.s32.totalorder %s32, 1
      %p66 = por %p64, %p65
      %p67 = scmp.ne.s32.totalorder %s58, %s59
      %p68 = scmp.eq.s32.totalorder %s32, 0
      %p69 = por %p67, %p68
      %p70 = scmp.ne.s32.totalorder %s58, %s59
      %p71 = scmp.eq.s32.totalorder %s33, 1
      %p72 = por %p70, %p71
      %p74 = scmp.ne.s32.totalorder %s59, %s73
      %p75 = scmp.eq.s32.totalorder %s33, 0
      %p76 = por %p74, %p75
      %s78 = sadd.s32 %s77, 1
      %p81 = scmp.eq.s32.totalorder %s27, 1
      %p82 = scmp.ne.s32.totalorder %s77, %s79
      %p83 = scmp.eq.s32.totalorder %s27, 0
      %p84 = por %p82, %p83
      %p85 = scmp.ne.s32.totalorder %s77, %s79
      %p86 = scmp.eq.s32.totalorder %s32, 1
      %p87 = por %p85, %p86
      %p88 = scmp.ne.s32.totalorder %s79, %s80
      %p89 = scmp.eq.s32.totalorder %s32, 0
      %p90 = por %p88, %p89
      %p91 = scmp.ne.s32.totalorder %s79, %s80
      %p92 = scmp.eq.s32.totalorder %s33, 1
      %p93 = por %p91, %p92
      %p95 = scmp.ne.s32.totalorder %s80, %s94
      %p96 = scmp.eq.s32.totalorder %s33, 0
      %p97 = por %p95, %p96
      %s99 = sadd.s32 %s98, 1
      %p102 = scmp.eq.s32.totalorder %s27, 1
      %p103 = scmp.ne.s32.totalorder %s98, %s100
      %p104 = scmp.eq.s32.totalorder %s27, 0
      %p105 = por %p103, %p104
      %p106 = scmp.ne.s32.totalorder %s98, %s100
      %p107 = scmp.eq.s32.totalorder %s32, 1
      %p108 = por %p106, %p107
      %p109 = scmp.ne.s32.totalorder %s100, %s101
      %p110 = scmp.eq.s32.totalorder %s32, 0
      %p111 = por %p109, %p110
      %p112 = scmp.ne.s32.totalorder %s100, %s101
      %p113 = scmp.eq.s32.totalorder %s33, 1
      %p114 = por %p112, %p113
      %p116 = scmp.ne.s32.totalorder %s101, %s115
      %p117 = scmp.eq.s32.totalorder %s33, 0
      %p118 = por %p116, %p117
      %s119 = ssub.s32 %s27, %s34
      %p120 = scmp.eq.s32.totalorder %s119, 0
      %s122 = sadd.s32 %s121, 1
      %s123 = scalar_select %p120, %s121, %s122
      %p126 = pneg %p120
      %p127 = scmp.eq.s32.totalorder %s27, 1
      %p128 = por %p126, %p127
      %p129 = scmp.ne.s32.totalorder %s121, %s124
      %p130 = scmp.eq.s32.totalorder %s27, 0
      %p131 = por %p129, %p130
      %p132 = scmp.ne.s32.totalorder %s121, %s124
      %p133 = scmp.eq.s32.totalorder %s32, 1
      %p134 = por %p132, %p133
      %p135 = scmp.ne.s32.totalorder %s124, %s125
      %p136 = scmp.eq.s32.totalorder %s32, 0
      %p137 = por %p135, %p136
      %p138 = scmp.ne.s32.totalorder %s124, %s125
      %p139 = scmp.eq.s32.totalorder %s33, 1
      %p140 = por %p138, %p139
      %p142 = scmp.ne.s32.totalorder %s125, %s141
      %p143 = scmp.eq.s32.totalorder %s33, 0
      %p144 = por %p142, %p143
      %s145 = ssub.s32 %s27, %s34
      %p146 = scmp.eq.s32.totalorder %s145, 0
      %s148 = sadd.s32 %s147, 1
      %s149 = scalar_select %p146, %s147, %s148
      %p152 = pneg %p146
      %p153 = scmp.eq.s32.totalorder %s27, 1
      %p154 = por %p152, %p153
      %p155 = scmp.ne.s32.totalorder %s147, %s150
      %p156 = scmp.eq.s32.totalorder %s27, 0
      %p157 = por %p155, %p156
      %p158 = scmp.ne.s32.totalorder %s147, %s150
      %p159 = scmp.eq.s32.totalorder %s32, 1
      %p160 = por %p158, %p159
      %p161 = scmp.ne.s32.totalorder %s150, %s151
      %p162 = scmp.eq.s32.totalorder %s32, 0
      %p163 = por %p161, %p162
      %p164 = scmp.ne.s32.totalorder %s150, %s151
      %p165 = scmp.eq.s32.totalorder %s33, 1
      %p166 = por %p164, %p165
      %p168 = scmp.ne.s32.totalorder %s151, %s167
      %p169 = scmp.eq.s32.totalorder %s33, 0
      %p170 = por %p168, %p169
      %s171 = ssub.s32 %s27, %s34
      %p172 = scmp.eq.s32.totalorder %s171, 0
      %s174 = sadd.s32 %s173, 1
      %s175 = scalar_select %p172, %s173, %s174
      %p178 = pneg %p172
      %p179 = scmp.eq.s32.totalorder %s27, 1
      %p180 = por %p178, %p179
      %p181 = scmp.ne.s32.totalorder %s173, %s176
      %p182 = scmp.eq.s32.totalorder %s27, 0
      %p183 = por %p181, %p182
      %p184 = scmp.ne.s32.totalorder %s173, %s176
      %p185 = scmp.eq.s32.totalorder %s32, 1
      %p186 = por %p184, %p185
      %p187 = scmp.ne.s32.totalorder %s176, %s177
      %p188 = scmp.eq.s32.totalorder %s32, 0
      %p189 = por %p187, %p188
      %p190 = scmp.ne.s32.totalorder %s176, %s177
      %p191 = scmp.eq.s32.totalorder %s33, 1
      %p192 = por %p190, %p191
      %p194 = scmp.ne.s32.totalorder %s177, %s193
      %p195 = scmp.eq.s32.totalorder %s33, 0
      %p196 = por %p194, %p195
      %s197 = ssub.s32 %s27, %s34
      %p198 = scmp.eq.s32.totalorder %s197, 0
      %s200 = sadd.s32 %s199, 1
      %s201 = scalar_select %p198, %s199, %s200
      %p204 = pneg %p198
      %p205 = scmp.eq.s32.totalorder %s27, 1
      %p206 = por %p204, %p205
      %p207 = scmp.ne.s32.totalorder %s199, %s202
      %p208 = scmp.eq.s32.totalorder %s27, 0
      %p209 = por %p207, %p208
      %p210 = scmp.ne.s32.totalorder %s199, %s202
      %p211 = scmp.eq.s32.totalorder %s32, 1
      %p212 = por %p210, %p211
      %p213 = scmp.ne.s32.totalorder %s202, %s203
      %p214 = scmp.eq.s32.totalorder %s32, 0
      %p215 = por %p213, %p214
      %p216 = scmp.ne.s32.totalorder %s202, %s203
      %p217 = scmp.eq.s32.totalorder %s33, 1
      %p218 = por %p216, %p217
      %p220 = scmp.ne.s32.totalorder %s203, %s219
      %p221 = scmp.eq.s32.totalorder %s33, 0
      %p222 = por %p220, %p221
      %s223 = ssub.s32 %s27, %s34
      %p224 = scmp.eq.s32.totalorder %s223, 0
      %s226 = sadd.s32 %s225, 1
      %s227 = scalar_select %p224, %s225, %s226
      %p230 = pneg %p224
      %p231 = scmp.eq.s32.totalorder %s27, 1
      %p232 = por %p230, %p231
      %p233 = scmp.ne.s32.totalorder %s225, %s228
      %p234 = scmp.eq.s32.totalorder %s27, 0
      %p235 = por %p233, %p234
      %p236 = scmp.ne.s32.totalorder %s225, %s228
      %p237 = scmp.eq.s32.totalorder %s32, 1
      %p238 = por %p236, %p237
      %p239 = scmp.ne.s32.totalorder %s228, %s229
      %p240 = scmp.eq.s32.totalorder %s32, 0
      %p241 = por %p239, %p240
      %p242 = scmp.ne.s32.totalorder %s228, %s229
      %p243 = scmp.eq.s32.totalorder %s33, 1
      %p244 = por %p242, %p243
      %p246 = scmp.ne.s32.totalorder %s229, %s245
      %p247 = scmp.eq.s32.totalorder %s33, 0
      %p248 = por %p246, %p247
      %s249 = ssub.s32 %s27, %s34
      %p250 = scmp.eq.s32.totalorder %s249, 0
      %s252 = sadd.s32 %s251, 1
      %s253 = scalar_select %p250, %s251, %s252
      %p256 = pneg %p250
      %p257 = scmp.eq.s32.totalorder %s27, 1
      %p258 = por %p256, %p257
      %p259 = scmp.ne.s32.totalorder %s251, %s254
      %p260 = scmp.eq.s32.totalorder %s27, 0
      %p261 = por %p259, %p260
      %p262 = scmp.ne.s32.totalorder %s251, %s254
      %p263 = scmp.eq.s32.totalorder %s32, 1
      %p264 = por %p262, %p263
      %p265 = scmp.ne.s32.totalorder %s254, %s255
      %p266 = scmp.eq.s32.totalorder %s32, 0
      %p267 = por %p265, %p266
      %p268 = scmp.ne.s32.totalorder %s254, %s255
      %p269 = scmp.eq.s32.totalorder %s33, 1
      %p270 = por %p268, %p269
      %p272 = scmp.ne.s32.totalorder %s255, %s271
      %p273 = scmp.eq.s32.totalorder %s33, 0
      %p274 = por %p272, %p273
      %s275 = ssub.s32 %s27, %s34
      %p276 = scmp.eq.s32.totalorder %s275, 0
      %s278 = sadd.s32 %s277, 1
      %s279 = scalar_select %p276, %s277, %s278
      %p282 = pneg %p276
      %p283 = scmp.eq.s32.totalorder %s27, 1
      %p284 = por %p282, %p283
      %p285 = scmp.ne.s32.totalorder %s277, %s280
      %p286 = scmp.eq.s32.totalorder %s27, 0
      %p287 = por %p285, %p286
      %p288 = scmp.ne.s32.totalorder %s277, %s280
      %p289 = scmp.eq.s32.totalorder %s32, 1
      %p290 = por %p288, %p289
      %p291 = scmp.ne.s32.totalorder %s280, %s281
      %p292 = scmp.eq.s32.totalorder %s32, 0
      %p293 = por %p291, %p292
      %p294 = scmp.ne.s32.totalorder %s280, %s281
      %p295 = scmp.eq.s32.totalorder %s33, 1
      %p296 = por %p294, %p295
      %p298 = scmp.ne.s32.totalorder %s281, %s297
      %p299 = scmp.eq.s32.totalorder %s33, 0
      %p300 = por %p298, %p299
      %s301 = ssub.s32 %s27, %s34
      %p302 = scmp.eq.s32.totalorder %s301, 0
      %s304 = sadd.s32 %s303, 1
      %s305 = scalar_select %p302, %s303, %s304
      %p308 = pneg %p302
      %p309 = scmp.eq.s32.totalorder %s27, 1
      %p310 = por %p308, %p309
      %p311 = scmp.ne.s32.totalorder %s303, %s306
      %p312 = scmp.eq.s32.totalorder %s27, 0
      %p313 = por %p311, %p312
      %p314 = scmp.ne.s32.totalorder %s303, %s306
      %p315 = scmp.eq.s32.totalorder %s32, 1
      %p316 = por %p314, %p315
      %p317 = scmp.ne.s32.totalorder %s306, %s307
      %p318 = scmp.eq.s32.totalorder %s32, 0
      %p319 = por %p317, %p318
      %p320 = scmp.ne.s32.totalorder %s306, %s307
      %p321 = scmp.eq.s32.totalorder %s33, 1
      %p322 = por %p320, %p321
      %p324 = scmp.ne.s32.totalorder %s307, %s323
      %p325 = scmp.eq.s32.totalorder %s33, 0
      %p326 = por %p324, %p325
      %s327 = ssub.s32 %s27, %s34
      %p328 = scmp.eq.s32.totalorder %s327, 0
      %s330 = sadd.s32 %s329, 1
      %s331 = scalar_select %p328, %s329, %s330
      %p334 = pneg %p328
      %p335 = scmp.eq.s32.totalorder %s27, 1
      %p336 = por %p334, %p335
      %p337 = scmp.ne.s32.totalorder %s329, %s332
      %p338 = scmp.eq.s32.totalorder %s27, 0
      %p339 = por %p337, %p338
      %p340 = scmp.ne.s32.totalorder %s329, %s332
      %p341 = scmp.eq.s32.totalorder %s32, 1
      %p342 = por %p340, %p341
      %p343 = scmp.ne.s32.totalorder %s332, %s333
      %p344 = scmp.eq.s32.totalorder %s32, 0
      %p345 = por %p343, %p344
      %p346 = scmp.ne.s32.totalorder %s332, %s333
      %p347 = scmp.eq.s32.totalorder %s33, 1
      %p348 = por %p346, %p347
      %p350 = scmp.ne.s32.totalorder %s333, %s349
      %p351 = scmp.eq.s32.totalorder %s33, 0
      %p352 = por %p350, %p351
      %s353 = ssub.s32 %s27, %s34
      %p354 = scmp.eq.s32.totalorder %s353, 0
      %s356 = sadd.s32 %s355, 1
      %s357 = scalar_select %p354, %s355, %s356
      %p360 = pneg %p354
      %p361 = scmp.eq.s32.totalorder %s27, 1
      %p362 = por %p360, %p361
      %p363 = scmp.ne.s32.totalorder %s355, %s358
      %p364 = scmp.eq.s32.totalorder %s27, 0
      %p365 = por %p363, %p364
      %p366 = scmp.ne.s32.totalorder %s355, %s358
      %p367 = scmp.eq.s32.totalorder %s32, 1
      %p368 = por %p366, %p367
      %p369 = scmp.ne.s32.totalorder %s358, %s359
      %p370 = scmp.eq.s32.totalorder %s32, 0
      %p371 = por %p369, %p370
      %p372 = scmp.ne.s32.totalorder %s358, %s359
      %p373 = scmp.eq.s32.totalorder %s33, 1
      %p374 = por %p372, %p373
      %p376 = scmp.ne.s32.totalorder %s359, %s375
      %p377 = scmp.eq.s32.totalorder %s33, 0
      %p378 = por %p376, %p377
      %s379 = ssub.s32 %s27, %s34
      %p380 = scmp.eq.s32.totalorder %s379, 0
      %s382 = sadd.s32 %s381, 1
      %s383 = scalar_select %p380, %s381, %s382
      %p386 = pneg %p380
      %p387 = scmp.eq.s32.totalorder %s27, 1
      %p388 = por %p386, %p387
      %p389 = scmp.ne.s32.totalorder %s381, %s384
      %p390 = scmp.eq.s32.totalorder %s27, 0
      %p391 = por %p389, %p390
      %p392 = scmp.ne.s32.totalorder %s381, %s384
      %p393 = scmp.eq.s32.totalorder %s32, 1
      %p394 = por %p392, %p393
      %p395 = scmp.ne.s32.totalorder %s384, %s385
      %p396 = scmp.eq.s32.totalorder %s32, 0
      %p397 = por %p395, %p396
      %p398 = scmp.ne.s32.totalorder %s384, %s385
      %p399 = scmp.eq.s32.totalorder %s33, 1
      %p400 = por %p398, %p399
      %p402 = scmp.ne.s32.totalorder %s385, %s401
      %p403 = scmp.eq.s32.totalorder %s33, 0
      %p404 = por %p402, %p403
      %s405 = ssub.s32 %s27, %s34
      %p406 = scmp.eq.s32.totalorder %s405, 0
      %s408 = sadd.s32 %s407, 1
      %s409 = scalar_select %p406, %s407, %s408
      %p412 = pneg %p406
      %p413 = scmp.eq.s32.totalorder %s27, 1
      %p414 = por %p412, %p413
      %p415 = scmp.ne.s32.totalorder %s407, %s410
      %p416 = scmp.eq.s32.totalorder %s27, 0
      %p417 = por %p415, %p416
      %p418 = scmp.ne.s32.totalorder %s407, %s410
      %p419 = scmp.eq.s32.totalorder %s32, 1
      %p420 = por %p418, %p419
      %p421 = scmp.ne.s32.totalorder %s410, %s411
      %p422 = scmp.eq.s32.totalorder %s32, 0
      %p423 = por %p421, %p422
      %p424 = scmp.ne.s32.totalorder %s410, %s411
      %p425 = scmp.eq.s32.totalorder %s33, 1
      %p426 = por %p424, %p425
      %p428 = scmp.ne.s32.totalorder %s411, %s427
      %p429 = scmp.eq.s32.totalorder %s33, 0
      %p430 = por %p428, %p429
      %s431 = ssub.s32 %s27, %s34
      %p432 = scmp.eq.s32.totalorder %s431, 0
      %s434 = sadd.s32 %s433, 1
      %s435 = scalar_select %p432, %s433, %s434
      %p438 = pneg %p432
      %p439 = scmp.eq.s32.totalorder %s27, 1
      %p440 = por %p438, %p439
      %p441 = scmp.ne.s32.totalorder %s433, %s436
      %p442 = scmp.eq.s32.totalorder %s27, 0
      %p443 = por %p441, %p442
      %p444 = scmp.ne.s32.totalorder %s433, %s436
      %p445 = scmp.eq.s32.totalorder %s32, 1
      %p446 = por %p444, %p445
      %p447 = scmp.ne.s32.totalorder %s436, %s437
      %p448 = scmp.eq.s32.totalorder %s32, 0
      %p449 = por %p447, %p448
      %p450 = scmp.ne.s32.totalorder %s436, %s437
      %p451 = scmp.eq.s32.totalorder %s33, 1
      %p452 = por %p450, %p451
      %p454 = scmp.ne.s32.totalorder %s437, %s453
      %p455 = scmp.eq.s32.totalorder %s33, 0
      %p456 = por %p454, %p455
      %s457 = ssub.s32 %s27, %s34
      %p458 = scmp.eq.s32.totalorder %s457, 0
      %s460 = sadd.s32 %s459, 1
      %s461 = scalar_select %p458, %s459, %s460
      %p464 = pneg %p458
      %p465 = scmp.eq.s32.totalorder %s27, 1
      %p466 = por %p464, %p465
      %p467 = scmp.ne.s32.totalorder %s459, %s462
      %p468 = scmp.eq.s32.totalorder %s27, 0
      %p469 = por %p467, %p468
      %p470 = scmp.ne.s32.totalorder %s459, %s462
      %p471 = scmp.eq.s32.totalorder %s32, 1
      %p472 = por %p470, %p471
      %p473 = scmp.ne.s32.totalorder %s462, %s463
      %p474 = scmp.eq.s32.totalorder %s32, 0
      %p475 = por %p473, %p474
      %p476 = scmp.ne.s32.totalorder %s462, %s463
      %p477 = scmp.eq.s32.totalorder %s33, 1
      %p478 = por %p476, %p477
      %p480 = scmp.ne.s32.totalorder %s463, %s479
      %p481 = scmp.eq.s32.totalorder %s33, 0
      %p482 = por %p480, %p481
      %s484 = sadd.s32 %s483, 1
      %p487 = scmp.eq.s32.totalorder %s27, 1
      %p488 = scmp.ne.s32.totalorder %s483, %s485
      %p489 = scmp.eq.s32.totalorder %s27, 0
      %p490 = por %p488, %p489
      %p491 = scmp.ne.s32.totalorder %s483, %s485
      %p492 = scmp.eq.s32.totalorder %s32, 1
      %p493 = por %p491, %p492
      %p494 = scmp.ne.s32.totalorder %s485, %s486
      %p495 = scmp.eq.s32.totalorder %s32, 0
      %p496 = por %p494, %p495
      %p497 = scmp.ne.s32.totalorder %s485, %s486
      %p498 = scmp.eq.s32.totalorder %s33, 1
      %p499 = por %p497, %p498
      %p501 = scmp.ne.s32.totalorder %s486, %s500
      %p502 = scmp.eq.s32.totalorder %s33, 0
      %p503 = por %p501, %p502
      %p504 = scmp.le.s32.totalorder 1, %s27
      %p505 = scmp.lt.s32.totalorder %s27, 3
      %p506 = pnand %p504, %p505
      %p507 = pneg %p506
      // Predicated region
      $region9: #{tpu_custom_call.1} parent=5 // pred_check
        _
      $region10: #{tpu_custom_call.1} parent=5 // pred_check_branch
        %509 = sbr.rel (%p506) target = $region12
      $region11: #{tpu_custom_call.1} parent=5 // pred_region
        %s510 = ssub.s32 %s27, 1
        // Predicated region
        $region13: #{tpu_custom_call.1} parent=11 // pred_check
          %p511 = pneg %p48
        $region14: #{tpu_custom_call.1} parent=11 // pred_check_branch
          %513 = sbr.rel (%p511) target = $region16
        $region15: #{tpu_custom_call.1} parent=11 // pred_region
          _
        $region16: #{tpu_custom_call.1} parent=11 // pred_fallthru
          _
        // Predicated region
        $region17: #{tpu_custom_call.1} parent=11 // pred_check
          %p514 = pneg %p69
        $region18: #{tpu_custom_call.1} parent=11 // pred_check_branch
          %516 = sbr.rel (%p514) target = $region20
        $region19: #{tpu_custom_call.1} parent=11 // pred_region
          _
        $region20: #{tpu_custom_call.1} parent=11 // pred_fallthru
          _
        // Predicated region
        $region21: #{tpu_custom_call.1} parent=11 // pred_check
          %p517 = pneg %p90
        $region22: #{tpu_custom_call.1} parent=11 // pred_check_branch
          %519 = sbr.rel (%p517) target = $region24
        $region23: #{tpu_custom_call.1} parent=11 // pred_region
          %s521 = ssub.s32 16, 16
          %522 = vsyncadd [#allocation5], %s521
          %s524 = sshll.u32 [#allocation4], 4
          %s525 = int_to_ptr.vmem [resolvable:$true] %s524
          %527 = dma.hbm_to_vmem [thread:$0]  %s2, 16, %s525, [#allocation5]
        $region24: #{tpu_custom_call.1} parent=11 // pred_fallthru
          _
        // Predicated region
        $region25: #{tpu_custom_call.1} parent=11 // pred_check
          %p528 = pneg %p111
        $region26: #{tpu_custom_call.1} parent=11 // pred_check_branch
          %530 = sbr.rel (%p528) target = $region28
        $region27: #{tpu_custom_call.1} parent=11 // pred_region
          %s532 = ssub.s32 16, 16
          %533 = vsyncadd [#allocation8], %s532
          %s535 = sshll.u32 [#allocation7], 4
          %s536 = int_to_ptr.vmem [resolvable:$true] %s535
          %538 = dma.hbm_to_vmem [thread:$0]  %s3, 16, %s536, [#allocation8]
        $region28: #{tpu_custom_call.1} parent=11 // pred_fallthru
          _
      $region12: #{tpu_custom_call.1} parent=5 // pred_fallthru
        _
      %p539 = scmp.lt.s32.totalorder %s27, 2
      // Predicated region
      $region29: #{tpu_custom_call.1} parent=5 // pred_check
        %p540 = pneg %p539
      $region30: #{tpu_custom_call.1} parent=5 // pred_check_branch
        %542 = sbr.rel (%p540) target = $region32
      $region31: #{tpu_custom_call.1} parent=5 // pred_region
        // Predicated region
        $region33: #{tpu_custom_call.1} parent=31 // pred_check
          %p543 = pneg %p131
        $region34: #{tpu_custom_call.1} parent=31 // pred_check_branch
          %545 = sbr.rel (%p543) target = $region36
        $region35: #{tpu_custom_call.1} parent=31 // pred_region
          %p546 = scmp.lt.s32.totalorder %s27, 1
          %s547 = scalar_select %p546, %s27, 1
          %s548 = scalar_lea.vmem %s4, %s547
        $region36: #{tpu_custom_call.1} parent=31 // pred_fallthru
          _
        // Predicated region
        $region37: #{tpu_custom_call.1} parent=31 // pred_check
          %p549 = pneg %p157
        $region38: #{tpu_custom_call.1} parent=31 // pred_check_branch
          %551 = sbr.rel (%p549) target = $region40
        $region39: #{tpu_custom_call.1} parent=31 // pred_region
          %p552 = scmp.lt.s32.totalorder %s27, 1
          %s553 = scalar_select %p552, %s27, 1
          %s554 = scalar_lea.vmem %s5, %s553
        $region40: #{tpu_custom_call.1} parent=31 // pred_fallthru
          _
        // Predicated region
        $region41: #{tpu_custom_call.1} parent=31 // pred_check
          %p555 = pneg %p183
        $region42: #{tpu_custom_call.1} parent=31 // pred_check_branch
          %557 = sbr.rel (%p555) target = $region44
        $region43: #{tpu_custom_call.1} parent=31 // pred_region
          %s558 = sand.u32 %s27, 1
          %s559 = scalar_lea.sflag [#allocation5], %s558
          %s560 = sand.u32 %s173, 1
          %s561 = smul.addr %s560, 32
          %s562 = scalar_lea.vmem [#allocation9], %s561
          %s564 = ssub.s32 512, 512
          %565 = vsyncadd %s559, %s564
          %s566 = smul.addr %s27, 4
          %s567 = smul.addr %s566, 128
          %s568 = scalar_lea.hbm %s6, %s567
          %s569 = sshll.u32 %s562, 4
          %s570 = int_to_ptr.vmem [resolvable:$true] %s569
          %575 = dma.hbm_to_vmem [thread:$0]  %s568, 512, %s570, %s559, 128, 128, 8
        $region44: #{tpu_custom_call.1} parent=31 // pred_fallthru
          _
        // Predicated region
        $region45: #{tpu_custom_call.1} parent=31 // pred_check
          %p576 = pneg %p209
        $region46: #{tpu_custom_call.1} parent=31 // pred_check_branch
          %578 = sbr.rel (%p576) target = $region48
        $region47: #{tpu_custom_call.1} parent=31 // pred_region
          %p579 = scmp.lt.s32.totalorder %s27, 1
          %s580 = scalar_select %p579, %s27, 1
          %s581 = scalar_lea.vmem %s7, %s580
        $region48: #{tpu_custom_call.1} parent=31 // pred_fallthru
          _
        // Predicated region
        $region49: #{tpu_custom_call.1} parent=31 // pred_check
          %p582 = pneg %p235
        $region50: #{tpu_custom_call.1} parent=31 // pred_check_branch
          %584 = sbr.rel (%p582) target = $region52
        $region51: #{tpu_custom_call.1} parent=31 // pred_region
          %s585 = sand.u32 %s27, 1
          %s586 = scalar_lea.sflag [#allocation5], %s585
          %s587 = sand.u32 %s225, 1
          %s588 = smul.addr %s587, 32
          %s589 = scalar_lea.vmem [#allocation10], %s588
          %s591 = ssub.s32 512, 512
          %592 = vsyncadd %s586, %s591
          %s593 = smul.addr %s27, 4
          %s594 = smul.addr %s593, 128
          %s595 = scalar_lea.hbm %s8, %s594
          %s596 = sshll.u32 %s589, 4
          %s597 = int_to_ptr.vmem [resolvable:$true] %s596
          %602 = dma.hbm_to_vmem [thread:$0]  %s595, 512, %s597, %s586, 128, 128, 8
        $region52: #{tpu_custom_call.1} parent=31 // pred_fallthru
          _
        // Predicated region
        $region53: #{tpu_custom_call.1} parent=31 // pred_check
          %p603 = pneg %p261
        $region54: #{tpu_custom_call.1} parent=31 // pred_check_branch
          %605 = sbr.rel (%p603) target = $region56
        $region55: #{tpu_custom_call.1} parent=31 // pred_region
          %p606 = scmp.lt.s32.totalorder %s27, 1
          %s607 = scalar_select %p606, %s27, 1
          %s608 = scalar_lea.vmem %s9, %s607
        $region56: #{tpu_custom_call.1} parent=31 // pred_fallthru
          _
        // Predicated region
        $region57: #{tpu_custom_call.1} parent=31 // pred_check
          %p609 = pneg %p287
        $region58: #{tpu_custom_call.1} parent=31 // pred_check_branch
          %611 = sbr.rel (%p609) target = $region60
        $region59: #{tpu_custom_call.1} parent=31 // pred_region
          %s612 = sand.u32 %s27, 1
          %s613 = scalar_lea.sflag [#allocation5], %s612
          %s614 = sand.u32 %s277, 1
          %s615 = smul.addr %s614, 32
          %s616 = scalar_lea.vmem [#allocation11], %s615
          %s618 = ssub.s32 512, 512
          %619 = vsyncadd %s613, %s618
          %s620 = smul.addr %s27, 4
          %s621 = smul.addr %s620, 128
          %s622 = scalar_lea.hbm %s10, %s621
          %s623 = sshll.u32 %s616, 4
          %s624 = int_to_ptr.vmem [resolvable:$true] %s623
          %629 = dma.hbm_to_vmem [thread:$0]  %s622, 512, %s624, %s613, 128, 128, 8
        $region60: #{tpu_custom_call.1} parent=31 // pred_fallthru
          _
        // Predicated region
        $region61: #{tpu_custom_call.1} parent=31 // pred_check
          %p630 = pneg %p313
        $region62: #{tpu_custom_call.1} parent=31 // pred_check_branch
          %632 = sbr.rel (%p630) target = $region64
        $region63: #{tpu_custom_call.1} parent=31 // pred_region
          %p633 = scmp.lt.s32.totalorder %s27, 1
          %s634 = scalar_select %p633, %s27, 1
          %s635 = scalar_lea.vmem %s11, %s634
        $region64: #{tpu_custom_call.1} parent=31 // pred_fallthru
          _
        // Predicated region
        $region65: #{tpu_custom_call.1} parent=31 // pred_check
          %p636 = pneg %p339
        $region66: #{tpu_custom_call.1} parent=31 // pred_check_branch
          %638 = sbr.rel (%p636) target = $region68
        $region67: #{tpu_custom_call.1} parent=31 // pred_region
          %p639 = scmp.lt.s32.totalorder %s27, 1
          %s640 = scalar_select %p639, %s27, 1
          %s641 = scalar_lea.vmem %s12, %s640
        $region68: #{tpu_custom_call.1} parent=31 // pred_fallthru
          _
        // Predicated region
        $region69: #{tpu_custom_call.1} parent=31 // pred_check
          %p642 = pneg %p365
        $region70: #{tpu_custom_call.1} parent=31 // pred_check_branch
          %644 = sbr.rel (%p642) target = $region72
        $region71: #{tpu_custom_call.1} parent=31 // pred_region
          %p645 = scmp.lt.s32.totalorder %s27, 1
          %s646 = scalar_select %p645, %s27, 1
          %s647 = scalar_lea.vmem %s13, %s646
        $region72: #{tpu_custom_call.1} parent=31 // pred_fallthru
          _
        // Predicated region
        $region73: #{tpu_custom_call.1} parent=31 // pred_check
          %p648 = pneg %p391
        $region74: #{tpu_custom_call.1} parent=31 // pred_check_branch
          %650 = sbr.rel (%p648) target = $region76
        $region75: #{tpu_custom_call.1} parent=31 // pred_region
          %s651 = sand.u32 %s27, 1
          %s652 = scalar_lea.sflag [#allocation5], %s651
          %s653 = sand.u32 %s381, 1
          %s654 = smul.addr %s653, 32
          %s655 = scalar_lea.vmem [#allocation12], %s654
          %s657 = ssub.s32 512, 512
          %658 = vsyncadd %s652, %s657
          %s659 = smul.addr %s27, 4
          %s660 = smul.addr %s659, 128
          %s661 = scalar_lea.hbm %s14, %s660
          %s662 = sshll.u32 %s655, 4
          %s663 = int_to_ptr.vmem [resolvable:$true] %s662
          %668 = dma.hbm_to_vmem [thread:$0]  %s661, 512, %s663, %s652, 128, 128, 8
        $region76: #{tpu_custom_call.1} parent=31 // pred_fallthru
          _
        // Predicated region
        $region77: #{tpu_custom_call.1} parent=31 // pred_check
          %p669 = pneg %p417
        $region78: #{tpu_custom_call.1} parent=31 // pred_check_branch
          %671 = sbr.rel (%p669) target = $region80
        $region79: #{tpu_custom_call.1} parent=31 // pred_region
          %p672 = scmp.lt.s32.totalorder %s27, 1
          %s673 = scalar_select %p672, %s27, 1
          %s674 = scalar_lea.vmem %s15, %s673
        $region80: #{tpu_custom_call.1} parent=31 // pred_fallthru
          _
        // Predicated region
        $region81: #{tpu_custom_call.1} parent=31 // pred_check
          %p675 = pneg %p443
        $region82: #{tpu_custom_call.1} parent=31 // pred_check_branch
          %677 = sbr.rel (%p675) target = $region84
        $region83: #{tpu_custom_call.1} parent=31 // pred_region
          %s678 = sand.u32 %s27, 1
          %s679 = scalar_lea.sflag [#allocation5], %s678
          %s680 = sand.u32 %s433, 1
          %s681 = smul.addr %s680, 32
          %s682 = scalar_lea.vmem [#allocation13], %s681
          %s684 = ssub.s32 512, 512
          %685 = vsyncadd %s679, %s684
          %s686 = smul.addr %s27, 4
          %s687 = smul.addr %s686, 128
          %s688 = scalar_lea.hbm %s16, %s687
          %s689 = sshll.u32 %s682, 4
          %s690 = int_to_ptr.vmem [resolvable:$true] %s689
          %695 = dma.hbm_to_vmem [thread:$0]  %s688, 512, %s690, %s679, 128, 128, 8
        $region84: #{tpu_custom_call.1} parent=31 // pred_fallthru
          _
        // Predicated region
        $region85: #{tpu_custom_call.1} parent=31 // pred_check
          %p696 = pneg %p469
        $region86: #{tpu_custom_call.1} parent=31 // pred_check_branch
          %698 = sbr.rel (%p696) target = $region88
        $region87: #{tpu_custom_call.1} parent=31 // pred_region
          %p699 = scmp.lt.s32.totalorder %s27, 1
          %s700 = scalar_select %p699, %s27, 1
          %s701 = scalar_lea.vmem %s17, %s700
        $region88: #{tpu_custom_call.1} parent=31 // pred_fallthru
          _
      $region32: #{tpu_custom_call.1} parent=5 // pred_fallthru
        _
      %p702 = scmp.le.s32.totalorder 1, %s27
      %p703 = scmp.lt.s32.totalorder %s27, 3
      %p704 = pnand %p702, %p703
      %p705 = pneg %p704
      // Predicated region
      $region89: #{tpu_custom_call.1} parent=5 // pred_check
        _
      $region90: #{tpu_custom_call.1} parent=5 // pred_check_branch
        %707 = sbr.rel (%p704) target = $region92
      $region91: #{tpu_custom_call.1} parent=5 // pred_region
        %s708 = ssub.s32 %s27, 1
        // Predicated region
        $region93: #{tpu_custom_call.1} parent=91 // pred_check
          %p709 = pneg %p90
        $region94: #{tpu_custom_call.1} parent=91 // pred_check_branch
          %711 = sbr.rel (%p709) target = $region96
        $region95: #{tpu_custom_call.1} parent=91 // pred_region
          %712 = dma.done [#allocation5], 16
        $region96: #{tpu_custom_call.1} parent=91 // pred_fallthru
          _
        // Predicated region
        $region97: #{tpu_custom_call.1} parent=91 // pred_check
          %p713 = pneg %p111
        $region98: #{tpu_custom_call.1} parent=91 // pred_check_branch
          %715 = sbr.rel (%p713) target = $region100
        $region99: #{tpu_custom_call.1} parent=91 // pred_region
          %716 = dma.done [#allocation8], 16
        $region100: #{tpu_custom_call.1} parent=91 // pred_fallthru
          _
        %s717 = sand.u32 %s32, 1
        %s718 = scalar_lea.sflag [#allocation5], %s717
        %s719 = sand.u32 %s176, 1
        %s720 = smul.addr %s719, 32
        %s721 = scalar_lea.vmem [#allocation9], %s720
        // Predicated region
        $region101: #{tpu_custom_call.1} parent=91 // pred_check
          %p722 = pneg %p189
        $region102: #{tpu_custom_call.1} parent=91 // pred_check_branch
          %724 = sbr.rel (%p722) target = $region104
        $region103: #{tpu_custom_call.1} parent=91 // pred_region
          %725 = dma.done %s718, 512
        $region104: #{tpu_custom_call.1} parent=91 // pred_fallthru
          _
        %s726 = sand.u32 %s32, 1
        %s727 = scalar_lea.sflag [#allocation5], %s726
        %s728 = sand.u32 %s228, 1
        %s729 = smul.addr %s728, 32
        %s730 = scalar_lea.vmem [#allocation10], %s729
        // Predicated region
        $region105: #{tpu_custom_call.1} parent=91 // pred_check
          %p731 = pneg %p241
        $region106: #{tpu_custom_call.1} parent=91 // pred_check_branch
          %733 = sbr.rel (%p731) target = $region108
        $region107: #{tpu_custom_call.1} parent=91 // pred_region
          %734 = dma.done %s727, 512
        $region108: #{tpu_custom_call.1} parent=91 // pred_fallthru
          _
        %s735 = sand.u32 %s32, 1
        %s736 = scalar_lea.sflag [#allocation5], %s735
        %s737 = sand.u32 %s280, 1
        %s738 = smul.addr %s737, 32
        %s739 = scalar_lea.vmem [#allocation11], %s738
        // Predicated region
        $region109: #{tpu_custom_call.1} parent=91 // pred_check
          %p740 = pneg %p293
        $region110: #{tpu_custom_call.1} parent=91 // pred_check_branch
          %742 = sbr.rel (%p740) target = $region112
        $region111: #{tpu_custom_call.1} parent=91 // pred_region
          %743 = dma.done %s736, 512
        $region112: #{tpu_custom_call.1} parent=91 // pred_fallthru
          _
        %s744 = sand.u32 %s32, 1
        %s745 = scalar_lea.sflag [#allocation5], %s744
        %s746 = sand.u32 %s384, 1
        %s747 = smul.addr %s746, 32
        %s748 = scalar_lea.vmem [#allocation12], %s747
        // Predicated region
        $region113: #{tpu_custom_call.1} parent=91 // pred_check
          %p749 = pneg %p397
        $region114: #{tpu_custom_call.1} parent=91 // pred_check_branch
          %751 = sbr.rel (%p749) target = $region116
        $region115: #{tpu_custom_call.1} parent=91 // pred_region
          %752 = dma.done %s745, 512
        $region116: #{tpu_custom_call.1} parent=91 // pred_fallthru
          _
        %s753 = sand.u32 %s32, 1
        %s754 = scalar_lea.sflag [#allocation5], %s753
        %s755 = sand.u32 %s436, 1
        %s756 = smul.addr %s755, 32
        %s757 = scalar_lea.vmem [#allocation13], %s756
        // Predicated region
        $region117: #{tpu_custom_call.1} parent=91 // pred_check
          %p758 = pneg %p449
        $region118: #{tpu_custom_call.1} parent=91 // pred_check_branch
          %760 = sbr.rel (%p758) target = $region120
        $region119: #{tpu_custom_call.1} parent=91 // pred_region
          %761 = dma.done %s754, 512
        $region120: #{tpu_custom_call.1} parent=91 // pred_fallthru
          _
        %p762 = pneg %p48
        %p763 = pneg %p45
        %p764 = pneg %p69
        %p765 = pneg %p66
        %p766 = pneg %p90
        %p767 = pneg %p87
        %p768 = pneg %p111
        %p769 = pneg %p108
        %p770 = scmp.lt.s32.totalorder %s32, 1
        %s771 = scalar_select %p770, %s32, 1
        %s772 = scalar_lea.vmem %s4, %s771
        %p773 = pneg %p137
        %p774 = pneg %p134
        %p775 = scmp.lt.s32.totalorder %s32, 1
        %s776 = scalar_select %p775, %s32, 1
        %s777 = scalar_lea.vmem %s5, %s776
        %p778 = pneg %p163
        %p779 = pneg %p160
        %s780 = sand.u32 %s32, 1
        %s781 = scalar_lea.sflag [#allocation5], %s780
        %s782 = sand.u32 %s176, 1
        %s783 = smul.addr %s782, 32
        %s784 = scalar_lea.vmem [#allocation9], %s783
        %p785 = pneg %p189
        %p786 = pneg %p186
        %p787 = scmp.lt.s32.totalorder %s32, 1
        %s788 = scalar_select %p787, %s32, 1
        %s789 = scalar_lea.vmem %s7, %s788
        %p790 = pneg %p215
        %p791 = pneg %p212
        %s792 = sand.u32 %s32, 1
        %s793 = scalar_lea.sflag [#allocation5], %s792
        %s794 = sand.u32 %s228, 1
        %s795 = smul.addr %s794, 32
        %s796 = scalar_lea.vmem [#allocation10], %s795
        %p797 = pneg %p241
        %p798 = pneg %p238
        %p799 = scmp.lt.s32.totalorder %s32, 1
        %s800 = scalar_select %p799, %s32, 1
        %s801 = scalar_lea.vmem %s9, %s800
        %p802 = pneg %p267
        %p803 = pneg %p264
        %s804 = sand.u32 %s32, 1
        %s805 = scalar_lea.sflag [#allocation5], %s804
        %s806 = sand.u32 %s280, 1
        %s807 = smul.addr %s806, 32
        %s808 = scalar_lea.vmem [#allocation11], %s807
        %p809 = pneg %p293
        %p810 = pneg %p290
        %p811 = scmp.lt.s32.totalorder %s32, 1
        %s812 = scalar_select %p811, %s32, 1
        %s813 = scalar_lea.vmem %s11, %s812
        %p814 = pneg %p319
        %p815 = pneg %p316
        %p816 = scmp.lt.s32.totalorder %s32, 1
        %s817 = scalar_select %p816, %s32, 1
        %s818 = scalar_lea.vmem %s12, %s817
        %p819 = pneg %p345
        %p820 = pneg %p342
        %p821 = scmp.lt.s32.totalorder %s32, 1
        %s822 = scalar_select %p821, %s32, 1
        %s823 = scalar_lea.vmem %s13, %s822
        %p824 = pneg %p371
        %p825 = pneg %p368
        %s826 = sand.u32 %s32, 1
        %s827 = scalar_lea.sflag [#allocation5], %s826
        %s828 = sand.u32 %s384, 1
        %s829 = smul.addr %s828, 32
        %s830 = scalar_lea.vmem [#allocation12], %s829
        %p831 = pneg %p397
        %p832 = pneg %p394
        %p833 = scmp.lt.s32.totalorder %s32, 1
        %s834 = scalar_select %p833, %s32, 1
        %s835 = scalar_lea.vmem %s15, %s834
        %p836 = pneg %p423
        %p837 = pneg %p420
        %s838 = sand.u32 %s32, 1
        %s839 = scalar_lea.sflag [#allocation5], %s838
        %s840 = sand.u32 %s436, 1
        %s841 = smul.addr %s840, 32
        %s842 = scalar_lea.vmem [#allocation13], %s841
        %p843 = pneg %p449
        %p844 = pneg %p446
        %p845 = scmp.lt.s32.totalorder %s32, 1
        %s846 = scalar_select %p845, %s32, 1
        %s847 = scalar_lea.vmem %s17, %s846
        %p848 = pneg %p475
        %p849 = pneg %p472
        %p850 = pneg %p496
        %p851 = pneg %p493
        %p852 = scmp.lt.s32.totalorder %s32, 1
        %s853 = scalar_select %p852, %s32, 1
        %s854 = scalar_lea.vmem %s4, %s853
        %p855 = scmp.lt.s32.totalorder %s32, 1
        %s856 = scalar_select %p855, %s32, 1
        %s857 = scalar_lea.vmem %s5, %s856
        %p858 = scmp.lt.s32.totalorder %s32, 1
        %s859 = scalar_select %p858, %s32, 1
        %s860 = scalar_lea.vmem %s7, %s859
        %p861 = scmp.lt.s32.totalorder %s32, 1
        %s862 = scalar_select %p861, %s32, 1
        %s863 = scalar_lea.vmem %s9, %s862
        %p864 = scmp.lt.s32.totalorder %s32, 1
        %s865 = scalar_select %p864, %s32, 1
        %s866 = scalar_lea.vmem %s11, %s865
        %p867 = scmp.lt.s32.totalorder %s32, 1
        %s868 = scalar_select %p867, %s32, 1
        %s869 = scalar_lea.vmem %s12, %s868
        %p870 = scmp.lt.s32.totalorder %s32, 1
        %s871 = scalar_select %p870, %s32, 1
        %s872 = scalar_lea.vmem %s13, %s871
        %p873 = scmp.lt.s32.totalorder %s32, 1
        %s874 = scalar_select %p873, %s32, 1
        %s875 = scalar_lea.vmem %s15, %s874
        %p876 = scmp.lt.s32.totalorder %s32, 1
        %s877 = scalar_select %p876, %s32, 1
        %s878 = scalar_lea.vmem %s17, %s877
        %p879 = scmp.eq.s32.totalorder %s32, 0
        // Predicated region
        $region121: #{tpu_custom_call.1} parent=91 // pred_check
          %p880 = pneg %p879
        $region122: #{tpu_custom_call.1} parent=91 // pred_check_branch
          %882 = sbr.rel (%p880) target = $region124
        $region123: #{tpu_custom_call.1} parent=91 // pred_region
          %v883 = vld [vmem:[%s0] sm:$0xff]
          %v884 = vld [vmem:[%s0 + $0x8] sm:$0xff]
          %vm885 = vcmask 261120
          %886 = vst.msk [vmem:[#allocation2] sm:$0xff] %vm885, %v883
          %887 = vst.msk [vmem:[#allocation2 + $0x8] sm:$0xff] %vm885, %v884
        $region124: #{tpu_custom_call.1} parent=91 // pred_fallthru
          _
        %v888 = vld [vmem:[#allocation2] sm:$0xff]
        %v889 = vld [vmem:[#allocation2 + $0x8] sm:$0xff]
        %v890 = vld [vmem:[%s854] sm:$0x1]
        %v891 = vld [vmem:[%s857] sm:$0x1]
        %vm892 = vcmask 261120
        %v893 = vsel %vm892, %v888, 0.0
        %894 = vadd.xlane.f32.xlu0 %v893
        %v895 = vpop.xlane.xlu0 %894
        %v896 = vsel %vm892, %v889, 0.0
        %897 = vadd.xlane.f32.xlu0 %v896
        %v898 = vpop.xlane.xlu0 %897
        %v899 = vrcp.pop 32.0
        %v900 = vmul.f32 %v895, %v899
        %v901 = vmul.f32 %v898, %v899
        %v902 = vsub.f32 %v888, %v900
        %v903 = vsub.f32 %v889, %v901
        %v904 = vmul.f32 %v902, %v902
        %v905 = vmul.f32 %v903, %v903
        %v906 = vsel %vm892, %v904, 0.0
        %907 = vadd.xlane.f32.xlu0 %v906
        %v908 = vpop.xlane.xlu0 %907
        %v909 = vsel %vm892, %v905, 0.0
        %910 = vadd.xlane.f32.xlu0 %v909
        %v911 = vpop.xlane.xlu0 %910
        %v912 = vmul.f32 %v908, %v899
        %v913 = vmul.f32 %v911, %v899
        %v914 = vadd.f32 %v912, 1e-08
        %v915 = vadd.f32 %v913, 1e-08
        %v916 = vrsqrt.pop %v914
        %v917 = vrsqrt.pop %v915
        %v918 = vmul.f32 %v902, %v916
        %v919 = vmul.f32 %v903, %v917
        %v921 = vlaneseq
        %v922 = vshrl.u32 %v921, 7
        %v923 = vsub.s32 0, %v922
        %v924 = vrot.slane %v890, %v923
        %v926 = vmul.f32 %v918, %v924
        %v927 = vmul.f32 %v919, %v924
        %v929 = vlaneseq
        %v930 = vshrl.u32 %v929, 7
        %v931 = vsub.s32 0, %v930
        %v932 = vrot.slane %v891, %v931
        %v934 = vadd.f32 %v926, %v932
        %v935 = vadd.f32 %v927, %v932
        %v936 = vld [vmem:[%s721] sm:$0xff]
        %v937 = vld [vmem:[%s721 + $0x8] sm:$0xff]
        %v938 = vld [vmem:[%s721 + $0x10] sm:$0xff]
        %v939 = vld [vmem:[%s721 + $0x18] sm:$0xff]
        %v940 = vld [vmem:[%s860] sm:$0x1]
        %v942 = vlaneseq
        %v943 = vshrl.u32 %v942, 7
        %v944 = vsub.s32 0, %v943
        %v945 = vrot.slane %v940, %v944
        %v948 = vsel %vm892, %v934, 0
        %v951 = vsel %vm892, %v935, 0
        %953 = vmatprep.subr.mxu0 0.0
        %954 = vmatpush1.msra.mxu0 0.0
        %955 = vmatprep.subr.mxu0 0.0
        %956 = vmatpush1.msra.mxu0 0.0
        %957 = vmatprep.subr.mxu0 0.0
        %958 = vmatpush1.msra.mxu0 0.0
        %959 = vmatprep.subr.mxu0 0.0
        %960 = vmatpush1.msra.mxu0 0.0
        %961 = vmatprep.subr.mxu0 0.0
        %962 = vmatpush1.msra.mxu0 0.0
        %963 = vmatprep.subr.mxu0 0.0
        %964 = vmatpush1.msra.mxu0 0.0
        %965 = vmatprep.subr.mxu0 0.0
        %966 = vmatpush1.msra.mxu0 0.0
        %967 = vmatprep.subr.mxu0 0.0
        %968 = vmatpush1.msra.mxu0 0.0
        %969 = vmatprep.subr.mxu0 0.0
        %970 = vmatpush1.msra.mxu0 0.0
        %971 = vmatprep.subr.mxu0 0.0
        %972 = vmatpush1.msra.mxu0 0.0
        %973 = vmatprep.subr.mxu0 0.0
        %974 = vmatpush1.msra.mxu0 0.0
        %975 = vmatprep.subr.mxu0 0.0
        %976 = vmatpush1.msra.mxu0 0.0
        %977 = vmatprep.subr.mxu0 0.0
        %978 = vmatpush1.msra.mxu0 %v939
        %979 = vmatprep.subr.mxu0 0.0
        %980 = vmatpush1.msra.mxu0 %v938
        %981 = vmatprep.subr.mxu0 0.0
        %982 = vmatpush1.msra.mxu0 %v937
        %983 = vmatprep.subr.mxu0 0.0
        %984 = vmatpush1.msra.mxu0 %v936
        %985 = vmatprep.subr.mxu0 0.0
        %986 = vmatpush2.msra.mxu0 0.0
        %987 = vmatprep.subr.mxu0 0.0
        %988 = vmatpush2.msra.mxu0 0.0
        %989 = vmatprep.subr.mxu0 0.0
        %990 = vmatpush2.msra.mxu0 0.0
        %991 = vmatprep.subr.mxu0 0.0
        %992 = vmatpush2.msra.mxu0 0.0
        %993 = vmatprep.subr.mxu0 0.0
        %994 = vmatpush2.msra.mxu0 0.0
        %995 = vmatprep.subr.mxu0 0.0
        %996 = vmatpush2.msra.mxu0 0.0
        %997 = vmatprep.subr.mxu0 0.0
        %998 = vmatpush2.msra.mxu0 0.0
        %999 = vmatprep.subr.mxu0 0.0
        %1000 = vmatpush2.msra.mxu0 0.0
        %1001 = vmatprep.subr.mxu0 0.0
        %1002 = vmatpush2.msra.mxu0 0.0
        %1003 = vmatprep.subr.mxu0 0.0
        %1004 = vmatpush2.msra.mxu0 0.0
        %1005 = vmatprep.subr.mxu0 0.0
        %1006 = vmatpush2.msra.mxu0 0.0
        %1007 = vmatprep.subr.mxu0 0.0
        %1008 = vmatpush2.msra.mxu0 0.0
        %1009 = vmatprep.subr.mxu0 0.0
        %1010 = vmatpush2.msra.mxu0 0.0
        %1011 = vmatprep.subr.mxu0 0.0
        %1012 = vmatpush2.msra.mxu0 0.0
        %1013 = vmatprep.subr.mxu0 0.0
        %1014 = vmatpush2.msra.mxu0 0.0
        %1015 = vmatprep.subr.mxu0 0.0
        %1016 = vmatpush2.msra.mxu0 0.0
        %1017 = vmatprep.mubr.f32.mxu0 0.0
        %1018 = vmatmul.mubr.f32.gmra.mxu0 %v948
        %v1019 = vpop.f32.mrf.mxu0
        %v1020 = vadd.f32 %v945, %v1019
        %v1021 = vpop.f32.mrf.mxu0
        %1022 = vmatprep.mubr.f32.mxu0 0.0
        %1023 = vmatmul.mubr.f32.gmra.mxu0 %v951
        %v1024 = vpop.f32.mrf.mxu0
        %v1025 = vadd.f32 %v945, %v1024
        %v1026 = vpop.f32.mrf.mxu0
        %1027 = vdwg.mxu0
        %v1028 = vld [vmem:[%s730] sm:$0xff]
        %v1029 = vld [vmem:[%s730 + $0x8] sm:$0xff]
        %v1030 = vld [vmem:[%s730 + $0x10] sm:$0xff]
        %v1031 = vld [vmem:[%s730 + $0x18] sm:$0xff]
        %v1032 = vld [vmem:[%s863] sm:$0x1]
        %v1034 = vlaneseq
        %v1035 = vshrl.u32 %v1034, 7
        %v1036 = vsub.s32 0, %v1035
        %v1037 = vrot.slane %v1032, %v1036
        %v1040 = vsel %vm892, %v888, 0
        %v1043 = vsel %vm892, %v889, 0
        %1045 = vmatprep.subr.mxu0 0.0
        %1046 = vmatpush1.msra.mxu0 0.0
        %1047 = vmatprep.subr.mxu0 0.0
        %1048 = vmatpush1.msra.mxu0 0.0
        %1049 = vmatprep.subr.mxu0 0.0
        %1050 = vmatpush1.msra.mxu0 0.0
        %1051 = vmatprep.subr.mxu0 0.0
        %1052 = vmatpush1.msra.mxu0 0.0
        %1053 = vmatprep.subr.mxu0 0.0
        %1054 = vmatpush1.msra.mxu0 0.0
        %1055 = vmatprep.subr.mxu0 0.0
        %1056 = vmatpush1.msra.mxu0 0.0
        %1057 = vmatprep.subr.mxu0 0.0
        %1058 = vmatpush1.msra.mxu0 0.0
        %1059 = vmatprep.subr.mxu0 0.0
        %1060 = vmatpush1.msra.mxu0 0.0
        %1061 = vmatprep.subr.mxu0 0.0
        %1062 = vmatpush1.msra.mxu0 0.0
        %1063 = vmatprep.subr.mxu0 0.0
        %1064 = vmatpush1.msra.mxu0 0.0
        %1065 = vmatprep.subr.mxu0 0.0
        %1066 = vmatpush1.msra.mxu0 0.0
        %1067 = vmatprep.subr.mxu0 0.0
        %1068 = vmatpush1.msra.mxu0 0.0
        %1069 = vmatprep.subr.mxu0 0.0
        %1070 = vmatpush1.msra.mxu0 %v1031
        %1071 = vmatprep.subr.mxu0 0.0
        %1072 = vmatpush1.msra.mxu0 %v1030
        %1073 = vmatprep.subr.mxu0 0.0
        %1074 = vmatpush1.msra.mxu0 %v1029
        %1075 = vmatprep.subr.mxu0 0.0
        %1076 = vmatpush1.msra.mxu0 %v1028
        %1077 = vmatprep.subr.mxu0 0.0
        %1078 = vmatpush2.msra.mxu0 0.0
        %1079 = vmatprep.subr.mxu0 0.0
        %1080 = vmatpush2.msra.mxu0 0.0
        %1081 = vmatprep.subr.mxu0 0.0
        %1082 = vmatpush2.msra.mxu0 0.0
        %1083 = vmatprep.subr.mxu0 0.0
        %1084 = vmatpush2.msra.mxu0 0.0
        %1085 = vmatprep.subr.mxu0 0.0
        %1086 = vmatpush2.msra.mxu0 0.0
        %1087 = vmatprep.subr.mxu0 0.0
        %1088 = vmatpush2.msra.mxu0 0.0
        %1089 = vmatprep.subr.mxu0 0.0
        %1090 = vmatpush2.msra.mxu0 0.0
        %1091 = vmatprep.subr.mxu0 0.0
        %1092 = vmatpush2.msra.mxu0 0.0
        %1093 = vmatprep.subr.mxu0 0.0
        %1094 = vmatpush2.msra.mxu0 0.0
        %1095 = vmatprep.subr.mxu0 0.0
        %1096 = vmatpush2.msra.mxu0 0.0
        %1097 = vmatprep.subr.mxu0 0.0
        %1098 = vmatpush2.msra.mxu0 0.0
        %1099 = vmatprep.subr.mxu0 0.0
        %1100 = vmatpush2.msra.mxu0 0.0
        %1101 = vmatprep.subr.mxu0 0.0
        %1102 = vmatpush2.msra.mxu0 0.0
        %1103 = vmatprep.subr.mxu0 0.0
        %1104 = vmatpush2.msra.mxu0 0.0
        %1105 = vmatprep.subr.mxu0 0.0
        %1106 = vmatpush2.msra.mxu0 0.0
        %1107 = vmatprep.subr.mxu0 0.0
        %1108 = vmatpush2.msra.mxu0 0.0
        %1109 = vmatprep.mubr.f32.mxu0 0.0
        %1110 = vmatmul.mubr.f32.gmra.mxu0 %v1040
        %v1111 = vpop.f32.mrf.mxu0
        %v1112 = vadd.f32 %v1037, %v1111
        %v1113 = vpop.f32.mrf.mxu0
        %1114 = vmatprep.mubr.f32.mxu0 0.0
        %1115 = vmatmul.mubr.f32.gmra.mxu0 %v1043
        %v1116 = vpop.f32.mrf.mxu0
        %v1117 = vadd.f32 %v1037, %v1116
        %v1118 = vpop.f32.mrf.mxu0
        %1119 = vdwg.mxu0
        %vm1120 = vcmask 64512
        %v1122 = vsel %vm1120, %v1020, 0
        %v1125 = vsel %vm1120, %v1112, 0
        %1127 = vmatprep.subr.mxu0 0.0
        %1128 = vmatpush1.xpose.msra.mxu0 0.0
        %1129 = vmatprep.subr.mxu0 0.0
        %1130 = vmatpush1.xpose.msra.mxu0 0.0
        %1131 = vmatprep.subr.mxu0 0.0
        %1132 = vmatpush1.xpose.msra.mxu0 0.0
        %1133 = vmatprep.subr.mxu0 0.0
        %1134 = vmatpush1.xpose.msra.mxu0 0.0
        %1135 = vmatprep.subr.mxu0 0.0
        %1136 = vmatpush1.xpose.msra.mxu0 0.0
        %1137 = vmatprep.subr.mxu0 0.0
        %1138 = vmatpush1.xpose.msra.mxu0 0.0
        %1139 = vmatprep.subr.mxu0 0.0
        %1140 = vmatpush1.xpose.msra.mxu0 0.0
        %1141 = vmatprep.subr.mxu0 0.0
        %1142 = vmatpush1.xpose.msra.mxu0 0.0
        %1143 = vmatprep.subr.mxu0 0.0
        %1144 = vmatpush1.xpose.msra.mxu0 0.0
        %1145 = vmatprep.subr.mxu0 0.0
        %1146 = vmatpush1.xpose.msra.mxu0 0.0
        %1147 = vmatprep.subr.mxu0 0.0
        %1148 = vmatpush1.xpose.msra.mxu0 0.0
        %1149 = vmatprep.subr.mxu0 0.0
        %1150 = vmatpush1.xpose.msra.mxu0 0.0
        %1151 = vmatprep.subr.mxu0 0.0
        %1152 = vmatpush1.xpose.msra.mxu0 0.0
        %1153 = vmatprep.subr.mxu0 0.0
        %1154 = vmatpush1.xpose.msra.mxu0 0.0
        %1155 = vmatprep.subr.mxu0 0.0
        %1156 = vmatpush1.xpose.msra.mxu0 0.0
        %1157 = vmatprep.subr.mxu0 0.0
        %1158 = vmatpush1.xpose.msra.mxu0 %v1125
        %1159 = vmatprep.subr.mxu0 0.0
        %1160 = vmatpush2.xpose.msra.mxu0 0.0
        %1161 = vmatprep.subr.mxu0 0.0
        %1162 = vmatpush2.xpose.msra.mxu0 0.0
        %1163 = vmatprep.subr.mxu0 0.0
        %1164 = vmatpush2.xpose.msra.mxu0 0.0
        %1165 = vmatprep.subr.mxu0 0.0
        %1166 = vmatpush2.xpose.msra.mxu0 0.0
        %1167 = vmatprep.subr.mxu0 0.0
        %1168 = vmatpush2.xpose.msra.mxu0 0.0
        %1169 = vmatprep.subr.mxu0 0.0
        %1170 = vmatpush2.xpose.msra.mxu0 0.0
        %1171 = vmatprep.subr.mxu0 0.0
        %1172 = vmatpush2.xpose.msra.mxu0 0.0
        %1173 = vmatprep.subr.mxu0 0.0
        %1174 = vmatpush2.xpose.msra.mxu0 0.0
        %1175 = vmatprep.subr.mxu0 0.0
        %1176 = vmatpush2.xpose.msra.mxu0 0.0
        %1177 = vmatprep.subr.mxu0 0.0
        %1178 = vmatpush2.xpose.msra.mxu0 0.0
        %1179 = vmatprep.subr.mxu0 0.0
        %1180 = vmatpush2.xpose.msra.mxu0 0.0
        %1181 = vmatprep.subr.mxu0 0.0
        %1182 = vmatpush2.xpose.msra.mxu0 0.0
        %1183 = vmatprep.subr.mxu0 0.0
        %1184 = vmatpush2.xpose.msra.mxu0 0.0
        %1185 = vmatprep.subr.mxu0 0.0
        %1186 = vmatpush2.xpose.msra.mxu0 0.0
        %1187 = vmatprep.subr.mxu0 0.0
        %1188 = vmatpush2.xpose.msra.mxu0 0.0
        %1189 = vmatprep.subr.mxu0 0.0
        %1190 = vmatpush2.xpose.msra.mxu0 0.0
        %1191 = vmatprep.mubr.f32.mxu0 0.0
        %1192 = vmatmul.mubr.f32.gmra.mxu0 %v1122
        %v1193 = vpop.f32.mrf.mxu0
        %v1194 = vadd.f32 0.0, %v1193
        %v1195 = vpop.f32.mrf.mxu0
        %1196 = vdwg.mxu0
        %v1197 = vmul.f32 %v1194, 0.35355338
        %v1198 = vsel %vm1120, %v1197, -inf
        %1199 = vmax.xlane.f32.xlu0 %v1198
        %v1200 = vpop.xlane.xlu0 %1199
        %v1201 = vsub.f32 %v1197, %v1200
        %v1202 = vmul.f32 %v1201, 1.442695
        %v1203 = vpow.pop %v1202
        %v1204 = vsel %vm1120, %v1203, 0.0
        %1205 = vadd.xlane.f32.xlu0 %v1204
        %v1206 = vpop.xlane.xlu0 %1205
        %v1207 = vrcp.pop %v1206
        %v1208 = vmul.f32 %v1203, %v1207
        %1209 = vrot.lane.b32.xlu0 %v1112, 96
        %v1210 = vpop.permute.xlu0 %1209
        %v1213 = vsel %vm1120, %v1208, 0
        %1215 = vmatprep.subr.mxu0 0.0
        %1216 = vmatpush1.msra.mxu0 0.0
        %1217 = vmatprep.subr.mxu0 0.0
        %1218 = vmatpush1.msra.mxu0 0.0
        %1219 = vmatprep.subr.mxu0 0.0
        %1220 = vmatpush1.msra.mxu0 0.0
        %1221 = vmatprep.subr.mxu0 0.0
        %1222 = vmatpush1.msra.mxu0 0.0
        %1223 = vmatprep.subr.mxu0 0.0
        %1224 = vmatpush1.msra.mxu0 0.0
        %1225 = vmatprep.subr.mxu0 0.0
        %1226 = vmatpush1.msra.mxu0 0.0
        %1227 = vmatprep.subr.mxu0 0.0
        %1228 = vmatpush1.msra.mxu0 0.0
        %1229 = vmatprep.subr.mxu0 0.0
        %1230 = vmatpush1.msra.mxu0 0.0
        %1231 = vmatprep.subr.mxu0 0.0
        %1232 = vmatpush1.msra.mxu0 0.0
        %1233 = vmatprep.subr.mxu0 0.0
        %1234 = vmatpush1.msra.mxu0 0.0
        %1235 = vmatprep.subr.mxu0 0.0
        %1236 = vmatpush1.msra.mxu0 0.0
        %1237 = vmatprep.subr.mxu0 0.0
        %1238 = vmatpush1.msra.mxu0 0.0
        %1239 = vmatprep.subr.mxu0 0.0
        %1240 = vmatpush1.msra.mxu0 0.0
        %1241 = vmatprep.subr.mxu0 0.0
        %1242 = vmatpush1.msra.mxu0 0.0
        %1243 = vmatprep.subr.mxu0 0.0
        %1244 = vmatpush1.msra.mxu0 0.0
        %1245 = vmatprep.subr.mxu0 0.0
        %1246 = vmatpush1.msra.mxu0 %v1210
        %1247 = vmatprep.subr.mxu0 0.0
        %1248 = vmatpush2.msra.mxu0 0.0
        %1249 = vmatprep.subr.mxu0 0.0
        %1250 = vmatpush2.msra.mxu0 0.0
        %1251 = vmatprep.subr.mxu0 0.0
        %1252 = vmatpush2.msra.mxu0 0.0
        %1253 = vmatprep.subr.mxu0 0.0
        %1254 = vmatpush2.msra.mxu0 0.0
        %1255 = vmatprep.subr.mxu0 0.0
        %1256 = vmatpush2.msra.mxu0 0.0
        %1257 = vmatprep.subr.mxu0 0.0
        %1258 = vmatpush2.msra.mxu0 0.0
        %1259 = vmatprep.subr.mxu0 0.0
        %1260 = vmatpush2.msra.mxu0 0.0
        %1261 = vmatprep.subr.mxu0 0.0
        %1262 = vmatpush2.msra.mxu0 0.0
        %1263 = vmatprep.subr.mxu0 0.0
        %1264 = vmatpush2.msra.mxu0 0.0
        %1265 = vmatprep.subr.mxu0 0.0
        %1266 = vmatpush2.msra.mxu0 0.0
        %1267 = vmatprep.subr.mxu0 0.0
        %1268 = vmatpush2.msra.mxu0 0.0
        %1269 = vmatprep.subr.mxu0 0.0
        %1270 = vmatpush2.msra.mxu0 0.0
        %1271 = vmatprep.subr.mxu0 0.0
        %1272 = vmatpush2.msra.mxu0 0.0
        %1273 = vmatprep.subr.mxu0 0.0
        %1274 = vmatpush2.msra.mxu0 0.0
        %1275 = vmatprep.subr.mxu0 0.0
        %1276 = vmatpush2.msra.mxu0 0.0
        %1277 = vmatprep.subr.mxu0 0.0
        %1278 = vmatpush2.msra.mxu0 0.0
        %1279 = vmatprep.mubr.f32.mxu0 0.0
        %1280 = vmatmul.mubr.f32.gmra.mxu0 %v1213
        %v1281 = vpop.f32.mrf.mxu0
        %v1282 = vadd.f32 0.0, %v1281
        %v1283 = vpop.f32.mrf.mxu0
        %1284 = vdwg.mxu0
        %1285 = vst.msk [vmem:[#allocation3] sm:$0xff] %vm1120, %v1282
        %1286 = vrot.lane.b32.xlu0 %v1020, 120
        %v1287 = vpop.permute.xlu0 %1286
        %1288 = vrot.lane.b32.xlu0 %v1112, 120
        %v1289 = vpop.permute.xlu0 %1288
        %v1290 = vsel %vm1120, %v1287, 0
        %v1292 = vsel %vm1120, %v1289, 0
        %1294 = vmatprep.subr.mxu0 0.0
        %1295 = vmatpush1.xpose.msra.mxu0 0.0
        %1296 = vmatprep.subr.mxu0 0.0
        %1297 = vmatpush1.xpose.msra.mxu0 0.0
        %1298 = vmatprep.subr.mxu0 0.0
        %1299 = vmatpush1.xpose.msra.mxu0 0.0
        %1300 = vmatprep.subr.mxu0 0.0
        %1301 = vmatpush1.xpose.msra.mxu0 0.0
        %1302 = vmatprep.subr.mxu0 0.0
        %1303 = vmatpush1.xpose.msra.mxu0 0.0
        %1304 = vmatprep.subr.mxu0 0.0
        %1305 = vmatpush1.xpose.msra.mxu0 0.0
        %1306 = vmatprep.subr.mxu0 0.0
        %1307 = vmatpush1.xpose.msra.mxu0 0.0
        %1308 = vmatprep.subr.mxu0 0.0
        %1309 = vmatpush1.xpose.msra.mxu0 0.0
        %1310 = vmatprep.subr.mxu0 0.0
        %1311 = vmatpush1.xpose.msra.mxu0 0.0
        %1312 = vmatprep.subr.mxu0 0.0
        %1313 = vmatpush1.xpose.msra.mxu0 0.0
        %1314 = vmatprep.subr.mxu0 0.0
        %1315 = vmatpush1.xpose.msra.mxu0 0.0
        %1316 = vmatprep.subr.mxu0 0.0
        %1317 = vmatpush1.xpose.msra.mxu0 0.0
        %1318 = vmatprep.subr.mxu0 0.0
        %1319 = vmatpush1.xpose.msra.mxu0 0.0
        %1320 = vmatprep.subr.mxu0 0.0
        %1321 = vmatpush1.xpose.msra.mxu0 0.0
        %1322 = vmatprep.subr.mxu0 0.0
        %1323 = vmatpush1.xpose.msra.mxu0 0.0
        %1324 = vmatprep.subr.mxu0 0.0
        %1325 = vmatpush1.xpose.msra.mxu0 %v1292
        %1326 = vmatprep.subr.mxu0 0.0
        %1327 = vmatpush2.xpose.msra.mxu0 0.0
        %1328 = vmatprep.subr.mxu0 0.0
        %1329 = vmatpush2.xpose.msra.mxu0 0.0
        %1330 = vmatprep.subr.mxu0 0.0
        %1331 = vmatpush2.xpose.msra.mxu0 0.0
        %1332 = vmatprep.subr.mxu0 0.0
        %1333 = vmatpush2.xpose.msra.mxu0 0.0
        %1334 = vmatprep.subr.mxu0 0.0
        %1335 = vmatpush2.xpose.msra.mxu0 0.0
        %1336 = vmatprep.subr.mxu0 0.0
        %1337 = vmatpush2.xpose.msra.mxu0 0.0
        %1338 = vmatprep.subr.mxu0 0.0
        %1339 = vmatpush2.xpose.msra.mxu0 0.0
        %1340 = vmatprep.subr.mxu0 0.0
        %1341 = vmatpush2.xpose.msra.mxu0 0.0
        %1342 = vmatprep.subr.mxu0 0.0
        %1343 = vmatpush2.xpose.msra.mxu0 0.0
        %1344 = vmatprep.subr.mxu0 0.0
        %1345 = vmatpush2.xpose.msra.mxu0 0.0
        %1346 = vmatprep.subr.mxu0 0.0
        %1347 = vmatpush2.xpose.msra.mxu0 0.0
        %1348 = vmatprep.subr.mxu0 0.0
        %1349 = vmatpush2.xpose.msra.mxu0 0.0
        %1350 = vmatprep.subr.mxu0 0.0
        %1351 = vmatpush2.xpose.msra.mxu0 0.0
        %1352 = vmatprep.subr.mxu0 0.0
        %1353 = vmatpush2.xpose.msra.mxu0 0.0
        %1354 = vmatprep.subr.mxu0 0.0
        %1355 = vmatpush2.xpose.msra.mxu0 0.0
        %1356 = vmatprep.subr.mxu0 0.0
        %1357 = vmatpush2.xpose.msra.mxu0 0.0
        %1358 = vmatprep.mubr.f32.mxu0 0.0
        %1359 = vmatmul.mubr.f32.gmra.mxu0 %v1290
        %v1360 = vpop.f32.mrf.mxu0
        %v1361 = vadd.f32 0.0, %v1360
        %v1362 = vpop.f32.mrf.mxu0
        %1363 = vdwg.mxu0
        %v1364 = vmul.f32 %v1361, 0.35355338
        %v1365 = vsel %vm1120, %v1364, -inf
        %1366 = vmax.xlane.f32.xlu0 %v1365
        %v1367 = vpop.xlane.xlu0 %1366
        %v1368 = vsub.f32 %v1364, %v1367
        %v1369 = vmul.f32 %v1368, 1.442695
        %v1370 = vpow.pop %v1369
        %v1371 = vsel %vm1120, %v1370, 0.0
        %1372 = vadd.xlane.f32.xlu0 %v1371
        %v1373 = vpop.xlane.xlu0 %1372
        %v1374 = vrcp.pop %v1373
        %v1375 = vmul.f32 %v1370, %v1374
        %1376 = vrot.lane.b32.xlu0 %v1112, 88
        %v1377 = vpop.permute.xlu0 %1376
        %v1380 = vsel %vm1120, %v1375, 0
        %1382 = vmatprep.subr.mxu0 0.0
        %1383 = vmatpush1.msra.mxu0 0.0
        %1384 = vmatprep.subr.mxu0 0.0
        %1385 = vmatpush1.msra.mxu0 0.0
        %1386 = vmatprep.subr.mxu0 0.0
        %1387 = vmatpush1.msra.mxu0 0.0
        %1388 = vmatprep.subr.mxu0 0.0
        %1389 = vmatpush1.msra.mxu0 0.0
        %1390 = vmatprep.subr.mxu0 0.0
        %1391 = vmatpush1.msra.mxu0 0.0
        %1392 = vmatprep.subr.mxu0 0.0
        %1393 = vmatpush1.msra.mxu0 0.0
        %1394 = vmatprep.subr.mxu0 0.0
        %1395 = vmatpush1.msra.mxu0 0.0
        %1396 = vmatprep.subr.mxu0 0.0
        %1397 = vmatpush1.msra.mxu0 0.0
        %1398 = vmatprep.subr.mxu0 0.0
        %1399 = vmatpush1.msra.mxu0 0.0
        %1400 = vmatprep.subr.mxu0 0.0
        %1401 = vmatpush1.msra.mxu0 0.0
        %1402 = vmatprep.subr.mxu0 0.0
        %1403 = vmatpush1.msra.mxu0 0.0
        %1404 = vmatprep.subr.mxu0 0.0
        %1405 = vmatpush1.msra.mxu0 0.0
        %1406 = vmatprep.subr.mxu0 0.0
        %1407 = vmatpush1.msra.mxu0 0.0
        %1408 = vmatprep.subr.mxu0 0.0
        %1409 = vmatpush1.msra.mxu0 0.0
        %1410 = vmatprep.subr.mxu0 0.0
        %1411 = vmatpush1.msra.mxu0 0.0
        %1412 = vmatprep.subr.mxu0 0.0
        %1413 = vmatpush1.msra.mxu0 %v1377
        %1414 = vmatprep.subr.mxu0 0.0
        %1415 = vmatpush2.msra.mxu0 0.0
        %1416 = vmatprep.subr.mxu0 0.0
        %1417 = vmatpush2.msra.mxu0 0.0
        %1418 = vmatprep.subr.mxu0 0.0
        %1419 = vmatpush2.msra.mxu0 0.0
        %1420 = vmatprep.subr.mxu0 0.0
        %1421 = vmatpush2.msra.mxu0 0.0
        %1422 = vmatprep.subr.mxu0 0.0
        %1423 = vmatpush2.msra.mxu0 0.0
        %1424 = vmatprep.subr.mxu0 0.0
        %1425 = vmatpush2.msra.mxu0 0.0
        %1426 = vmatprep.subr.mxu0 0.0
        %1427 = vmatpush2.msra.mxu0 0.0
        %1428 = vmatprep.subr.mxu0 0.0
        %1429 = vmatpush2.msra.mxu0 0.0
        %1430 = vmatprep.subr.mxu0 0.0
        %1431 = vmatpush2.msra.mxu0 0.0
        %1432 = vmatprep.subr.mxu0 0.0
        %1433 = vmatpush2.msra.mxu0 0.0
        %1434 = vmatprep.subr.mxu0 0.0
        %1435 = vmatpush2.msra.mxu0 0.0
        %1436 = vmatprep.subr.mxu0 0.0
        %1437 = vmatpush2.msra.mxu0 0.0
        %1438 = vmatprep.subr.mxu0 0.0
        %1439 = vmatpush2.msra.mxu0 0.0
        %1440 = vmatprep.subr.mxu0 0.0
        %1441 = vmatpush2.msra.mxu0 0.0
        %1442 = vmatprep.subr.mxu0 0.0
        %1443 = vmatpush2.msra.mxu0 0.0
        %1444 = vmatprep.subr.mxu0 0.0
        %1445 = vmatpush2.msra.mxu0 0.0
        %1446 = vmatprep.mubr.f32.mxu0 0.0
        %1447 = vmatmul.mubr.f32.gmra.mxu0 %v1380
        %v1448 = vpop.f32.mrf.mxu0
        %v1449 = vadd.f32 0.0, %v1448
        %v1450 = vpop.f32.mrf.mxu0
        %1451 = vdwg.mxu0
        %1453 = vrot.lane.b32.xlu0 %v1449, 8
        %v1454 = vpop.permute.xlu0 %1453
        %vm1456 = vcmask 130112
        %1457 = vst.msk [vmem:[#allocation3] sm:$0xff] %vm1456, %v1454
        %1458 = vrot.lane.b32.xlu0 %v1020, 112
        %v1459 = vpop.permute.xlu0 %1458
        %1460 = vrot.lane.b32.xlu0 %v1112, 112
        %v1461 = vpop.permute.xlu0 %1460
        %v1462 = vsel %vm1120, %v1459, 0
        %v1464 = vsel %vm1120, %v1461, 0
        %1466 = vmatprep.subr.mxu0 0.0
        %1467 = vmatpush1.xpose.msra.mxu0 0.0
        %1468 = vmatprep.subr.mxu0 0.0
        %1469 = vmatpush1.xpose.msra.mxu0 0.0
        %1470 = vmatprep.subr.mxu0 0.0
        %1471 = vmatpush1.xpose.msra.mxu0 0.0
        %1472 = vmatprep.subr.mxu0 0.0
        %1473 = vmatpush1.xpose.msra.mxu0 0.0
        %1474 = vmatprep.subr.mxu0 0.0
        %1475 = vmatpush1.xpose.msra.mxu0 0.0
        %1476 = vmatprep.subr.mxu0 0.0
        %1477 = vmatpush1.xpose.msra.mxu0 0.0
        %1478 = vmatprep.subr.mxu0 0.0
        %1479 = vmatpush1.xpose.msra.mxu0 0.0
        %1480 = vmatprep.subr.mxu0 0.0
        %1481 = vmatpush1.xpose.msra.mxu0 0.0
        %1482 = vmatprep.subr.mxu0 0.0
        %1483 = vmatpush1.xpose.msra.mxu0 0.0
        %1484 = vmatprep.subr.mxu0 0.0
        %1485 = vmatpush1.xpose.msra.mxu0 0.0
        %1486 = vmatprep.subr.mxu0 0.0
        %1487 = vmatpush1.xpose.msra.mxu0 0.0
        %1488 = vmatprep.subr.mxu0 0.0
        %1489 = vmatpush1.xpose.msra.mxu0 0.0
        %1490 = vmatprep.subr.mxu0 0.0
        %1491 = vmatpush1.xpose.msra.mxu0 0.0
        %1492 = vmatprep.subr.mxu0 0.0
        %1493 = vmatpush1.xpose.msra.mxu0 0.0
        %1494 = vmatprep.subr.mxu0 0.0
        %1495 = vmatpush1.xpose.msra.mxu0 0.0
        %1496 = vmatprep.subr.mxu0 0.0
        %1497 = vmatpush1.xpose.msra.mxu0 %v1464
        %1498 = vmatprep.subr.mxu0 0.0
        %1499 = vmatpush2.xpose.msra.mxu0 0.0
        %1500 = vmatprep.subr.mxu0 0.0
        %1501 = vmatpush2.xpose.msra.mxu0 0.0
        %1502 = vmatprep.subr.mxu0 0.0
        %1503 = vmatpush2.xpose.msra.mxu0 0.0
        %1504 = vmatprep.subr.mxu0 0.0
        %1505 = vmatpush2.xpose.msra.mxu0 0.0
        %1506 = vmatprep.subr.mxu0 0.0
        %1507 = vmatpush2.xpose.msra.mxu0 0.0
        %1508 = vmatprep.subr.mxu0 0.0
        %1509 = vmatpush2.xpose.msra.mxu0 0.0
        %1510 = vmatprep.subr.mxu0 0.0
        %1511 = vmatpush2.xpose.msra.mxu0 0.0
        %1512 = vmatprep.subr.mxu0 0.0
        %1513 = vmatpush2.xpose.msra.mxu0 0.0
        %1514 = vmatprep.subr.mxu0 0.0
        %1515 = vmatpush2.xpose.msra.mxu0 0.0
        %1516 = vmatprep.subr.mxu0 0.0
        %1517 = vmatpush2.xpose.msra.mxu0 0.0
        %1518 = vmatprep.subr.mxu0 0.0
        %1519 = vmatpush2.xpose.msra.mxu0 0.0
        %1520 = vmatprep.subr.mxu0 0.0
        %1521 = vmatpush2.xpose.msra.mxu0 0.0
        %1522 = vmatprep.subr.mxu0 0.0
        %1523 = vmatpush2.xpose.msra.mxu0 0.0
        %1524 = vmatprep.subr.mxu0 0.0
        %1525 = vmatpush2.xpose.msra.mxu0 0.0
        %1526 = vmatprep.subr.mxu0 0.0
        %1527 = vmatpush2.xpose.msra.mxu0 0.0
        %1528 = vmatprep.subr.mxu0 0.0
        %1529 = vmatpush2.xpose.msra.mxu0 0.0
        %1530 = vmatprep.mubr.f32.mxu0 0.0
        %1531 = vmatmul.mubr.f32.gmra.mxu0 %v1462
        %v1532 = vpop.f32.mrf.mxu0
        %v1533 = vadd.f32 0.0, %v1532
        %v1534 = vpop.f32.mrf.mxu0
        %1535 = vdwg.mxu0
        %v1536 = vmul.f32 %v1533, 0.35355338
        %v1537 = vsel %vm1120, %v1536, -inf
        %1538 = vmax.xlane.f32.xlu0 %v1537
        %v1539 = vpop.xlane.xlu0 %1538
        %v1540 = vsub.f32 %v1536, %v1539
        %v1541 = vmul.f32 %v1540, 1.442695
        %v1542 = vpow.pop %v1541
        %v1543 = vsel %vm1120, %v1542, 0.0
        %1544 = vadd.xlane.f32.xlu0 %v1543
        %v1545 = vpop.xlane.xlu0 %1544
        %v1546 = vrcp.pop %v1545
        %v1547 = vmul.f32 %v1542, %v1546
        %1548 = vrot.lane.b32.xlu0 %v1112, 80
        %v1549 = vpop.permute.xlu0 %1548
        %v1552 = vsel %vm1120, %v1547, 0
        %1554 = vmatprep.subr.mxu0 0.0
        %1555 = vmatpush1.msra.mxu0 0.0
        %1556 = vmatprep.subr.mxu0 0.0
        %1557 = vmatpush1.msra.mxu0 0.0
        %1558 = vmatprep.subr.mxu0 0.0
        %1559 = vmatpush1.msra.mxu0 0.0
        %1560 = vmatprep.subr.mxu0 0.0
        %1561 = vmatpush1.msra.mxu0 0.0
        %1562 = vmatprep.subr.mxu0 0.0
        %1563 = vmatpush1.msra.mxu0 0.0
        %1564 = vmatprep.subr.mxu0 0.0
        %1565 = vmatpush1.msra.mxu0 0.0
        %1566 = vmatprep.subr.mxu0 0.0
        %1567 = vmatpush1.msra.mxu0 0.0
        %1568 = vmatprep.subr.mxu0 0.0
        %1569 = vmatpush1.msra.mxu0 0.0
        %1570 = vmatprep.subr.mxu0 0.0
        %1571 = vmatpush1.msra.mxu0 0.0
        %1572 = vmatprep.subr.mxu0 0.0
        %1573 = vmatpush1.msra.mxu0 0.0
        %1574 = vmatprep.subr.mxu0 0.0
        %1575 = vmatpush1.msra.mxu0 0.0
        %1576 = vmatprep.subr.mxu0 0.0
        %1577 = vmatpush1.msra.mxu0 0.0
        %1578 = vmatprep.subr.mxu0 0.0
        %1579 = vmatpush1.msra.mxu0 0.0
        %1580 = vmatprep.subr.mxu0 0.0
        %1581 = vmatpush1.msra.mxu0 0.0
        %1582 = vmatprep.subr.mxu0 0.0
        %1583 = vmatpush1.msra.mxu0 0.0
        %1584 = vmatprep.subr.mxu0 0.0
        %1585 = vmatpush1.msra.mxu0 %v1549
        %1586 = vmatprep.subr.mxu0 0.0
        %1587 = vmatpush2.msra.mxu0 0.0
        %1588 = vmatprep.subr.mxu0 0.0
        %1589 = vmatpush2.msra.mxu0 0.0
        %1590 = vmatprep.subr.mxu0 0.0
        %1591 = vmatpush2.msra.mxu0 0.0
        %1592 = vmatprep.subr.mxu0 0.0
        %1593 = vmatpush2.msra.mxu0 0.0
        %1594 = vmatprep.subr.mxu0 0.0
        %1595 = vmatpush2.msra.mxu0 0.0
        %1596 = vmatprep.subr.mxu0 0.0
        %1597 = vmatpush2.msra.mxu0 0.0
        %1598 = vmatprep.subr.mxu0 0.0
        %1599 = vmatpush2.msra.mxu0 0.0
        %1600 = vmatprep.subr.mxu0 0.0
        %1601 = vmatpush2.msra.mxu0 0.0
        %1602 = vmatprep.subr.mxu0 0.0
        %1603 = vmatpush2.msra.mxu0 0.0
        %1604 = vmatprep.subr.mxu0 0.0
        %1605 = vmatpush2.msra.mxu0 0.0
        %1606 = vmatprep.subr.mxu0 0.0
        %1607 = vmatpush2.msra.mxu0 0.0
        %1608 = vmatprep.subr.mxu0 0.0
        %1609 = vmatpush2.msra.mxu0 0.0
        %1610 = vmatprep.subr.mxu0 0.0
        %1611 = vmatpush2.msra.mxu0 0.0
        %1612 = vmatprep.subr.mxu0 0.0
        %1613 = vmatpush2.msra.mxu0 0.0
        %1614 = vmatprep.subr.mxu0 0.0
        %1615 = vmatpush2.msra.mxu0 0.0
        %1616 = vmatprep.subr.mxu0 0.0
        %1617 = vmatpush2.msra.mxu0 0.0
        %1618 = vmatprep.mubr.f32.mxu0 0.0
        %1619 = vmatmul.mubr.f32.gmra.mxu0 %v1552
        %v1620 = vpop.f32.mrf.mxu0
        %v1621 = vadd.f32 0.0, %v1620
        %v1622 = vpop.f32.mrf.mxu0
        %1623 = vdwg.mxu0
        %1625 = vrot.lane.b32.xlu0 %v1621, 16
        %v1626 = vpop.permute.xlu0 %1625
        %vm1628 = vcmask 195712
        %1629 = vst.msk [vmem:[#allocation3] sm:$0xff] %vm1628, %v1626
        %1630 = vrot.lane.b32.xlu0 %v1020, 104
        %v1631 = vpop.permute.xlu0 %1630
        %1632 = vrot.lane.b32.xlu0 %v1112, 104
        %v1633 = vpop.permute.xlu0 %1632
        %v1634 = vsel %vm1120, %v1631, 0
        %v1636 = vsel %vm1120, %v1633, 0
        %1638 = vmatprep.subr.mxu0 0.0
        %1639 = vmatpush1.xpose.msra.mxu0 0.0
        %1640 = vmatprep.subr.mxu0 0.0
        %1641 = vmatpush1.xpose.msra.mxu0 0.0
        %1642 = vmatprep.subr.mxu0 0.0
        %1643 = vmatpush1.xpose.msra.mxu0 0.0
        %1644 = vmatprep.subr.mxu0 0.0
        %1645 = vmatpush1.xpose.msra.mxu0 0.0
        %1646 = vmatprep.subr.mxu0 0.0
        %1647 = vmatpush1.xpose.msra.mxu0 0.0
        %1648 = vmatprep.subr.mxu0 0.0
        %1649 = vmatpush1.xpose.msra.mxu0 0.0
        %1650 = vmatprep.subr.mxu0 0.0
        %1651 = vmatpush1.xpose.msra.mxu0 0.0
        %1652 = vmatprep.subr.mxu0 0.0
        %1653 = vmatpush1.xpose.msra.mxu0 0.0
        %1654 = vmatprep.subr.mxu0 0.0
        %1655 = vmatpush1.xpose.msra.mxu0 0.0
        %1656 = vmatprep.subr.mxu0 0.0
        %1657 = vmatpush1.xpose.msra.mxu0 0.0
        %1658 = vmatprep.subr.mxu0 0.0
        %1659 = vmatpush1.xpose.msra.mxu0 0.0
        %1660 = vmatprep.subr.mxu0 0.0
        %1661 = vmatpush1.xpose.msra.mxu0 0.0
        %1662 = vmatprep.subr.mxu0 0.0
        %1663 = vmatpush1.xpose.msra.mxu0 0.0
        %1664 = vmatprep.subr.mxu0 0.0
        %1665 = vmatpush1.xpose.msra.mxu0 0.0
        %1666 = vmatprep.subr.mxu0 0.0
        %1667 = vmatpush1.xpose.msra.mxu0 0.0
        %1668 = vmatprep.subr.mxu0 0.0
        %1669 = vmatpush1.xpose.msra.mxu0 %v1636
        %1670 = vmatprep.subr.mxu0 0.0
        %1671 = vmatpush2.xpose.msra.mxu0 0.0
        %1672 = vmatprep.subr.mxu0 0.0
        %1673 = vmatpush2.xpose.msra.mxu0 0.0
        %1674 = vmatprep.subr.mxu0 0.0
        %1675 = vmatpush2.xpose.msra.mxu0 0.0
        %1676 = vmatprep.subr.mxu0 0.0
        %1677 = vmatpush2.xpose.msra.mxu0 0.0
        %1678 = vmatprep.subr.mxu0 0.0
        %1679 = vmatpush2.xpose.msra.mxu0 0.0
        %1680 = vmatprep.subr.mxu0 0.0
        %1681 = vmatpush2.xpose.msra.mxu0 0.0
        %1682 = vmatprep.subr.mxu0 0.0
        %1683 = vmatpush2.xpose.msra.mxu0 0.0
        %1684 = vmatprep.subr.mxu0 0.0
        %1685 = vmatpush2.xpose.msra.mxu0 0.0
        %1686 = vmatprep.subr.mxu0 0.0
        %1687 = vmatpush2.xpose.msra.mxu0 0.0
        %1688 = vmatprep.subr.mxu0 0.0
        %1689 = vmatpush2.xpose.msra.mxu0 0.0
        %1690 = vmatprep.subr.mxu0 0.0
        %1691 = vmatpush2.xpose.msra.mxu0 0.0
        %1692 = vmatprep.subr.mxu0 0.0
        %1693 = vmatpush2.xpose.msra.mxu0 0.0
        %1694 = vmatprep.subr.mxu0 0.0
        %1695 = vmatpush2.xpose.msra.mxu0 0.0
        %1696 = vmatprep.subr.mxu0 0.0
        %1697 = vmatpush2.xpose.msra.mxu0 0.0
        %1698 = vmatprep.subr.mxu0 0.0
        %1699 = vmatpush2.xpose.msra.mxu0 0.0
        %1700 = vmatprep.subr.mxu0 0.0
        %1701 = vmatpush2.xpose.msra.mxu0 0.0
        %1702 = vmatprep.mubr.f32.mxu0 0.0
        %1703 = vmatmul.mubr.f32.gmra.mxu0 %v1634
        %v1704 = vpop.f32.mrf.mxu0
        %v1705 = vadd.f32 0.0, %v1704
        %v1706 = vpop.f32.mrf.mxu0
        %1707 = vdwg.mxu0
        %v1708 = vmul.f32 %v1705, 0.35355338
        %v1709 = vsel %vm1120, %v1708, -inf
        %1710 = vmax.xlane.f32.xlu0 %v1709
        %v1711 = vpop.xlane.xlu0 %1710
        %v1712 = vsub.f32 %v1708, %v1711
        %v1713 = vmul.f32 %v1712, 1.442695
        %v1714 = vpow.pop %v1713
        %v1715 = vsel %vm1120, %v1714, 0.0
        %1716 = vadd.xlane.f32.xlu0 %v1715
        %v1717 = vpop.xlane.xlu0 %1716
        %v1718 = vrcp.pop %v1717
        %v1719 = vmul.f32 %v1714, %v1718
        %1720 = vrot.lane.b32.xlu0 %v1112, 72
        %v1721 = vpop.permute.xlu0 %1720
        %v1724 = vsel %vm1120, %v1719, 0
        %1726 = vmatprep.subr.mxu0 0.0
        %1727 = vmatpush1.msra.mxu0 0.0
        %1728 = vmatprep.subr.mxu0 0.0
        %1729 = vmatpush1.msra.mxu0 0.0
        %1730 = vmatprep.subr.mxu0 0.0
        %1731 = vmatpush1.msra.mxu0 0.0
        %1732 = vmatprep.subr.mxu0 0.0
        %1733 = vmatpush1.msra.mxu0 0.0
        %1734 = vmatprep.subr.mxu0 0.0
        %1735 = vmatpush1.msra.mxu0 0.0
        %1736 = vmatprep.subr.mxu0 0.0
        %1737 = vmatpush1.msra.mxu0 0.0
        %1738 = vmatprep.subr.mxu0 0.0
        %1739 = vmatpush1.msra.mxu0 0.0
        %1740 = vmatprep.subr.mxu0 0.0
        %1741 = vmatpush1.msra.mxu0 0.0
        %1742 = vmatprep.subr.mxu0 0.0
        %1743 = vmatpush1.msra.mxu0 0.0
        %1744 = vmatprep.subr.mxu0 0.0
        %1745 = vmatpush1.msra.mxu0 0.0
        %1746 = vmatprep.subr.mxu0 0.0
        %1747 = vmatpush1.msra.mxu0 0.0
        %1748 = vmatprep.subr.mxu0 0.0
        %1749 = vmatpush1.msra.mxu0 0.0
        %1750 = vmatprep.subr.mxu0 0.0
        %1751 = vmatpush1.msra.mxu0 0.0
        %1752 = vmatprep.subr.mxu0 0.0
        %1753 = vmatpush1.msra.mxu0 0.0
        %1754 = vmatprep.subr.mxu0 0.0
        %1755 = vmatpush1.msra.mxu0 0.0
        %1756 = vmatprep.subr.mxu0 0.0
        %1757 = vmatpush1.msra.mxu0 %v1721
        %1758 = vmatprep.subr.mxu0 0.0
        %1759 = vmatpush2.msra.mxu0 0.0
        %1760 = vmatprep.subr.mxu0 0.0
        %1761 = vmatpush2.msra.mxu0 0.0
        %1762 = vmatprep.subr.mxu0 0.0
        %1763 = vmatpush2.msra.mxu0 0.0
        %1764 = vmatprep.subr.mxu0 0.0
        %1765 = vmatpush2.msra.mxu0 0.0
        %1766 = vmatprep.subr.mxu0 0.0
        %1767 = vmatpush2.msra.mxu0 0.0
        %1768 = vmatprep.subr.mxu0 0.0
        %1769 = vmatpush2.msra.mxu0 0.0
        %1770 = vmatprep.subr.mxu0 0.0
        %1771 = vmatpush2.msra.mxu0 0.0
        %1772 = vmatprep.subr.mxu0 0.0
        %1773 = vmatpush2.msra.mxu0 0.0
        %1774 = vmatprep.subr.mxu0 0.0
        %1775 = vmatpush2.msra.mxu0 0.0
        %1776 = vmatprep.subr.mxu0 0.0
        %1777 = vmatpush2.msra.mxu0 0.0
        %1778 = vmatprep.subr.mxu0 0.0
        %1779 = vmatpush2.msra.mxu0 0.0
        %1780 = vmatprep.subr.mxu0 0.0
        %1781 = vmatpush2.msra.mxu0 0.0
        %1782 = vmatprep.subr.mxu0 0.0
        %1783 = vmatpush2.msra.mxu0 0.0
        %1784 = vmatprep.subr.mxu0 0.0
        %1785 = vmatpush2.msra.mxu0 0.0
        %1786 = vmatprep.subr.mxu0 0.0
        %1787 = vmatpush2.msra.mxu0 0.0
        %1788 = vmatprep.subr.mxu0 0.0
        %1789 = vmatpush2.msra.mxu0 0.0
        %1790 = vmatprep.mubr.f32.mxu0 0.0
        %1791 = vmatmul.mubr.f32.gmra.mxu0 %v1724
        %v1792 = vpop.f32.mrf.mxu0
        %v1793 = vadd.f32 0.0, %v1792
        %v1794 = vpop.f32.mrf.mxu0
        %1795 = vdwg.mxu0
        %1797 = vrot.lane.b32.xlu0 %v1793, 24
        %v1798 = vpop.permute.xlu0 %1797
        %vm1800 = vcmask 261312
        %1801 = vst.msk [vmem:[#allocation3] sm:$0xff] %vm1800, %v1798
        %v1803 = vsel %vm1120, %v1025, 0
        %v1806 = vsel %vm1120, %v1117, 0
        %1808 = vmatprep.subr.mxu0 0.0
        %1809 = vmatpush1.xpose.msra.mxu0 0.0
        %1810 = vmatprep.subr.mxu0 0.0
        %1811 = vmatpush1.xpose.msra.mxu0 0.0
        %1812 = vmatprep.subr.mxu0 0.0
        %1813 = vmatpush1.xpose.msra.mxu0 0.0
        %1814 = vmatprep.subr.mxu0 0.0
        %1815 = vmatpush1.xpose.msra.mxu0 0.0
        %1816 = vmatprep.subr.mxu0 0.0
        %1817 = vmatpush1.xpose.msra.mxu0 0.0
        %1818 = vmatprep.subr.mxu0 0.0
        %1819 = vmatpush1.xpose.msra.mxu0 0.0
        %1820 = vmatprep.subr.mxu0 0.0
        %1821 = vmatpush1.xpose.msra.mxu0 0.0
        %1822 = vmatprep.subr.mxu0 0.0
        %1823 = vmatpush1.xpose.msra.mxu0 0.0
        %1824 = vmatprep.subr.mxu0 0.0
        %1825 = vmatpush1.xpose.msra.mxu0 0.0
        %1826 = vmatprep.subr.mxu0 0.0
        %1827 = vmatpush1.xpose.msra.mxu0 0.0
        %1828 = vmatprep.subr.mxu0 0.0
        %1829 = vmatpush1.xpose.msra.mxu0 0.0
        %1830 = vmatprep.subr.mxu0 0.0
        %1831 = vmatpush1.xpose.msra.mxu0 0.0
        %1832 = vmatprep.subr.mxu0 0.0
        %1833 = vmatpush1.xpose.msra.mxu0 0.0
        %1834 = vmatprep.subr.mxu0 0.0
        %1835 = vmatpush1.xpose.msra.mxu0 0.0
        %1836 = vmatprep.subr.mxu0 0.0
        %1837 = vmatpush1.xpose.msra.mxu0 0.0
        %1838 = vmatprep.subr.mxu0 0.0
        %1839 = vmatpush1.xpose.msra.mxu0 %v1806
        %1840 = vmatprep.subr.mxu0 0.0
        %1841 = vmatpush2.xpose.msra.mxu0 0.0
        %1842 = vmatprep.subr.mxu0 0.0
        %1843 = vmatpush2.xpose.msra.mxu0 0.0
        %1844 = vmatprep.subr.mxu0 0.0
        %1845 = vmatpush2.xpose.msra.mxu0 0.0
        %1846 = vmatprep.subr.mxu0 0.0
        %1847 = vmatpush2.xpose.msra.mxu0 0.0
        %1848 = vmatprep.subr.mxu0 0.0
        %1849 = vmatpush2.xpose.msra.mxu0 0.0
        %1850 = vmatprep.subr.mxu0 0.0
        %1851 = vmatpush2.xpose.msra.mxu0 0.0
        %1852 = vmatprep.subr.mxu0 0.0
        %1853 = vmatpush2.xpose.msra.mxu0 0.0
        %1854 = vmatprep.subr.mxu0 0.0
        %1855 = vmatpush2.xpose.msra.mxu0 0.0
        %1856 = vmatprep.subr.mxu0 0.0
        %1857 = vmatpush2.xpose.msra.mxu0 0.0
        %1858 = vmatprep.subr.mxu0 0.0
        %1859 = vmatpush2.xpose.msra.mxu0 0.0
        %1860 = vmatprep.subr.mxu0 0.0
        %1861 = vmatpush2.xpose.msra.mxu0 0.0
        %1862 = vmatprep.subr.mxu0 0.0
        %1863 = vmatpush2.xpose.msra.mxu0 0.0
        %1864 = vmatprep.subr.mxu0 0.0
        %1865 = vmatpush2.xpose.msra.mxu0 0.0
        %1866 = vmatprep.subr.mxu0 0.0
        %1867 = vmatpush2.xpose.msra.mxu0 0.0
        %1868 = vmatprep.subr.mxu0 0.0
        %1869 = vmatpush2.xpose.msra.mxu0 0.0
        %1870 = vmatprep.subr.mxu0 0.0
        %1871 = vmatpush2.xpose.msra.mxu0 0.0
        %1872 = vmatprep.mubr.f32.mxu0 0.0
        %1873 = vmatmul.mubr.f32.gmra.mxu0 %v1803
        %v1874 = vpop.f32.mrf.mxu0
        %v1875 = vadd.f32 0.0, %v1874
        %v1876 = vpop.f32.mrf.mxu0
        %1877 = vdwg.mxu0
        %v1878 = vmul.f32 %v1875, 0.35355338
        %v1879 = vsel %vm1120, %v1878, -inf
        %1880 = vmax.xlane.f32.xlu0 %v1879
        %v1881 = vpop.xlane.xlu0 %1880
        %v1882 = vsub.f32 %v1878, %v1881
        %v1883 = vmul.f32 %v1882, 1.442695
        %v1884 = vpow.pop %v1883
        %v1885 = vsel %vm1120, %v1884, 0.0
        %1886 = vadd.xlane.f32.xlu0 %v1885
        %v1887 = vpop.xlane.xlu0 %1886
        %v1888 = vrcp.pop %v1887
        %v1889 = vmul.f32 %v1884, %v1888
        %1890 = vrot.lane.b32.xlu0 %v1117, 96
        %v1891 = vpop.permute.xlu0 %1890
        %v1894 = vsel %vm1120, %v1889, 0
        %1896 = vmatprep.subr.mxu0 0.0
        %1897 = vmatpush1.msra.mxu0 0.0
        %1898 = vmatprep.subr.mxu0 0.0
        %1899 = vmatpush1.msra.mxu0 0.0
        %1900 = vmatprep.subr.mxu0 0.0
        %1901 = vmatpush1.msra.mxu0 0.0
        %1902 = vmatprep.subr.mxu0 0.0
        %1903 = vmatpush1.msra.mxu0 0.0
        %1904 = vmatprep.subr.mxu0 0.0
        %1905 = vmatpush1.msra.mxu0 0.0
        %1906 = vmatprep.subr.mxu0 0.0
        %1907 = vmatpush1.msra.mxu0 0.0
        %1908 = vmatprep.subr.mxu0 0.0
        %1909 = vmatpush1.msra.mxu0 0.0
        %1910 = vmatprep.subr.mxu0 0.0
        %1911 = vmatpush1.msra.mxu0 0.0
        %1912 = vmatprep.subr.mxu0 0.0
        %1913 = vmatpush1.msra.mxu0 0.0
        %1914 = vmatprep.subr.mxu0 0.0
        %1915 = vmatpush1.msra.mxu0 0.0
        %1916 = vmatprep.subr.mxu0 0.0
        %1917 = vmatpush1.msra.mxu0 0.0
        %1918 = vmatprep.subr.mxu0 0.0
        %1919 = vmatpush1.msra.mxu0 0.0
        %1920 = vmatprep.subr.mxu0 0.0
        %1921 = vmatpush1.msra.mxu0 0.0
        %1922 = vmatprep.subr.mxu0 0.0
        %1923 = vmatpush1.msra.mxu0 0.0
        %1924 = vmatprep.subr.mxu0 0.0
        %1925 = vmatpush1.msra.mxu0 0.0
        %1926 = vmatprep.subr.mxu0 0.0
        %1927 = vmatpush1.msra.mxu0 %v1891
        %1928 = vmatprep.subr.mxu0 0.0
        %1929 = vmatpush2.msra.mxu0 0.0
        %1930 = vmatprep.subr.mxu0 0.0
        %1931 = vmatpush2.msra.mxu0 0.0
        %1932 = vmatprep.subr.mxu0 0.0
        %1933 = vmatpush2.msra.mxu0 0.0
        %1934 = vmatprep.subr.mxu0 0.0
        %1935 = vmatpush2.msra.mxu0 0.0
        %1936 = vmatprep.subr.mxu0 0.0
        %1937 = vmatpush2.msra.mxu0 0.0
        %1938 = vmatprep.subr.mxu0 0.0
        %1939 = vmatpush2.msra.mxu0 0.0
        %1940 = vmatprep.subr.mxu0 0.0
        %1941 = vmatpush2.msra.mxu0 0.0
        %1942 = vmatprep.subr.mxu0 0.0
        %1943 = vmatpush2.msra.mxu0 0.0
        %1944 = vmatprep.subr.mxu0 0.0
        %1945 = vmatpush2.msra.mxu0 0.0
        %1946 = vmatprep.subr.mxu0 0.0
        %1947 = vmatpush2.msra.mxu0 0.0
        %1948 = vmatprep.subr.mxu0 0.0
        %1949 = vmatpush2.msra.mxu0 0.0
        %1950 = vmatprep.subr.mxu0 0.0
        %1951 = vmatpush2.msra.mxu0 0.0
        %1952 = vmatprep.subr.mxu0 0.0
        %1953 = vmatpush2.msra.mxu0 0.0
        %1954 = vmatprep.subr.mxu0 0.0
        %1955 = vmatpush2.msra.mxu0 0.0
        %1956 = vmatprep.subr.mxu0 0.0
        %1957 = vmatpush2.msra.mxu0 0.0
        %1958 = vmatprep.subr.mxu0 0.0
        %1959 = vmatpush2.msra.mxu0 0.0
        %1960 = vmatprep.mubr.f32.mxu0 0.0
        %1961 = vmatmul.mubr.f32.gmra.mxu0 %v1894
        %v1962 = vpop.f32.mrf.mxu0
        %v1963 = vadd.f32 0.0, %v1962
        %v1964 = vpop.f32.mrf.mxu0
        %1965 = vdwg.mxu0
        %1966 = vst.msk [vmem:[#allocation3 + $0x8] sm:$0xff] %vm1120, %v1963
        %1967 = vrot.lane.b32.xlu0 %v1025, 120
        %v1968 = vpop.permute.xlu0 %1967
        %1969 = vrot.lane.b32.xlu0 %v1117, 120
        %v1970 = vpop.permute.xlu0 %1969
        %v1971 = vsel %vm1120, %v1968, 0
        %v1973 = vsel %vm1120, %v1970, 0
        %1975 = vmatprep.subr.mxu0 0.0
        %1976 = vmatpush1.xpose.msra.mxu0 0.0
        %1977 = vmatprep.subr.mxu0 0.0
        %1978 = vmatpush1.xpose.msra.mxu0 0.0
        %1979 = vmatprep.subr.mxu0 0.0
        %1980 = vmatpush1.xpose.msra.mxu0 0.0
        %1981 = vmatprep.subr.mxu0 0.0
        %1982 = vmatpush1.xpose.msra.mxu0 0.0
        %1983 = vmatprep.subr.mxu0 0.0
        %1984 = vmatpush1.xpose.msra.mxu0 0.0
        %1985 = vmatprep.subr.mxu0 0.0
        %1986 = vmatpush1.xpose.msra.mxu0 0.0
        %1987 = vmatprep.subr.mxu0 0.0
        %1988 = vmatpush1.xpose.msra.mxu0 0.0
        %1989 = vmatprep.subr.mxu0 0.0
        %1990 = vmatpush1.xpose.msra.mxu0 0.0
        %1991 = vmatprep.subr.mxu0 0.0
        %1992 = vmatpush1.xpose.msra.mxu0 0.0
        %1993 = vmatprep.subr.mxu0 0.0
        %1994 = vmatpush1.xpose.msra.mxu0 0.0
        %1995 = vmatprep.subr.mxu0 0.0
        %1996 = vmatpush1.xpose.msra.mxu0 0.0
        %1997 = vmatprep.subr.mxu0 0.0
        %1998 = vmatpush1.xpose.msra.mxu0 0.0
        %1999 = vmatprep.subr.mxu0 0.0
        %2000 = vmatpush1.xpose.msra.mxu0 0.0
        %2001 = vmatprep.subr.mxu0 0.0
        %2002 = vmatpush1.xpose.msra.mxu0 0.0
        %2003 = vmatprep.subr.mxu0 0.0
        %2004 = vmatpush1.xpose.msra.mxu0 0.0
        %2005 = vmatprep.subr.mxu0 0.0
        %2006 = vmatpush1.xpose.msra.mxu0 %v1973
        %2007 = vmatprep.subr.mxu0 0.0
        %2008 = vmatpush2.xpose.msra.mxu0 0.0
        %2009 = vmatprep.subr.mxu0 0.0
        %2010 = vmatpush2.xpose.msra.mxu0 0.0
        %2011 = vmatprep.subr.mxu0 0.0
        %2012 = vmatpush2.xpose.msra.mxu0 0.0
        %2013 = vmatprep.subr.mxu0 0.0
        %2014 = vmatpush2.xpose.msra.mxu0 0.0
        %2015 = vmatprep.subr.mxu0 0.0
        %2016 = vmatpush2.xpose.msra.mxu0 0.0
        %2017 = vmatprep.subr.mxu0 0.0
        %2018 = vmatpush2.xpose.msra.mxu0 0.0
        %2019 = vmatprep.subr.mxu0 0.0
        %2020 = vmatpush2.xpose.msra.mxu0 0.0
        %2021 = vmatprep.subr.mxu0 0.0
        %2022 = vmatpush2.xpose.msra.mxu0 0.0
        %2023 = vmatprep.subr.mxu0 0.0
        %2024 = vmatpush2.xpose.msra.mxu0 0.0
        %2025 = vmatprep.subr.mxu0 0.0
        %2026 = vmatpush2.xpose.msra.mxu0 0.0
        %2027 = vmatprep.subr.mxu0 0.0
        %2028 = vmatpush2.xpose.msra.mxu0 0.0
        %2029 = vmatprep.subr.mxu0 0.0
        %2030 = vmatpush2.xpose.msra.mxu0 0.0
        %2031 = vmatprep.subr.mxu0 0.0
        %2032 = vmatpush2.xpose.msra.mxu0 0.0
        %2033 = vmatprep.subr.mxu0 0.0
        %2034 = vmatpush2.xpose.msra.mxu0 0.0
        %2035 = vmatprep.subr.mxu0 0.0
        %2036 = vmatpush2.xpose.msra.mxu0 0.0
        %2037 = vmatprep.subr.mxu0 0.0
        %2038 = vmatpush2.xpose.msra.mxu0 0.0
        %2039 = vmatprep.mubr.f32.mxu0 0.0
        %2040 = vmatmul.mubr.f32.gmra.mxu0 %v1971
        %v2041 = vpop.f32.mrf.mxu0
        %v2042 = vadd.f32 0.0, %v2041
        %v2043 = vpop.f32.mrf.mxu0
        %2044 = vdwg.mxu0
        %v2045 = vmul.f32 %v2042, 0.35355338
        %v2046 = vsel %vm1120, %v2045, -inf
        %2047 = vmax.xlane.f32.xlu0 %v2046
        %v2048 = vpop.xlane.xlu0 %2047
        %v2049 = vsub.f32 %v2045, %v2048
        %v2050 = vmul.f32 %v2049, 1.442695
        %v2051 = vpow.pop %v2050
        %v2052 = vsel %vm1120, %v2051, 0.0
        %2053 = vadd.xlane.f32.xlu0 %v2052
        %v2054 = vpop.xlane.xlu0 %2053
        %v2055 = vrcp.pop %v2054
        %v2056 = vmul.f32 %v2051, %v2055
        %2057 = vrot.lane.b32.xlu0 %v1117, 88
        %v2058 = vpop.permute.xlu0 %2057
        %v2061 = vsel %vm1120, %v2056, 0
        %2063 = vmatprep.subr.mxu0 0.0
        %2064 = vmatpush1.msra.mxu0 0.0
        %2065 = vmatprep.subr.mxu0 0.0
        %2066 = vmatpush1.msra.mxu0 0.0
        %2067 = vmatprep.subr.mxu0 0.0
        %2068 = vmatpush1.msra.mxu0 0.0
        %2069 = vmatprep.subr.mxu0 0.0
        %2070 = vmatpush1.msra.mxu0 0.0
        %2071 = vmatprep.subr.mxu0 0.0
        %2072 = vmatpush1.msra.mxu0 0.0
        %2073 = vmatprep.subr.mxu0 0.0
        %2074 = vmatpush1.msra.mxu0 0.0
        %2075 = vmatprep.subr.mxu0 0.0
        %2076 = vmatpush1.msra.mxu0 0.0
        %2077 = vmatprep.subr.mxu0 0.0
        %2078 = vmatpush1.msra.mxu0 0.0
        %2079 = vmatprep.subr.mxu0 0.0
        %2080 = vmatpush1.msra.mxu0 0.0
        %2081 = vmatprep.subr.mxu0 0.0
        %2082 = vmatpush1.msra.mxu0 0.0
        %2083 = vmatprep.subr.mxu0 0.0
        %2084 = vmatpush1.msra.mxu0 0.0
        %2085 = vmatprep.subr.mxu0 0.0
        %2086 = vmatpush1.msra.mxu0 0.0
        %2087 = vmatprep.subr.mxu0 0.0
        %2088 = vmatpush1.msra.mxu0 0.0
        %2089 = vmatprep.subr.mxu0 0.0
        %2090 = vmatpush1.msra.mxu0 0.0
        %2091 = vmatprep.subr.mxu0 0.0
        %2092 = vmatpush1.msra.mxu0 0.0
        %2093 = vmatprep.subr.mxu0 0.0
        %2094 = vmatpush1.msra.mxu0 %v2058
        %2095 = vmatprep.subr.mxu0 0.0
        %2096 = vmatpush2.msra.mxu0 0.0
        %2097 = vmatprep.subr.mxu0 0.0
        %2098 = vmatpush2.msra.mxu0 0.0
        %2099 = vmatprep.subr.mxu0 0.0
        %2100 = vmatpush2.msra.mxu0 0.0
        %2101 = vmatprep.subr.mxu0 0.0
        %2102 = vmatpush2.msra.mxu0 0.0
        %2103 = vmatprep.subr.mxu0 0.0
        %2104 = vmatpush2.msra.mxu0 0.0
        %2105 = vmatprep.subr.mxu0 0.0
        %2106 = vmatpush2.msra.mxu0 0.0
        %2107 = vmatprep.subr.mxu0 0.0
        %2108 = vmatpush2.msra.mxu0 0.0
        %2109 = vmatprep.subr.mxu0 0.0
        %2110 = vmatpush2.msra.mxu0 0.0
        %2111 = vmatprep.subr.mxu0 0.0
        %2112 = vmatpush2.msra.mxu0 0.0
        %2113 = vmatprep.subr.mxu0 0.0
        %2114 = vmatpush2.msra.mxu0 0.0
        %2115 = vmatprep.subr.mxu0 0.0
        %2116 = vmatpush2.msra.mxu0 0.0
        %2117 = vmatprep.subr.mxu0 0.0
        %2118 = vmatpush2.msra.mxu0 0.0
        %2119 = vmatprep.subr.mxu0 0.0
        %2120 = vmatpush2.msra.mxu0 0.0
        %2121 = vmatprep.subr.mxu0 0.0
        %2122 = vmatpush2.msra.mxu0 0.0
        %2123 = vmatprep.subr.mxu0 0.0
        %2124 = vmatpush2.msra.mxu0 0.0
        %2125 = vmatprep.subr.mxu0 0.0
        %2126 = vmatpush2.msra.mxu0 0.0
        %2127 = vmatprep.mubr.f32.mxu0 0.0
        %2128 = vmatmul.mubr.f32.gmra.mxu0 %v2061
        %v2129 = vpop.f32.mrf.mxu0
        %v2130 = vadd.f32 0.0, %v2129
        %v2131 = vpop.f32.mrf.mxu0
        %2132 = vdwg.mxu0
        %2134 = vrot.lane.b32.xlu0 %v2130, 8
        %v2135 = vpop.permute.xlu0 %2134
        %2137 = vst.msk [vmem:[#allocation3 + $0x8] sm:$0xff] %vm1456, %v2135
        %2138 = vrot.lane.b32.xlu0 %v1025, 112
        %v2139 = vpop.permute.xlu0 %2138
        %2140 = vrot.lane.b32.xlu0 %v1117, 112
        %v2141 = vpop.permute.xlu0 %2140
        %v2142 = vsel %vm1120, %v2139, 0
        %v2144 = vsel %vm1120, %v2141, 0
        %2146 = vmatprep.subr.mxu0 0.0
        %2147 = vmatpush1.xpose.msra.mxu0 0.0
        %2148 = vmatprep.subr.mxu0 0.0
        %2149 = vmatpush1.xpose.msra.mxu0 0.0
        %2150 = vmatprep.subr.mxu0 0.0
        %2151 = vmatpush1.xpose.msra.mxu0 0.0
        %2152 = vmatprep.subr.mxu0 0.0
        %2153 = vmatpush1.xpose.msra.mxu0 0.0
        %2154 = vmatprep.subr.mxu0 0.0
        %2155 = vmatpush1.xpose.msra.mxu0 0.0
        %2156 = vmatprep.subr.mxu0 0.0
        %2157 = vmatpush1.xpose.msra.mxu0 0.0
        %2158 = vmatprep.subr.mxu0 0.0
        %2159 = vmatpush1.xpose.msra.mxu0 0.0
        %2160 = vmatprep.subr.mxu0 0.0
        %2161 = vmatpush1.xpose.msra.mxu0 0.0
        %2162 = vmatprep.subr.mxu0 0.0
        %2163 = vmatpush1.xpose.msra.mxu0 0.0
        %2164 = vmatprep.subr.mxu0 0.0
        %2165 = vmatpush1.xpose.msra.mxu0 0.0
        %2166 = vmatprep.subr.mxu0 0.0
        %2167 = vmatpush1.xpose.msra.mxu0 0.0
        %2168 = vmatprep.subr.mxu0 0.0
        %2169 = vmatpush1.xpose.msra.mxu0 0.0
        %2170 = vmatprep.subr.mxu0 0.0
        %2171 = vmatpush1.xpose.msra.mxu0 0.0
        %2172 = vmatprep.subr.mxu0 0.0
        %2173 = vmatpush1.xpose.msra.mxu0 0.0
        %2174 = vmatprep.subr.mxu0 0.0
        %2175 = vmatpush1.xpose.msra.mxu0 0.0
        %2176 = vmatprep.subr.mxu0 0.0
        %2177 = vmatpush1.xpose.msra.mxu0 %v2144
        %2178 = vmatprep.subr.mxu0 0.0
        %2179 = vmatpush2.xpose.msra.mxu0 0.0
        %2180 = vmatprep.subr.mxu0 0.0
        %2181 = vmatpush2.xpose.msra.mxu0 0.0
        %2182 = vmatprep.subr.mxu0 0.0
        %2183 = vmatpush2.xpose.msra.mxu0 0.0
        %2184 = vmatprep.subr.mxu0 0.0
        %2185 = vmatpush2.xpose.msra.mxu0 0.0
        %2186 = vmatprep.subr.mxu0 0.0
        %2187 = vmatpush2.xpose.msra.mxu0 0.0
        %2188 = vmatprep.subr.mxu0 0.0
        %2189 = vmatpush2.xpose.msra.mxu0 0.0
        %2190 = vmatprep.subr.mxu0 0.0
        %2191 = vmatpush2.xpose.msra.mxu0 0.0
        %2192 = vmatprep.subr.mxu0 0.0
        %2193 = vmatpush2.xpose.msra.mxu0 0.0
        %2194 = vmatprep.subr.mxu0 0.0
        %2195 = vmatpush2.xpose.msra.mxu0 0.0
        %2196 = vmatprep.subr.mxu0 0.0
        %2197 = vmatpush2.xpose.msra.mxu0 0.0
        %2198 = vmatprep.subr.mxu0 0.0
        %2199 = vmatpush2.xpose.msra.mxu0 0.0
        %2200 = vmatprep.subr.mxu0 0.0
        %2201 = vmatpush2.xpose.msra.mxu0 0.0
        %2202 = vmatprep.subr.mxu0 0.0
        %2203 = vmatpush2.xpose.msra.mxu0 0.0
        %2204 = vmatprep.subr.mxu0 0.0
        %2205 = vmatpush2.xpose.msra.mxu0 0.0
        %2206 = vmatprep.subr.mxu0 0.0
        %2207 = vmatpush2.xpose.msra.mxu0 0.0
        %2208 = vmatprep.subr.mxu0 0.0
        %2209 = vmatpush2.xpose.msra.mxu0 0.0
        %2210 = vmatprep.mubr.f32.mxu0 0.0
        %2211 = vmatmul.mubr.f32.gmra.mxu0 %v2142
        %v2212 = vpop.f32.mrf.mxu0
        %v2213 = vadd.f32 0.0, %v2212
        %v2214 = vpop.f32.mrf.mxu0
        %2215 = vdwg.mxu0
        %v2216 = vmul.f32 %v2213, 0.35355338
        %v2217 = vsel %vm1120, %v2216, -inf
        %2218 = vmax.xlane.f32.xlu0 %v2217
        %v2219 = vpop.xlane.xlu0 %2218
        %v2220 = vsub.f32 %v2216, %v2219
        %v2221 = vmul.f32 %v2220, 1.442695
        %v2222 = vpow.pop %v2221
        %v2223 = vsel %vm1120, %v2222, 0.0
        %2224 = vadd.xlane.f32.xlu0 %v2223
        %v2225 = vpop.xlane.xlu0 %2224
        %v2226 = vrcp.pop %v2225
        %v2227 = vmul.f32 %v2222, %v2226
        %2228 = vrot.lane.b32.xlu0 %v1117, 80
        %v2229 = vpop.permute.xlu0 %2228
        %v2232 = vsel %vm1120, %v2227, 0
        %2234 = vmatprep.subr.mxu0 0.0
        %2235 = vmatpush1.msra.mxu0 0.0
        %2236 = vmatprep.subr.mxu0 0.0
        %2237 = vmatpush1.msra.mxu0 0.0
        %2238 = vmatprep.subr.mxu0 0.0
        %2239 = vmatpush1.msra.mxu0 0.0
        %2240 = vmatprep.subr.mxu0 0.0
        %2241 = vmatpush1.msra.mxu0 0.0
        %2242 = vmatprep.subr.mxu0 0.0
        %2243 = vmatpush1.msra.mxu0 0.0
        %2244 = vmatprep.subr.mxu0 0.0
        %2245 = vmatpush1.msra.mxu0 0.0
        %2246 = vmatprep.subr.mxu0 0.0
        %2247 = vmatpush1.msra.mxu0 0.0
        %2248 = vmatprep.subr.mxu0 0.0
        %2249 = vmatpush1.msra.mxu0 0.0
        %2250 = vmatprep.subr.mxu0 0.0
        %2251 = vmatpush1.msra.mxu0 0.0
        %2252 = vmatprep.subr.mxu0 0.0
        %2253 = vmatpush1.msra.mxu0 0.0
        %2254 = vmatprep.subr.mxu0 0.0
        %2255 = vmatpush1.msra.mxu0 0.0
        %2256 = vmatprep.subr.mxu0 0.0
        %2257 = vmatpush1.msra.mxu0 0.0
        %2258 = vmatprep.subr.mxu0 0.0
        %2259 = vmatpush1.msra.mxu0 0.0
        %2260 = vmatprep.subr.mxu0 0.0
        %2261 = vmatpush1.msra.mxu0 0.0
        %2262 = vmatprep.subr.mxu0 0.0
        %2263 = vmatpush1.msra.mxu0 0.0
        %2264 = vmatprep.subr.mxu0 0.0
        %2265 = vmatpush1.msra.mxu0 %v2229
        %2266 = vmatprep.subr.mxu0 0.0
        %2267 = vmatpush2.msra.mxu0 0.0
        %2268 = vmatprep.subr.mxu0 0.0
        %2269 = vmatpush2.msra.mxu0 0.0
        %2270 = vmatprep.subr.mxu0 0.0
        %2271 = vmatpush2.msra.mxu0 0.0
        %2272 = vmatprep.subr.mxu0 0.0
        %2273 = vmatpush2.msra.mxu0 0.0
        %2274 = vmatprep.subr.mxu0 0.0
        %2275 = vmatpush2.msra.mxu0 0.0
        %2276 = vmatprep.subr.mxu0 0.0
        %2277 = vmatpush2.msra.mxu0 0.0
        %2278 = vmatprep.subr.mxu0 0.0
        %2279 = vmatpush2.msra.mxu0 0.0
        %2280 = vmatprep.subr.mxu0 0.0
        %2281 = vmatpush2.msra.mxu0 0.0
        %2282 = vmatprep.subr.mxu0 0.0
        %2283 = vmatpush2.msra.mxu0 0.0
        %2284 = vmatprep.subr.mxu0 0.0
        %2285 = vmatpush2.msra.mxu0 0.0
        %2286 = vmatprep.subr.mxu0 0.0
        %2287 = vmatpush2.msra.mxu0 0.0
        %2288 = vmatprep.subr.mxu0 0.0
        %2289 = vmatpush2.msra.mxu0 0.0
        %2290 = vmatprep.subr.mxu0 0.0
        %2291 = vmatpush2.msra.mxu0 0.0
        %2292 = vmatprep.subr.mxu0 0.0
        %2293 = vmatpush2.msra.mxu0 0.0
        %2294 = vmatprep.subr.mxu0 0.0
        %2295 = vmatpush2.msra.mxu0 0.0
        %2296 = vmatprep.subr.mxu0 0.0
        %2297 = vmatpush2.msra.mxu0 0.0
        %2298 = vmatprep.mubr.f32.mxu0 0.0
        %2299 = vmatmul.mubr.f32.gmra.mxu0 %v2232
        %v2300 = vpop.f32.mrf.mxu0
        %v2301 = vadd.f32 0.0, %v2300
        %v2302 = vpop.f32.mrf.mxu0
        %2303 = vdwg.mxu0
        %2305 = vrot.lane.b32.xlu0 %v2301, 16
        %v2306 = vpop.permute.xlu0 %2305
        %2308 = vst.msk [vmem:[#allocation3 + $0x8] sm:$0xff] %vm1628, %v2306
        %2309 = vrot.lane.b32.xlu0 %v1025, 104
        %v2310 = vpop.permute.xlu0 %2309
        %2311 = vrot.lane.b32.xlu0 %v1117, 104
        %v2312 = vpop.permute.xlu0 %2311
        %v2313 = vsel %vm1120, %v2310, 0
        %v2315 = vsel %vm1120, %v2312, 0
        %2317 = vmatprep.subr.mxu0 0.0
        %2318 = vmatpush1.xpose.msra.mxu0 0.0
        %2319 = vmatprep.subr.mxu0 0.0
        %2320 = vmatpush1.xpose.msra.mxu0 0.0
        %2321 = vmatprep.subr.mxu0 0.0
        %2322 = vmatpush1.xpose.msra.mxu0 0.0
        %2323 = vmatprep.subr.mxu0 0.0
        %2324 = vmatpush1.xpose.msra.mxu0 0.0
        %2325 = vmatprep.subr.mxu0 0.0
        %2326 = vmatpush1.xpose.msra.mxu0 0.0
        %2327 = vmatprep.subr.mxu0 0.0
        %2328 = vmatpush1.xpose.msra.mxu0 0.0
        %2329 = vmatprep.subr.mxu0 0.0
        %2330 = vmatpush1.xpose.msra.mxu0 0.0
        %2331 = vmatprep.subr.mxu0 0.0
        %2332 = vmatpush1.xpose.msra.mxu0 0.0
        %2333 = vmatprep.subr.mxu0 0.0
        %2334 = vmatpush1.xpose.msra.mxu0 0.0
        %2335 = vmatprep.subr.mxu0 0.0
        %2336 = vmatpush1.xpose.msra.mxu0 0.0
        %2337 = vmatprep.subr.mxu0 0.0
        %2338 = vmatpush1.xpose.msra.mxu0 0.0
        %2339 = vmatprep.subr.mxu0 0.0
        %2340 = vmatpush1.xpose.msra.mxu0 0.0
        %2341 = vmatprep.subr.mxu0 0.0
        %2342 = vmatpush1.xpose.msra.mxu0 0.0
        %2343 = vmatprep.subr.mxu0 0.0
        %2344 = vmatpush1.xpose.msra.mxu0 0.0
        %2345 = vmatprep.subr.mxu0 0.0
        %2346 = vmatpush1.xpose.msra.mxu0 0.0
        %2347 = vmatprep.subr.mxu0 0.0
        %2348 = vmatpush1.xpose.msra.mxu0 %v2315
        %2349 = vmatprep.subr.mxu0 0.0
        %2350 = vmatpush2.xpose.msra.mxu0 0.0
        %2351 = vmatprep.subr.mxu0 0.0
        %2352 = vmatpush2.xpose.msra.mxu0 0.0
        %2353 = vmatprep.subr.mxu0 0.0
        %2354 = vmatpush2.xpose.msra.mxu0 0.0
        %2355 = vmatprep.subr.mxu0 0.0
        %2356 = vmatpush2.xpose.msra.mxu0 0.0
        %2357 = vmatprep.subr.mxu0 0.0
        %2358 = vmatpush2.xpose.msra.mxu0 0.0
        %2359 = vmatprep.subr.mxu0 0.0
        %2360 = vmatpush2.xpose.msra.mxu0 0.0
        %2361 = vmatprep.subr.mxu0 0.0
        %2362 = vmatpush2.xpose.msra.mxu0 0.0
        %2363 = vmatprep.subr.mxu0 0.0
        %2364 = vmatpush2.xpose.msra.mxu0 0.0
        %2365 = vmatprep.subr.mxu0 0.0
        %2366 = vmatpush2.xpose.msra.mxu0 0.0
        %2367 = vmatprep.subr.mxu0 0.0
        %2368 = vmatpush2.xpose.msra.mxu0 0.0
        %2369 = vmatprep.subr.mxu0 0.0
        %2370 = vmatpush2.xpose.msra.mxu0 0.0
        %2371 = vmatprep.subr.mxu0 0.0
        %2372 = vmatpush2.xpose.msra.mxu0 0.0
        %2373 = vmatprep.subr.mxu0 0.0
        %2374 = vmatpush2.xpose.msra.mxu0 0.0
        %2375 = vmatprep.subr.mxu0 0.0
        %2376 = vmatpush2.xpose.msra.mxu0 0.0
        %2377 = vmatprep.subr.mxu0 0.0
        %2378 = vmatpush2.xpose.msra.mxu0 0.0
        %2379 = vmatprep.subr.mxu0 0.0
        %2380 = vmatpush2.xpose.msra.mxu0 0.0
        %2381 = vmatprep.mubr.f32.mxu0 0.0
        %2382 = vmatmul.mubr.f32.gmra.mxu0 %v2313
        %v2383 = vpop.f32.mrf.mxu0
        %v2384 = vadd.f32 0.0, %v2383
        %v2385 = vpop.f32.mrf.mxu0
        %2386 = vdwg.mxu0
        %v2387 = vmul.f32 %v2384, 0.35355338
        %v2388 = vsel %vm1120, %v2387, -inf
        %2389 = vmax.xlane.f32.xlu0 %v2388
        %v2390 = vpop.xlane.xlu0 %2389
        %v2391 = vsub.f32 %v2387, %v2390
        %v2392 = vmul.f32 %v2391, 1.442695
        %v2393 = vpow.pop %v2392
        %v2394 = vsel %vm1120, %v2393, 0.0
        %2395 = vadd.xlane.f32.xlu0 %v2394
        %v2396 = vpop.xlane.xlu0 %2395
        %v2397 = vrcp.pop %v2396
        %v2398 = vmul.f32 %v2393, %v2397
        %2399 = vrot.lane.b32.xlu0 %v1117, 72
        %v2400 = vpop.permute.xlu0 %2399
        %v2403 = vsel %vm1120, %v2398, 0
        %2405 = vmatprep.subr.mxu0 0.0
        %2406 = vmatpush1.msra.mxu0 0.0
        %2407 = vmatprep.subr.mxu0 0.0
        %2408 = vmatpush1.msra.mxu0 0.0
        %2409 = vmatprep.subr.mxu0 0.0
        %2410 = vmatpush1.msra.mxu0 0.0
        %2411 = vmatprep.subr.mxu0 0.0
        %2412 = vmatpush1.msra.mxu0 0.0
        %2413 = vmatprep.subr.mxu0 0.0
        %2414 = vmatpush1.msra.mxu0 0.0
        %2415 = vmatprep.subr.mxu0 0.0
        %2416 = vmatpush1.msra.mxu0 0.0
        %2417 = vmatprep.subr.mxu0 0.0
        %2418 = vmatpush1.msra.mxu0 0.0
        %2419 = vmatprep.subr.mxu0 0.0
        %2420 = vmatpush1.msra.mxu0 0.0
        %2421 = vmatprep.subr.mxu0 0.0
        %2422 = vmatpush1.msra.mxu0 0.0
        %2423 = vmatprep.subr.mxu0 0.0
        %2424 = vmatpush1.msra.mxu0 0.0
        %2425 = vmatprep.subr.mxu0 0.0
        %2426 = vmatpush1.msra.mxu0 0.0
        %2427 = vmatprep.subr.mxu0 0.0
        %2428 = vmatpush1.msra.mxu0 0.0
        %2429 = vmatprep.subr.mxu0 0.0
        %2430 = vmatpush1.msra.mxu0 0.0
        %2431 = vmatprep.subr.mxu0 0.0
        %2432 = vmatpush1.msra.mxu0 0.0
        %2433 = vmatprep.subr.mxu0 0.0
        %2434 = vmatpush1.msra.mxu0 0.0
        %2435 = vmatprep.subr.mxu0 0.0
        %2436 = vmatpush1.msra.mxu0 %v2400
        %2437 = vmatprep.subr.mxu0 0.0
        %2438 = vmatpush2.msra.mxu0 0.0
        %2439 = vmatprep.subr.mxu0 0.0
        %2440 = vmatpush2.msra.mxu0 0.0
        %2441 = vmatprep.subr.mxu0 0.0
        %2442 = vmatpush2.msra.mxu0 0.0
        %2443 = vmatprep.subr.mxu0 0.0
        %2444 = vmatpush2.msra.mxu0 0.0
        %2445 = vmatprep.subr.mxu0 0.0
        %2446 = vmatpush2.msra.mxu0 0.0
        %2447 = vmatprep.subr.mxu0 0.0
        %2448 = vmatpush2.msra.mxu0 0.0
        %2449 = vmatprep.subr.mxu0 0.0
        %2450 = vmatpush2.msra.mxu0 0.0
        %2451 = vmatprep.subr.mxu0 0.0
        %2452 = vmatpush2.msra.mxu0 0.0
        %2453 = vmatprep.subr.mxu0 0.0
        %2454 = vmatpush2.msra.mxu0 0.0
        %2455 = vmatprep.subr.mxu0 0.0
        %2456 = vmatpush2.msra.mxu0 0.0
        %2457 = vmatprep.subr.mxu0 0.0
        %2458 = vmatpush2.msra.mxu0 0.0
        %2459 = vmatprep.subr.mxu0 0.0
        %2460 = vmatpush2.msra.mxu0 0.0
        %2461 = vmatprep.subr.mxu0 0.0
        %2462 = vmatpush2.msra.mxu0 0.0
        %2463 = vmatprep.subr.mxu0 0.0
        %2464 = vmatpush2.msra.mxu0 0.0
        %2465 = vmatprep.subr.mxu0 0.0
        %2466 = vmatpush2.msra.mxu0 0.0
        %2467 = vmatprep.subr.mxu0 0.0
        %2468 = vmatpush2.msra.mxu0 0.0
        %2469 = vmatprep.mubr.f32.mxu0 0.0
        %2470 = vmatmul.mubr.f32.gmra.mxu0 %v2403
        %v2471 = vpop.f32.mrf.mxu0
        %v2472 = vadd.f32 0.0, %v2471
        %v2473 = vpop.f32.mrf.mxu0
        %2474 = vdwg.mxu0
        %2476 = vrot.lane.b32.xlu0 %v2472, 24
        %v2477 = vpop.permute.xlu0 %2476
        %2479 = vst.msk [vmem:[#allocation3 + $0x8] sm:$0xff] %vm1800, %v2477
        %v2480 = vld [vmem:[#allocation3] sm:$0xff]
        %v2481 = vld [vmem:[#allocation3 + $0x8] sm:$0xff]
        %v2482 = vld [vmem:[%s739] sm:$0xff]
        %v2483 = vld [vmem:[%s739 + $0x8] sm:$0xff]
        %v2484 = vld [vmem:[%s739 + $0x10] sm:$0xff]
        %v2485 = vld [vmem:[%s739 + $0x18] sm:$0xff]
        %v2486 = vld [vmem:[%s866] sm:$0x1]
        %v2488 = vlaneseq
        %v2489 = vshrl.u32 %v2488, 7
        %v2490 = vsub.s32 0, %v2489
        %v2491 = vrot.slane %v2486, %v2490
        %v2494 = vsel %vm892, %v2480, 0
        %v2497 = vsel %vm892, %v2481, 0
        %2499 = vmatprep.subr.mxu0 0.0
        %2500 = vmatpush1.msra.mxu0 0.0
        %2501 = vmatprep.subr.mxu0 0.0
        %2502 = vmatpush1.msra.mxu0 0.0
        %2503 = vmatprep.subr.mxu0 0.0
        %2504 = vmatpush1.msra.mxu0 0.0
        %2505 = vmatprep.subr.mxu0 0.0
        %2506 = vmatpush1.msra.mxu0 0.0
        %2507 = vmatprep.subr.mxu0 0.0
        %2508 = vmatpush1.msra.mxu0 0.0
        %2509 = vmatprep.subr.mxu0 0.0
        %2510 = vmatpush1.msra.mxu0 0.0
        %2511 = vmatprep.subr.mxu0 0.0
        %2512 = vmatpush1.msra.mxu0 0.0
        %2513 = vmatprep.subr.mxu0 0.0
        %2514 = vmatpush1.msra.mxu0 0.0
        %2515 = vmatprep.subr.mxu0 0.0
        %2516 = vmatpush1.msra.mxu0 0.0
        %2517 = vmatprep.subr.mxu0 0.0
        %2518 = vmatpush1.msra.mxu0 0.0
        %2519 = vmatprep.subr.mxu0 0.0
        %2520 = vmatpush1.msra.mxu0 0.0
        %2521 = vmatprep.subr.mxu0 0.0
        %2522 = vmatpush1.msra.mxu0 0.0
        %2523 = vmatprep.subr.mxu0 0.0
        %2524 = vmatpush1.msra.mxu0 %v2485
        %2525 = vmatprep.subr.mxu0 0.0
        %2526 = vmatpush1.msra.mxu0 %v2484
        %2527 = vmatprep.subr.mxu0 0.0
        %2528 = vmatpush1.msra.mxu0 %v2483
        %2529 = vmatprep.subr.mxu0 0.0
        %2530 = vmatpush1.msra.mxu0 %v2482
        %2531 = vmatprep.subr.mxu0 0.0
        %2532 = vmatpush2.msra.mxu0 0.0
        %2533 = vmatprep.subr.mxu0 0.0
        %2534 = vmatpush2.msra.mxu0 0.0
        %2535 = vmatprep.subr.mxu0 0.0
        %2536 = vmatpush2.msra.mxu0 0.0
        %2537 = vmatprep.subr.mxu0 0.0
        %2538 = vmatpush2.msra.mxu0 0.0
        %2539 = vmatprep.subr.mxu0 0.0
        %2540 = vmatpush2.msra.mxu0 0.0
        %2541 = vmatprep.subr.mxu0 0.0
        %2542 = vmatpush2.msra.mxu0 0.0
        %2543 = vmatprep.subr.mxu0 0.0
        %2544 = vmatpush2.msra.mxu0 0.0
        %2545 = vmatprep.subr.mxu0 0.0
        %2546 = vmatpush2.msra.mxu0 0.0
        %2547 = vmatprep.subr.mxu0 0.0
        %2548 = vmatpush2.msra.mxu0 0.0
        %2549 = vmatprep.subr.mxu0 0.0
        %2550 = vmatpush2.msra.mxu0 0.0
        %2551 = vmatprep.subr.mxu0 0.0
        %2552 = vmatpush2.msra.mxu0 0.0
        %2553 = vmatprep.subr.mxu0 0.0
        %2554 = vmatpush2.msra.mxu0 0.0
        %2555 = vmatprep.subr.mxu0 0.0
        %2556 = vmatpush2.msra.mxu0 0.0
        %2557 = vmatprep.subr.mxu0 0.0
        %2558 = vmatpush2.msra.mxu0 0.0
        %2559 = vmatprep.subr.mxu0 0.0
        %2560 = vmatpush2.msra.mxu0 0.0
        %2561 = vmatprep.subr.mxu0 0.0
        %2562 = vmatpush2.msra.mxu0 0.0
        %2563 = vmatprep.mubr.f32.mxu0 0.0
        %2564 = vmatmul.mubr.f32.gmra.mxu0 %v2494
        %v2565 = vpop.f32.mrf.mxu0
        %v2566 = vadd.f32 %v2491, %v2565
        %v2567 = vpop.f32.mrf.mxu0
        %2568 = vmatprep.mubr.f32.mxu0 0.0
        %2569 = vmatmul.mubr.f32.gmra.mxu0 %v2497
        %v2570 = vpop.f32.mrf.mxu0
        %v2571 = vadd.f32 %v2491, %v2570
        %v2572 = vpop.f32.mrf.mxu0
        %2573 = vdwg.mxu0
        %v2574 = vadd.f32 %v934, %v2566
        %v2575 = vadd.f32 %v935, %v2571
        %v2576 = vld [vmem:[%s869] sm:$0x1]
        %v2577 = vld [vmem:[%s872] sm:$0x1]
        %v2578 = vsel %vm892, %v2574, 0.0
        %2579 = vadd.xlane.f32.xlu0 %v2578
        %v2580 = vpop.xlane.xlu0 %2579
        %v2581 = vsel %vm892, %v2575, 0.0
        %2582 = vadd.xlane.f32.xlu0 %v2581
        %v2583 = vpop.xlane.xlu0 %2582
        %v2584 = vmul.f32 %v2580, %v899
        %v2585 = vmul.f32 %v2583, %v899
        %v2586 = vsub.f32 %v2574, %v2584
        %v2587 = vsub.f32 %v2575, %v2585
        %v2588 = vmul.f32 %v2586, %v2586
        %v2589 = vmul.f32 %v2587, %v2587
        %v2590 = vsel %vm892, %v2588, 0.0
        %2591 = vadd.xlane.f32.xlu0 %v2590
        %v2592 = vpop.xlane.xlu0 %2591
        %v2593 = vsel %vm892, %v2589, 0.0
        %2594 = vadd.xlane.f32.xlu0 %v2593
        %v2595 = vpop.xlane.xlu0 %2594
        %v2596 = vmul.f32 %v2592, %v899
        %v2597 = vmul.f32 %v2595, %v899
        %v2598 = vadd.f32 %v2596, 1e-08
        %v2599 = vadd.f32 %v2597, 1e-08
        %v2600 = vrsqrt.pop %v2598
        %v2601 = vrsqrt.pop %v2599
        %v2602 = vmul.f32 %v2586, %v2600
        %v2603 = vmul.f32 %v2587, %v2601
        %v2605 = vlaneseq
        %v2606 = vshrl.u32 %v2605, 7
        %v2607 = vsub.s32 0, %v2606
        %v2608 = vrot.slane %v2576, %v2607
        %v2610 = vmul.f32 %v2602, %v2608
        %v2611 = vmul.f32 %v2603, %v2608
        %v2613 = vlaneseq
        %v2614 = vshrl.u32 %v2613, 7
        %v2615 = vsub.s32 0, %v2614
        %v2616 = vrot.slane %v2577, %v2615
        %v2618 = vadd.f32 %v2610, %v2616
        %v2619 = vadd.f32 %v2611, %v2616
        %v2620 = vld [vmem:[%s748] sm:$0xff]
        %v2621 = vld [vmem:[%s748 + $0x8] sm:$0xff]
        %v2622 = vld [vmem:[%s748 + $0x10] sm:$0xff]
        %v2623 = vld [vmem:[%s748 + $0x18] sm:$0xff]
        %v2624 = vld [vmem:[%s875] sm:$0x1]
        %v2626 = vlaneseq
        %v2627 = vshrl.u32 %v2626, 7
        %v2628 = vsub.s32 0, %v2627
        %v2629 = vrot.slane %v2624, %v2628
        %v2632 = vsel %vm892, %v2618, 0
        %v2635 = vsel %vm892, %v2619, 0
        %2637 = vmatprep.subr.mxu0 0.0
        %2638 = vmatpush1.msra.mxu0 0.0
        %2639 = vmatprep.subr.mxu0 0.0
        %2640 = vmatpush1.msra.mxu0 0.0
        %2641 = vmatprep.subr.mxu0 0.0
        %2642 = vmatpush1.msra.mxu0 0.0
        %2643 = vmatprep.subr.mxu0 0.0
        %2644 = vmatpush1.msra.mxu0 0.0
        %2645 = vmatprep.subr.mxu0 0.0
        %2646 = vmatpush1.msra.mxu0 0.0
        %2647 = vmatprep.subr.mxu0 0.0
        %2648 = vmatpush1.msra.mxu0 0.0
        %2649 = vmatprep.subr.mxu0 0.0
        %2650 = vmatpush1.msra.mxu0 0.0
        %2651 = vmatprep.subr.mxu0 0.0
        %2652 = vmatpush1.msra.mxu0 0.0
        %2653 = vmatprep.subr.mxu0 0.0
        %2654 = vmatpush1.msra.mxu0 0.0
        %2655 = vmatprep.subr.mxu0 0.0
        %2656 = vmatpush1.msra.mxu0 0.0
        %2657 = vmatprep.subr.mxu0 0.0
        %2658 = vmatpush1.msra.mxu0 0.0
        %2659 = vmatprep.subr.mxu0 0.0
        %2660 = vmatpush1.msra.mxu0 0.0
        %2661 = vmatprep.subr.mxu0 0.0
        %2662 = vmatpush1.msra.mxu0 %v2623
        %2663 = vmatprep.subr.mxu0 0.0
        %2664 = vmatpush1.msra.mxu0 %v2622
        %2665 = vmatprep.subr.mxu0 0.0
        %2666 = vmatpush1.msra.mxu0 %v2621
        %2667 = vmatprep.subr.mxu0 0.0
        %2668 = vmatpush1.msra.mxu0 %v2620
        %2669 = vmatprep.subr.mxu0 0.0
        %2670 = vmatpush2.msra.mxu0 0.0
        %2671 = vmatprep.subr.mxu0 0.0
        %2672 = vmatpush2.msra.mxu0 0.0
        %2673 = vmatprep.subr.mxu0 0.0
        %2674 = vmatpush2.msra.mxu0 0.0
        %2675 = vmatprep.subr.mxu0 0.0
        %2676 = vmatpush2.msra.mxu0 0.0
        %2677 = vmatprep.subr.mxu0 0.0
        %2678 = vmatpush2.msra.mxu0 0.0
        %2679 = vmatprep.subr.mxu0 0.0
        %2680 = vmatpush2.msra.mxu0 0.0
        %2681 = vmatprep.subr.mxu0 0.0
        %2682 = vmatpush2.msra.mxu0 0.0
        %2683 = vmatprep.subr.mxu0 0.0
        %2684 = vmatpush2.msra.mxu0 0.0
        %2685 = vmatprep.subr.mxu0 0.0
        %2686 = vmatpush2.msra.mxu0 0.0
        %2687 = vmatprep.subr.mxu0 0.0
        %2688 = vmatpush2.msra.mxu0 0.0
        %2689 = vmatprep.subr.mxu0 0.0
        %2690 = vmatpush2.msra.mxu0 0.0
        %2691 = vmatprep.subr.mxu0 0.0
        %2692 = vmatpush2.msra.mxu0 0.0
        %2693 = vmatprep.subr.mxu0 0.0
        %2694 = vmatpush2.msra.mxu0 0.0
        %2695 = vmatprep.subr.mxu0 0.0
        %2696 = vmatpush2.msra.mxu0 0.0
        %2697 = vmatprep.subr.mxu0 0.0
        %2698 = vmatpush2.msra.mxu0 0.0
        %2699 = vmatprep.subr.mxu0 0.0
        %2700 = vmatpush2.msra.mxu0 0.0
        %2701 = vmatprep.mubr.f32.mxu0 0.0
        %2702 = vmatmul.mubr.f32.gmra.mxu0 %v2632
        %v2703 = vpop.f32.mrf.mxu0
        %v2704 = vadd.f32 %v2629, %v2703
        %v2705 = vpop.f32.mrf.mxu0
        %2706 = vmatprep.mubr.f32.mxu0 0.0
        %2707 = vmatmul.mubr.f32.gmra.mxu0 %v2635
        %v2708 = vpop.f32.mrf.mxu0
        %v2709 = vadd.f32 %v2629, %v2708
        %v2710 = vpop.f32.mrf.mxu0
        %2711 = vdwg.mxu0
        %v2712 = vmax.f32 %v2704, 0.0
        %v2713 = vmax.f32 %v2709, 0.0
        %v2714 = vld [vmem:[%s757] sm:$0xff]
        %v2715 = vld [vmem:[%s757 + $0x8] sm:$0xff]
        %v2716 = vld [vmem:[%s757 + $0x10] sm:$0xff]
        %v2717 = vld [vmem:[%s757 + $0x18] sm:$0xff]
        %v2718 = vld [vmem:[%s878] sm:$0x1]
        %v2720 = vlaneseq
        %v2721 = vshrl.u32 %v2720, 7
        %v2722 = vsub.s32 0, %v2721
        %v2723 = vrot.slane %v2718, %v2722
        %v2726 = vsel %vm892, %v2712, 0
        %v2729 = vsel %vm892, %v2713, 0
        %2731 = vmatprep.subr.mxu0 0.0
        %2732 = vmatpush1.msra.mxu0 0.0
        %2733 = vmatprep.subr.mxu0 0.0
        %2734 = vmatpush1.msra.mxu0 0.0
        %2735 = vmatprep.subr.mxu0 0.0
        %2736 = vmatpush1.msra.mxu0 0.0
        %2737 = vmatprep.subr.mxu0 0.0
        %2738 = vmatpush1.msra.mxu0 0.0
        %2739 = vmatprep.subr.mxu0 0.0
        %2740 = vmatpush1.msra.mxu0 0.0
        %2741 = vmatprep.subr.mxu0 0.0
        %2742 = vmatpush1.msra.mxu0 0.0
        %2743 = vmatprep.subr.mxu0 0.0
        %2744 = vmatpush1.msra.mxu0 0.0
        %2745 = vmatprep.subr.mxu0 0.0
        %2746 = vmatpush1.msra.mxu0 0.0
        %2747 = vmatprep.subr.mxu0 0.0
        %2748 = vmatpush1.msra.mxu0 0.0
        %2749 = vmatprep.subr.mxu0 0.0
        %2750 = vmatpush1.msra.mxu0 0.0
        %2751 = vmatprep.subr.mxu0 0.0
        %2752 = vmatpush1.msra.mxu0 0.0
        %2753 = vmatprep.subr.mxu0 0.0
        %2754 = vmatpush1.msra.mxu0 0.0
        %2755 = vmatprep.subr.mxu0 0.0
        %2756 = vmatpush1.msra.mxu0 %v2717
        %2757 = vmatprep.subr.mxu0 0.0
        %2758 = vmatpush1.msra.mxu0 %v2716
        %2759 = vmatprep.subr.mxu0 0.0
        %2760 = vmatpush1.msra.mxu0 %v2715
        %2761 = vmatprep.subr.mxu0 0.0
        %2762 = vmatpush1.msra.mxu0 %v2714
        %2763 = vmatprep.subr.mxu0 0.0
        %2764 = vmatpush2.msra.mxu0 0.0
        %2765 = vmatprep.subr.mxu0 0.0
        %2766 = vmatpush2.msra.mxu0 0.0
        %2767 = vmatprep.subr.mxu0 0.0
        %2768 = vmatpush2.msra.mxu0 0.0
        %2769 = vmatprep.subr.mxu0 0.0
        %2770 = vmatpush2.msra.mxu0 0.0
        %2771 = vmatprep.subr.mxu0 0.0
        %2772 = vmatpush2.msra.mxu0 0.0
        %2773 = vmatprep.subr.mxu0 0.0
        %2774 = vmatpush2.msra.mxu0 0.0
        %2775 = vmatprep.subr.mxu0 0.0
        %2776 = vmatpush2.msra.mxu0 0.0
        %2777 = vmatprep.subr.mxu0 0.0
        %2778 = vmatpush2.msra.mxu0 0.0
        %2779 = vmatprep.subr.mxu0 0.0
        %2780 = vmatpush2.msra.mxu0 0.0
        %2781 = vmatprep.subr.mxu0 0.0
        %2782 = vmatpush2.msra.mxu0 0.0
        %2783 = vmatprep.subr.mxu0 0.0
        %2784 = vmatpush2.msra.mxu0 0.0
        %2785 = vmatprep.subr.mxu0 0.0
        %2786 = vmatpush2.msra.mxu0 0.0
        %2787 = vmatprep.subr.mxu0 0.0
        %2788 = vmatpush2.msra.mxu0 0.0
        %2789 = vmatprep.subr.mxu0 0.0
        %2790 = vmatpush2.msra.mxu0 0.0
        %2791 = vmatprep.subr.mxu0 0.0
        %2792 = vmatpush2.msra.mxu0 0.0
        %2793 = vmatprep.subr.mxu0 0.0
        %2794 = vmatpush2.msra.mxu0 0.0
        %2795 = vmatprep.mubr.f32.mxu0 0.0
        %2796 = vmatmul.mubr.f32.gmra.mxu0 %v2726
        %v2797 = vpop.f32.mrf.mxu0
        %v2798 = vadd.f32 %v2723, %v2797
        %v2799 = vpop.f32.mrf.mxu0
        %2800 = vmatprep.mubr.f32.mxu0 0.0
        %2801 = vmatmul.mubr.f32.gmra.mxu0 %v2729
        %v2802 = vpop.f32.mrf.mxu0
        %v2803 = vadd.f32 %v2723, %v2802
        %v2804 = vpop.f32.mrf.mxu0
        %2805 = vdwg.mxu0
        %v2806 = vadd.f32 %v2798, %v2618
        %v2807 = vadd.f32 %v2803, %v2619
        %v2808 = vld [vmem:[%s1] sm:$0xff]
        %v2809 = vld [vmem:[%s1 + $0x8] sm:$0xff]
        %2811 = vset.pattern.permute.xlu0 0
        %2812 = vperm.xlu0 %2811, %v2808
        %v2813 = vpop.permute.xlu0 %2812
        %2816 = vset.pattern.permute.xlu0 0
        %2817 = vperm.xlu0 %2816, %v2809
        %v2818 = vpop.permute.xlu0 %2817
        %v2820 = vmul.f32 %v2806, %v2813
        %v2821 = vmul.f32 %v2807, %v2818
        %2822 = vst.msk [vmem:[#allocation2] sm:$0xff] %vm892, %v2820
        %2823 = vst.msk [vmem:[#allocation2 + $0x8] sm:$0xff] %vm892, %v2821
        %p2824 = scmp.eq.s32.totalorder %s32, 1
        // Predicated region
        $region125: #{tpu_custom_call.1} parent=91 // pred_check
          %p2825 = pneg %p2824
        $region126: #{tpu_custom_call.1} parent=91 // pred_check_branch
          %2827 = sbr.rel (%p2825) target = $region128
        $region127: #{tpu_custom_call.1} parent=91 // pred_region
          %v2828 = vld [vmem:[#allocation4] sm:$0x1]
          %v2829 = vld [vmem:[#allocation7] sm:$0x1]
          %v2830 = vsel %vm892, %v2820, 0.0
          %2831 = vadd.xlane.f32.xlu0 %v2830
          %v2832 = vpop.xlane.xlu0 %2831
          %v2833 = vsel %vm892, %v2821, 0.0
          %2834 = vadd.xlane.f32.xlu0 %v2833
          %v2835 = vpop.xlane.xlu0 %2834
          %v2836 = vmul.f32 %v2832, %v899
          %v2837 = vmul.f32 %v2835, %v899
          %v2838 = vsub.f32 %v2820, %v2836
          %v2839 = vsub.f32 %v2821, %v2837
          %v2840 = vmul.f32 %v2838, %v2838
          %v2841 = vmul.f32 %v2839, %v2839
          %v2842 = vsel %vm892, %v2840, 0.0
          %2843 = vadd.xlane.f32.xlu0 %v2842
          %v2844 = vpop.xlane.xlu0 %2843
          %v2845 = vsel %vm892, %v2841, 0.0
          %2846 = vadd.xlane.f32.xlu0 %v2845
          %v2847 = vpop.xlane.xlu0 %2846
          %v2848 = vmul.f32 %v2844, %v899
          %v2849 = vmul.f32 %v2847, %v899
          %v2850 = vadd.f32 %v2848, 1e-08
          %v2851 = vadd.f32 %v2849, 1e-08
          %v2852 = vrsqrt.pop %v2850
          %v2853 = vrsqrt.pop %v2851
          %v2854 = vmul.f32 %v2838, %v2852
          %v2855 = vmul.f32 %v2839, %v2853
          %v2857 = vlaneseq
          %v2858 = vshrl.u32 %v2857, 7
          %v2859 = vsub.s32 0, %v2858
          %v2860 = vrot.slane %v2828, %v2859
          %v2862 = vmul.f32 %v2854, %v2860
          %v2863 = vmul.f32 %v2855, %v2860
          %v2865 = vlaneseq
          %v2866 = vshrl.u32 %v2865, 7
          %v2867 = vsub.s32 0, %v2866
          %v2868 = vrot.slane %v2829, %v2867
          %v2870 = vadd.f32 %v2862, %v2868
          %v2871 = vadd.f32 %v2863, %v2868
          %2872 = vst.msk [vmem:[#allocation14] sm:$0xff] %vm892, %v2870
          %2873 = vst.msk [vmem:[#allocation14 + $0x8] sm:$0xff] %vm892, %v2871
        $region128: #{tpu_custom_call.1} parent=91 // pred_fallthru
          _
        // Predicated region
        $region129: #{tpu_custom_call.1} parent=91 // pred_check
          %p2874 = pneg %p493
        $region130: #{tpu_custom_call.1} parent=91 // pred_check_branch
          %2876 = sbr.rel (%p2874) target = $region132
        $region131: #{tpu_custom_call.1} parent=91 // pred_region
          %s2878 = ssub.s32 256, 256
          %2879 = vsyncadd [#allocation6], %s2878
          %s2880 = sshll.u32 [#allocation14], 4
          %s2881 = int_to_ptr.vmem [resolvable:$true] %s2880
          %2886 = dma.vmem_to_hbm [thread:$0]  %s2881, 256, %s18, [#allocation6], 128, 128, 8
        $region132: #{tpu_custom_call.1} parent=91 // pred_fallthru
          _
        // Predicated region
        $region133: #{tpu_custom_call.1} parent=91 // pred_check
          %p2887 = pneg %p493
        $region134: #{tpu_custom_call.1} parent=91 // pred_check_branch
          %2889 = sbr.rel (%p2887) target = $region136
        $region135: #{tpu_custom_call.1} parent=91 // pred_region
          %2890 = dma.done [#allocation6], 256
        $region136: #{tpu_custom_call.1} parent=91 // pred_fallthru
          _
      $region92: #{tpu_custom_call.1} parent=5 // pred_fallthru
        _
      %p2891 = scmp.le.s32.totalorder 2, %s27
      // Predicated region
      $region137: #{tpu_custom_call.1} parent=5 // pred_check
        %p2892 = pneg %p2891
      $region138: #{tpu_custom_call.1} parent=5 // pred_check_branch
        %2894 = sbr.rel (%p2892) target = $region140
      $region139: #{tpu_custom_call.1} parent=5 // pred_region
        %s2895 = ssub.s32 %s27, 2
      $region140: #{tpu_custom_call.1} parent=5 // pred_fallthru
        _
    $region6: #{tpu_custom_call.1} parent=1 // loop_footer
      %s31 = sadd.s32 1, %s27
    $region7: #{tpu_custom_call.1} parent=1 // loop_footer_branch
      %26 = sbr.rel target = $region3
    $region8: #{tpu_custom_call.1} parent=1 // loop_exit
      _
    %2896 = vsyncpa [#allocation5], 1
    %s2897 = scalar_lea.sflag [#allocation5], 1
    %2898 = vsyncpa %s2897, 1
    %2899 = vsyncpa [#allocation8], 1
    %2900 = vsyncpa [#allocation6], 1
    %s2901 = scalar_lea.sflag [#allocation6], 1
    %2902 = vsyncpa %s2901, 1

</llo_original>
